<compile_context>
chip_gen: v6e
topology: v6e:2x2x1
jax: 0.10.0
libtpu: 0.0.40
codegen_flags: <defaults>
</compile_context>

<pallas_src>
import jax
import jax.numpy as jnp
from jax.experimental import pallas as pl
from jax.experimental.pallas import tpu as pltpu

EPS = 1e-5

# Fallback keeps the script running on jax versions without the enum value.
_CORE_PARALLEL = getattr(pltpu, "CORE_PARALLEL", "parallel")


def _tensorcores_per_chip() -> int:
    """2 on v7x (two TensorCores per chip), 1 on v5e/v6e and anything unknown."""
    try:
        kind = jax.devices()[0].device_kind.lower()
    except Exception:
        return 1
    if "v7" in kind or "7x" in kind:
        return 2
    return 1


def fused_add_conv1x1_bn_kernel(xa_ref, xb_ref, w_ref, gamma_ref, beta_ref, o_ref):
    # xa_ref, xb_ref : (Cin, HW)  f32/bf16 -- channels-first flattened activations (full)
    # w_ref          : (Ct, Cin)  bf16     -- this tile's slice of the 1x1 conv weight
    # gamma_ref/beta_ref : (Ct, 1) f32     -- BN affine params for this channel tile
    # o_ref          : (Ct, HW)   f32/bf16
    x = xa_ref[...].astype(jnp.float32) + xb_ref[...].astype(jnp.float32)  # residual add
    y = jnp.dot(w_ref[...], x.astype(jnp.bfloat16),
                preferred_element_type=jnp.float32)            # (Ct, HW), f32 accumulation

    inv_m = jnp.float32(1.0 / y.shape[-1])
    mean = jnp.sum(y, axis=-1, keepdims=True) * inv_m          # (Ct, 1)
    centered = y - mean
    var = jnp.sum(centered * centered, axis=-1, keepdims=True) * inv_m  # biased (training BN)
    inv_std = jax.lax.rsqrt(var + EPS)

    scale = gamma_ref[...] * inv_std                           # (Ct, 1)
    o_ref[...] = (centered * scale + beta_ref[...]).astype(o_ref.dtype)  # single epilogue pass


def prepare_params(conv_w, gamma, beta):
    """One-time parameter prep: pre-cast weight to bf16, shape BN params to (Cout, 1)."""
    Cout = conv_w.shape[0]
    wt = conv_w.reshape(Cout, -1).astype(jnp.bfloat16)   # (Cout, Cin), cast once, not per call
    g = gamma.reshape(Cout, 1).astype(jnp.float32)
    b = beta.reshape(Cout, 1).astype(jnp.float32)
    return wt, g, b


def fused_add_conv1x1_bn(x203, x189, wt, g, b, *, out_dtype=jnp.float32):
    """x203, x189: (1, Cin, H, W) NCHW (f32 or bf16).  wt: (Cout, Cin) bf16 (from
    prepare_params).  Returns (1, Cout, H, W) in out_dtype."""
    N, Cin, H, W_ = x203.shape
    assert N == 1, "module is specified for batch size 1"
    Cout = wt.shape[0]
    HW = H * W_

    # One grid step on single-TC chips; split Cout across cores only where there are 2 TCs.
    n_tiles = _tensorcores_per_chip()
    if Cout % (n_tiles * 8) != 0:
        n_tiles = 1
    Ct = Cout // n_tiles

    # Free reshapes (no data movement): NCHW with N==1 -> (Cin, HW).  No dtype cast here;
    # the kernel upcasts, so bf16 producers keep their halved HBM read.
    xa = x203.reshape(Cin, HW)
    xb = x189.reshape(Cin, HW)

    out_itemsize = jnp.dtype(out_dtype).itemsize
    bytes_accessed = (
        xa.size * xa.dtype.itemsize
        + xb.size * xb.dtype.itemsize
        + wt.size * wt.dtype.itemsize
        + g.size * g.dtype.itemsize
        + b.size * b.dtype.itemsize
        + Cout * HW * out_itemsize
    )
    cost = pl.CostEstimate(
        flops=2 * Cout * Cin * HW,
        transcendentals=0,
        bytes_accessed=bytes_accessed,
    )

    dims = (_CORE_PARALLEL,) if n_tiles > 1 else ("arbitrary",)

    out = pl.pallas_call(
        fused_add_conv1x1_bn_kernel,
        out_shape=jax.ShapeDtypeStruct((Cout, HW), out_dtype),
        grid=(n_tiles,),
        in_specs=[
            pl.BlockSpec((Cin, HW), lambda i: (0, 0)),   # xa (full, shared across tiles)
            pl.BlockSpec((Cin, HW), lambda i: (0, 0)),   # xb (full, shared across tiles)
            pl.BlockSpec((Ct, Cin), lambda i: (i, 0)),   # weight tile
            pl.BlockSpec((Ct, 1), lambda i: (i, 0)),     # gamma tile
            pl.BlockSpec((Ct, 1), lambda i: (i, 0)),     # beta tile
        ],
        out_specs=pl.BlockSpec((Ct, HW), lambda i: (i, 0)),
        compiler_params=pltpu.CompilerParams(dimension_semantics=dims),
        cost_estimate=cost,
    )(xa, xb, wt, g, b)

    # Free reshape back: (Cout, HW) -> (1, Cout, H, W)
    return out.reshape(N, Cout, H, W_)


def _reference(x203, x189, w, gamma, beta):
    """Pure-JAX f32 reference of the PyTorch forward (training-mode BN)."""
    x204 = (x203 + x189).astype(jnp.float32)
    w2d = w.reshape(w.shape[0], -1).astype(jnp.float32)
    y = jnp.einsum("oi,nihw->nohw", w2d, x204)
    mean = jnp.mean(y, axis=(0, 2, 3), keepdims=True)
    var = jnp.var(y, axis=(0, 2, 3), keepdims=True)  # biased, as in PyTorch training BN
    yh = (y - mean) * jax.lax.rsqrt(var + EPS)
    return yh * gamma.reshape(1, -1, 1, 1) + beta.reshape(1, -1, 1, 1)


if __name__ == "__main__":
    key = jax.random.PRNGKey(0)
    k1, k2, k3 = jax.random.split(key, 3)

    N, Cin, H, W = 1, 72, 28, 28
    Cout = 432

    x203 = jax.random.normal(k1, (N, Cin, H, W), dtype=jnp.float32)
    x189 = jax.random.normal(k2, (N, Cin, H, W), dtype=jnp.float32)

    # Conv weight (Cout, Cin, 1, 1); BN gamma=1, beta=0 (PyTorch defaults).
    conv_w = jax.random.normal(k3, (Cout, Cin, 1, 1), dtype=jnp.float32) * 0.05
    gamma = jnp.ones((Cout,), dtype=jnp.float32)
    beta = jnp.zeros((Cout,), dtype=jnp.float32)

    # One-time parameter prep (pre-cast weight to bf16 outside the per-call path).
    wt, g, b = prepare_params(conv_w, gamma, beta)

    out = fused_add_conv1x1_bn(x203, x189, wt, g, b, out_dtype=jnp.float32)
    jax.block_until_ready(out)

    assert out.shape == (N, Cout, H, W), out.shape
    assert out.dtype == jnp.float32, out.dtype

    ref = _reference(x203, x189, conv_w, gamma, beta)
    max_err = float(jnp.max(jnp.abs(out.astype(jnp.float32) - ref)))
    # bf16 MXU operands introduce ~1e-3..1e-2-level deviation vs. the f32 reference.
    assert max_err < 0.1, f"max abs error too large: {max_err}"

    print("KERNEL_OK")
</pallas_src>

<mosaic_0001>
module attributes {stable_mosaic.version = 11 : i64} {
  func.func @fused_add_conv1x1_bn_kernel(%arg0: i32, %arg1: memref<72x784xf32, #tpu.memory_space<vmem>>, %arg2: memref<72x784xf32, #tpu.memory_space<vmem>>, %arg3: memref<432x72xbf16, #tpu.memory_space<vmem>>, %arg4: memref<432x1xf32, #tpu.memory_space<vmem>>, %arg5: memref<432x1xf32, #tpu.memory_space<vmem>>, %arg6: memref<432x784xf32, #tpu.memory_space<vmem>>) attributes {dimension_semantics = [#tpu.dimension_semantics<arbitrary>], iteration_bounds = array<i64: 1>, scalar_prefetch = 0 : i64, scratch_operands = 0 : i64, tpu.core_type = #tpu.core_type<tc>, window_params = [{pipeline_mode = #tpu.pipeline_mode<synchronous>, transform_indices = @transform_0, window_bounds = array<i64: 72, 784>}, {pipeline_mode = #tpu.pipeline_mode<synchronous>, transform_indices = @transform_1, window_bounds = array<i64: 72, 784>}, {transform_indices = @transform_2, window_bounds = array<i64: 432, 72>}, {transform_indices = @transform_3, window_bounds = array<i64: 432, 1>}, {transform_indices = @transform_4, window_bounds = array<i64: 432, 1>}, {transform_indices = @transform_5, window_bounds = array<i64: 432, 784>}]} {
    %c0 = arith.constant 0 : index
    %c0_0 = arith.constant 0 : index
    %0 = vector.load %arg1[%c0, %c0_0] : memref<72x784xf32, #tpu.memory_space<vmem>>, vector<72x784xf32>
    %c0_1 = arith.constant 0 : index
    %c0_2 = arith.constant 0 : index
    %1 = vector.load %arg2[%c0_1, %c0_2] : memref<72x784xf32, #tpu.memory_space<vmem>>, vector<72x784xf32>
    %2 = arith.addf %0, %1 : vector<72x784xf32>
    %c0_3 = arith.constant 0 : index
    %c0_4 = arith.constant 0 : index
    %3 = vector.load %arg3[%c0_3, %c0_4] : memref<432x72xbf16, #tpu.memory_space<vmem>>, vector<432x72xbf16>
    %4 = arith.truncf %2 : vector<72x784xf32> to vector<72x784xbf16>
    %cst = arith.constant dense<0.000000e+00> : vector<432x784xf32>
    %5 = tpu.matmul %3, %4, %cst {dimension_numbers = #tpu.dot_dimension_numbers<[1], [0], [0], [1], [0, 0, 1, 1], [], []>} : vector<432x72xbf16>, vector<72x784xbf16>, vector<432x784xf32> -> vector<432x784xf32>
    %cst_5 = arith.constant dense<0.000000e+00> : vector<432xf32>
    %6 = vector.multi_reduction <add>, %5, %cst_5 [1] : vector<432x784xf32> to vector<432xf32>
    %7 = vector.shape_cast %6 : vector<432xf32> to vector<432x1xf32>
    %cst_6 = arith.constant 0.00127551018 : f32
    %8 = vector.broadcast %cst_6 : f32 to vector<432x1xf32>
    %9 = arith.mulf %7, %8 : vector<432x1xf32>
    %10 = vector.broadcast %9 : vector<432x1xf32> to vector<432x784xf32>
    %11 = arith.subf %5, %10 : vector<432x784xf32>
    %12 = arith.mulf %11, %11 : vector<432x784xf32>
    %cst_7 = arith.constant dense<0.000000e+00> : vector<432xf32>
    %13 = vector.multi_reduction <add>, %12, %cst_7 [1] : vector<432x784xf32> to vector<432xf32>
    %14 = vector.shape_cast %13 : vector<432xf32> to vector<432x1xf32>
    %cst_8 = arith.constant 0.00127551018 : f32
    %15 = vector.broadcast %cst_8 : f32 to vector<432x1xf32>
    %16 = arith.mulf %14, %15 : vector<432x1xf32>
    %cst_9 = arith.constant 9.99999974E-6 : f32
    %17 = vector.broadcast %cst_9 : f32 to vector<432x1xf32>
    %18 = arith.addf %16, %17 : vector<432x1xf32>
    %19 = math.rsqrt %18 : vector<432x1xf32>
    %c0_10 = arith.constant 0 : index
    %c0_11 = arith.constant 0 : index
    %20 = vector.load %arg4[%c0_10, %c0_11] : memref<432x1xf32, #tpu.memory_space<vmem>>, vector<432x1xf32>
    %21 = arith.mulf %20, %19 : vector<432x1xf32>
    %22 = vector.broadcast %21 : vector<432x1xf32> to vector<432x784xf32>
    %23 = arith.mulf %11, %22 : vector<432x784xf32>
    %c0_12 = arith.constant 0 : index
    %c0_13 = arith.constant 0 : index
    %24 = vector.load %arg5[%c0_12, %c0_13] : memref<432x1xf32, #tpu.memory_space<vmem>>, vector<432x1xf32>
    %25 = vector.broadcast %24 : vector<432x1xf32> to vector<432x784xf32>
    %26 = arith.addf %23, %25 : vector<432x784xf32>
    %c0_14 = arith.constant 0 : index
    %c0_15 = arith.constant 0 : index
    %27 = vector.load %arg6[%c0_14, %c0_15] : memref<432x784xf32, #tpu.memory_space<vmem>>, vector<432x784xf32>
    tpu.vector_store %arg6[%c0_14, %c0_15], %26 {strides = array<i32>} : memref<432x784xf32, #tpu.memory_space<vmem>>, vector<432x784xf32>,
    return
  }
  func.func @transform_0(%arg0: i32) -> (i32, i32) {
    %c0_i32 = arith.constant 0 : i32
    %c0_i32_0 = arith.constant 0 : i32
    %c0_i32_1 = arith.constant 0 : i32
    return %c0_i32, %c0_i32_0 : i32, i32
  }
  func.func @transform_1(%arg0: i32) -> (i32, i32) {
    %c0_i32 = arith.constant 0 : i32
    %c0_i32_0 = arith.constant 0 : i32
    %c0_i32_1 = arith.constant 0 : i32
    return %c0_i32, %c0_i32_0 : i32, i32
  }
  func.func @transform_2(%arg0: i32) -> (i32, i32) {
    %c0_i32 = arith.constant 0 : i32
    %c0_i32_0 = arith.constant 0 : i32
    return %arg0, %c0_i32 : i32, i32
  }
  func.func @transform_3(%arg0: i32) -> (i32, i32) {
    %c0_i32 = arith.constant 0 : i32
    %c0_i32_0 = arith.constant 0 : i32
    return %arg0, %c0_i32 : i32, i32
  }
  func.func @transform_4(%arg0: i32) -> (i32, i32) {
    %c0_i32 = arith.constant 0 : i32
    %c0_i32_0 = arith.constant 0 : i32
    return %arg0, %c0_i32 : i32, i32
  }
  func.func @transform_5(%arg0: i32) -> (i32, i32) {
    %c0_i32 = arith.constant 0 : i32
    %c0_i32_0 = arith.constant 0 : i32
    return %arg0, %c0_i32 : i32, i32
  }
}

</mosaic_0001>

<llo_original>
// kernel: tpu_custom_call.1
$region0: #{tpu_custom_call.1}
  #allocation0 [shape = 'u32[]', space=smem, size = 0x4, offset = 0x4, fixed_abs, tag = 'smem constant byte address 0x4 - core index']
  #allocation1 [shape = 'u32[144,128]{1,0:T(1,128)}', space=vmem, size = 0x12000, scoped, tag = 'internal scratch']
  %s0 = inlined_call_operand.hbm [shape: f32[72,784], index: 0, kind: input, shape index: {}]
  %s1 = inlined_call_operand.hbm [shape: f32[72,784], index: 1, kind: input, shape index: {}]
  %s2 = inlined_call_operand.vmem [shape: bf16[432,72], index: 2, kind: input, shape index: {}]
  %s3 = inlined_call_operand.vmem [shape: f32[432,1], index: 3, kind: input, shape index: {}]
  %s4 = inlined_call_operand.vmem [shape: f32[432,1], index: 4, kind: input, shape index: {}]
  %s5 = inlined_call_operand.hbm [shape: f32[432,784], index: 5, kind: output, shape index: {}]
  %s6 = sld [smem:[#allocation0]]
  $region38: #{tpu_custom_call.1} parent=0
    _
  %s8 = ssub.s32 1, %s6
  %s9 = scalar_select 0, %s8, %s6
  $region1: #{tpu_custom_call.1} parent=0
    #allocation2 [shape = 'u8[258048]{0}', space=vmem, size = 0x3f000, scoped, tag = 'input window, operand 0, single buffered']
    #allocation3 [shape = 's32[1]{0}', space=sflag, size = 0x4, scoped, tag = 'scoped memory for tpu_custom_call.1']
    #allocation4 [shape = 's32[1]{0}', space=sflag, size = 0x4, scoped, tag = 'scoped memory for tpu_custom_call.1']
    #allocation5 [shape = 'u8[258048]{0}', space=vmem, size = 0x3f000, scoped, tag = 'input window, operand 1, single buffered']
    #allocation6 [shape = 's32[1]{0}', space=sflag, size = 0x4, scoped, tag = 'scoped memory for tpu_custom_call.1']
    #allocation7 [shape = 'u8[1548288]{0}', space=vmem, size = 0x17a000, scoped, tag = 'output window, operand 0, single buffered']
    %10 = vsyncpa [#allocation3], 0
    %11 = vsyncpa [#allocation6], 0
    %12 = vsyncpa [#allocation4], 0
    // Predicated region
    $region2: #{tpu_custom_call.1} parent=1 // pred_check
      _
    $region3: #{tpu_custom_call.1} parent=1 // pred_check_branch
      %14 = sbr.rel (0) target = $region5
    $region4: #{tpu_custom_call.1} parent=1 // pred_region
      %s16 = ssub.s32 8064, 8064
      %17 = vsyncadd [#allocation3], %s16
      %s18 = sshll.u32 [#allocation2], 4
      %s19 = int_to_ptr.vmem [resolvable:$true] %s18
      %24 = dma.hbm_to_vmem [thread:$0]  %s0, 8064, %s19, [#allocation3], 896, 896, 56
    $region5: #{tpu_custom_call.1} parent=1 // pred_fallthru
      _
    // Predicated region
    $region6: #{tpu_custom_call.1} parent=1 // pred_check
      _
    $region7: #{tpu_custom_call.1} parent=1 // pred_check_branch
      %26 = sbr.rel (0) target = $region9
    $region8: #{tpu_custom_call.1} parent=1 // pred_region
      %s28 = ssub.s32 8064, 8064
      %29 = vsyncadd [#allocation6], %s28
      %s30 = sshll.u32 [#allocation5], 4
      %s31 = int_to_ptr.vmem [resolvable:$true] %s30
      %36 = dma.hbm_to_vmem [thread:$0]  %s1, 8064, %s31, [#allocation6], 896, 896, 56
    $region9: #{tpu_custom_call.1} parent=1 // pred_fallthru
      _
    // Predicated region
    $region10: #{tpu_custom_call.1} parent=1 // pred_check
      _
    $region11: #{tpu_custom_call.1} parent=1 // pred_check_branch
      %38 = sbr.rel (0) target = $region13
    $region12: #{tpu_custom_call.1} parent=1 // pred_region
      _
    $region13: #{tpu_custom_call.1} parent=1 // pred_fallthru
      _
    // Predicated region
    $region14: #{tpu_custom_call.1} parent=1 // pred_check
      _
    $region15: #{tpu_custom_call.1} parent=1 // pred_check_branch
      %40 = sbr.rel (0) target = $region17
    $region16: #{tpu_custom_call.1} parent=1 // pred_region
      _
    $region17: #{tpu_custom_call.1} parent=1 // pred_fallthru
      _
    // Predicated region
    $region18: #{tpu_custom_call.1} parent=1 // pred_check
      _
    $region19: #{tpu_custom_call.1} parent=1 // pred_check_branch
      %42 = sbr.rel (0) target = $region21
    $region20: #{tpu_custom_call.1} parent=1 // pred_region
      _
    $region21: #{tpu_custom_call.1} parent=1 // pred_fallthru
      _
    // Predicated region
    $region22: #{tpu_custom_call.1} parent=1 // pred_check
      _
    $region23: #{tpu_custom_call.1} parent=1 // pred_check_branch
      %44 = sbr.rel (0) target = $region25
    $region24: #{tpu_custom_call.1} parent=1 // pred_region
      %45 = dma.done [#allocation3], 8064
    $region25: #{tpu_custom_call.1} parent=1 // pred_fallthru
      _
    // Predicated region
    $region26: #{tpu_custom_call.1} parent=1 // pred_check
      _
    $region27: #{tpu_custom_call.1} parent=1 // pred_check_branch
      %47 = sbr.rel (0) target = $region29
    $region28: #{tpu_custom_call.1} parent=1 // pred_region
      %48 = dma.done [#allocation6], 8064
    $region29: #{tpu_custom_call.1} parent=1 // pred_fallthru
      _
    %v50 = vld [vmem:[#allocation2] sm:$0xff]
    %v51 = vld [vmem:[#allocation2 + $0x8] sm:$0xff]
    %v52 = vld [vmem:[#allocation2 + $0x10] sm:$0xff]
    %v53 = vld [vmem:[#allocation2 + $0x18] sm:$0xff]
    %v54 = vld [vmem:[#allocation2 + $0x20] sm:$0xff]
    %v55 = vld [vmem:[#allocation2 + $0x28] sm:$0xff]
    %v56 = vld [vmem:[#allocation2 + $0x30] sm:$0xff]
    %v57 = vld [vmem:[#allocation2 + $0x38] sm:$0xff]
    %v58 = vld [vmem:[#allocation2 + $0x40] sm:$0xff]
    %v59 = vld [vmem:[#allocation2 + $0x48] sm:$0xff]
    %v60 = vld [vmem:[#allocation2 + $0x50] sm:$0xff]
    %v61 = vld [vmem:[#allocation2 + $0x58] sm:$0xff]
    %v62 = vld [vmem:[#allocation2 + $0x60] sm:$0xff]
    %v63 = vld [vmem:[#allocation2 + $0x68] sm:$0xff]
    %v64 = vld [vmem:[#allocation2 + $0x70] sm:$0xff]
    %v65 = vld [vmem:[#allocation2 + $0x78] sm:$0xff]
    %v66 = vld [vmem:[#allocation2 + $0x80] sm:$0xff]
    %v67 = vld [vmem:[#allocation2 + $0x88] sm:$0xff]
    %v68 = vld [vmem:[#allocation2 + $0x90] sm:$0xff]
    %v69 = vld [vmem:[#allocation2 + $0x98] sm:$0xff]
    %v70 = vld [vmem:[#allocation2 + $0xa0] sm:$0xff]
    %v71 = vld [vmem:[#allocation2 + $0xa8] sm:$0xff]
    %v72 = vld [vmem:[#allocation2 + $0xb0] sm:$0xff]
    %v73 = vld [vmem:[#allocation2 + $0xb8] sm:$0xff]
    %v74 = vld [vmem:[#allocation2 + $0xc0] sm:$0xff]
    %v75 = vld [vmem:[#allocation2 + $0xc8] sm:$0xff]
    %v76 = vld [vmem:[#allocation2 + $0xd0] sm:$0xff]
    %v77 = vld [vmem:[#allocation2 + $0xd8] sm:$0xff]
    %v78 = vld [vmem:[#allocation2 + $0xe0] sm:$0xff]
    %v79 = vld [vmem:[#allocation2 + $0xe8] sm:$0xff]
    %v80 = vld [vmem:[#allocation2 + $0xf0] sm:$0xff]
    %v81 = vld [vmem:[#allocation2 + $0xf8] sm:$0xff]
    %v82 = vld [vmem:[#allocation2 + $0x100] sm:$0xff]
    %v83 = vld [vmem:[#allocation2 + $0x108] sm:$0xff]
    %v84 = vld [vmem:[#allocation2 + $0x110] sm:$0xff]
    %v85 = vld [vmem:[#allocation2 + $0x118] sm:$0xff]
    %v86 = vld [vmem:[#allocation2 + $0x120] sm:$0xff]
    %v87 = vld [vmem:[#allocation2 + $0x128] sm:$0xff]
    %v88 = vld [vmem:[#allocation2 + $0x130] sm:$0xff]
    %v89 = vld [vmem:[#allocation2 + $0x138] sm:$0xff]
    %v90 = vld [vmem:[#allocation2 + $0x140] sm:$0xff]
    %v91 = vld [vmem:[#allocation2 + $0x148] sm:$0xff]
    %v92 = vld [vmem:[#allocation2 + $0x150] sm:$0xff]
    %v93 = vld [vmem:[#allocation2 + $0x158] sm:$0xff]
    %v94 = vld [vmem:[#allocation2 + $0x160] sm:$0xff]
    %v95 = vld [vmem:[#allocation2 + $0x168] sm:$0xff]
    %v96 = vld [vmem:[#allocation2 + $0x170] sm:$0xff]
    %v97 = vld [vmem:[#allocation2 + $0x178] sm:$0xff]
    %v98 = vld [vmem:[#allocation2 + $0x180] sm:$0xff]
    %v99 = vld [vmem:[#allocation2 + $0x188] sm:$0xff]
    %v100 = vld [vmem:[#allocation2 + $0x190] sm:$0xff]
    %v101 = vld [vmem:[#allocation2 + $0x198] sm:$0xff]
    %v102 = vld [vmem:[#allocation2 + $0x1a0] sm:$0xff]
    %v103 = vld [vmem:[#allocation2 + $0x1a8] sm:$0xff]
    %v104 = vld [vmem:[#allocation2 + $0x1b0] sm:$0xff]
    %v105 = vld [vmem:[#allocation2 + $0x1b8] sm:$0xff]
    %v106 = vld [vmem:[#allocation2 + $0x1c0] sm:$0xff]
    %v107 = vld [vmem:[#allocation2 + $0x1c8] sm:$0xff]
    %v108 = vld [vmem:[#allocation2 + $0x1d0] sm:$0xff]
    %v109 = vld [vmem:[#allocation2 + $0x1d8] sm:$0xff]
    %v110 = vld [vmem:[#allocation2 + $0x1e0] sm:$0xff]
    %v111 = vld [vmem:[#allocation2 + $0x1e8] sm:$0xff]
    %v112 = vld [vmem:[#allocation2 + $0x1f0] sm:$0xff]
    %v113 = vld [vmem:[#allocation5] sm:$0xff]
    %v114 = vld [vmem:[#allocation5 + $0x8] sm:$0xff]
    %v115 = vld [vmem:[#allocation5 + $0x10] sm:$0xff]
    %v116 = vld [vmem:[#allocation5 + $0x18] sm:$0xff]
    %v117 = vld [vmem:[#allocation5 + $0x20] sm:$0xff]
    %v118 = vld [vmem:[#allocation5 + $0x28] sm:$0xff]
    %v119 = vld [vmem:[#allocation5 + $0x30] sm:$0xff]
    %v120 = vld [vmem:[#allocation5 + $0x38] sm:$0xff]
    %v121 = vld [vmem:[#allocation5 + $0x40] sm:$0xff]
    %v122 = vld [vmem:[#allocation5 + $0x48] sm:$0xff]
    %v123 = vld [vmem:[#allocation5 + $0x50] sm:$0xff]
    %v124 = vld [vmem:[#allocation5 + $0x58] sm:$0xff]
    %v125 = vld [vmem:[#allocation5 + $0x60] sm:$0xff]
    %v126 = vld [vmem:[#allocation5 + $0x68] sm:$0xff]
    %v127 = vld [vmem:[#allocation5 + $0x70] sm:$0xff]
    %v128 = vld [vmem:[#allocation5 + $0x78] sm:$0xff]
    %v129 = vld [vmem:[#allocation5 + $0x80] sm:$0xff]
    %v130 = vld [vmem:[#allocation5 + $0x88] sm:$0xff]
    %v131 = vld [vmem:[#allocation5 + $0x90] sm:$0xff]
    %v132 = vld [vmem:[#allocation5 + $0x98] sm:$0xff]
    %v133 = vld [vmem:[#allocation5 + $0xa0] sm:$0xff]
    %v134 = vld [vmem:[#allocation5 + $0xa8] sm:$0xff]
    %v135 = vld [vmem:[#allocation5 + $0xb0] sm:$0xff]
    %v136 = vld [vmem:[#allocation5 + $0xb8] sm:$0xff]
    %v137 = vld [vmem:[#allocation5 + $0xc0] sm:$0xff]
    %v138 = vld [vmem:[#allocation5 + $0xc8] sm:$0xff]
    %v139 = vld [vmem:[#allocation5 + $0xd0] sm:$0xff]
    %v140 = vld [vmem:[#allocation5 + $0xd8] sm:$0xff]
    %v141 = vld [vmem:[#allocation5 + $0xe0] sm:$0xff]
    %v142 = vld [vmem:[#allocation5 + $0xe8] sm:$0xff]
    %v143 = vld [vmem:[#allocation5 + $0xf0] sm:$0xff]
    %v144 = vld [vmem:[#allocation5 + $0xf8] sm:$0xff]
    %v145 = vld [vmem:[#allocation5 + $0x100] sm:$0xff]
    %v146 = vld [vmem:[#allocation5 + $0x108] sm:$0xff]
    %v147 = vld [vmem:[#allocation5 + $0x110] sm:$0xff]
    %v148 = vld [vmem:[#allocation5 + $0x118] sm:$0xff]
    %v149 = vld [vmem:[#allocation5 + $0x120] sm:$0xff]
    %v150 = vld [vmem:[#allocation5 + $0x128] sm:$0xff]
    %v151 = vld [vmem:[#allocation5 + $0x130] sm:$0xff]
    %v152 = vld [vmem:[#allocation5 + $0x138] sm:$0xff]
    %v153 = vld [vmem:[#allocation5 + $0x140] sm:$0xff]
    %v154 = vld [vmem:[#allocation5 + $0x148] sm:$0xff]
    %v155 = vld [vmem:[#allocation5 + $0x150] sm:$0xff]
    %v156 = vld [vmem:[#allocation5 + $0x158] sm:$0xff]
    %v157 = vld [vmem:[#allocation5 + $0x160] sm:$0xff]
    %v158 = vld [vmem:[#allocation5 + $0x168] sm:$0xff]
    %v159 = vld [vmem:[#allocation5 + $0x170] sm:$0xff]
    %v160 = vld [vmem:[#allocation5 + $0x178] sm:$0xff]
    %v161 = vld [vmem:[#allocation5 + $0x180] sm:$0xff]
    %v162 = vld [vmem:[#allocation5 + $0x188] sm:$0xff]
    %v163 = vld [vmem:[#allocation5 + $0x190] sm:$0xff]
    %v164 = vld [vmem:[#allocation5 + $0x198] sm:$0xff]
    %v165 = vld [vmem:[#allocation5 + $0x1a0] sm:$0xff]
    %v166 = vld [vmem:[#allocation5 + $0x1a8] sm:$0xff]
    %v167 = vld [vmem:[#allocation5 + $0x1b0] sm:$0xff]
    %v168 = vld [vmem:[#allocation5 + $0x1b8] sm:$0xff]
    %v169 = vld [vmem:[#allocation5 + $0x1c0] sm:$0xff]
    %v170 = vld [vmem:[#allocation5 + $0x1c8] sm:$0xff]
    %v171 = vld [vmem:[#allocation5 + $0x1d0] sm:$0xff]
    %v172 = vld [vmem:[#allocation5 + $0x1d8] sm:$0xff]
    %v173 = vld [vmem:[#allocation5 + $0x1e0] sm:$0xff]
    %v174 = vld [vmem:[#allocation5 + $0x1e8] sm:$0xff]
    %v175 = vld [vmem:[#allocation5 + $0x1f0] sm:$0xff]
    %v176 = vadd.f32 %v50, %v113
    %v177 = vadd.f32 %v51, %v114
    %v178 = vadd.f32 %v52, %v115
    %v179 = vadd.f32 %v53, %v116
    %v180 = vadd.f32 %v54, %v117
    %v181 = vadd.f32 %v55, %v118
    %v182 = vadd.f32 %v56, %v119
    %v183 = vadd.f32 %v57, %v120
    %v184 = vadd.f32 %v58, %v121
    %v185 = vadd.f32 %v59, %v122
    %v186 = vadd.f32 %v60, %v123
    %v187 = vadd.f32 %v61, %v124
    %v188 = vadd.f32 %v62, %v125
    %v189 = vadd.f32 %v63, %v126
    %v190 = vadd.f32 %v64, %v127
    %v191 = vadd.f32 %v65, %v128
    %v192 = vadd.f32 %v66, %v129
    %v193 = vadd.f32 %v67, %v130
    %v194 = vadd.f32 %v68, %v131
    %v195 = vadd.f32 %v69, %v132
    %v196 = vadd.f32 %v70, %v133
    %v197 = vadd.f32 %v71, %v134
    %v198 = vadd.f32 %v72, %v135
    %v199 = vadd.f32 %v73, %v136
    %v200 = vadd.f32 %v74, %v137
    %v201 = vadd.f32 %v75, %v138
    %v202 = vadd.f32 %v76, %v139
    %v203 = vadd.f32 %v77, %v140
    %v204 = vadd.f32 %v78, %v141
    %v205 = vadd.f32 %v79, %v142
    %v206 = vadd.f32 %v80, %v143
    %v207 = vadd.f32 %v81, %v144
    %v208 = vadd.f32 %v82, %v145
    %v209 = vadd.f32 %v83, %v146
    %v210 = vadd.f32 %v84, %v147
    %v211 = vadd.f32 %v85, %v148
    %v212 = vadd.f32 %v86, %v149
    %v213 = vadd.f32 %v87, %v150
    %v214 = vadd.f32 %v88, %v151
    %v215 = vadd.f32 %v89, %v152
    %v216 = vadd.f32 %v90, %v153
    %v217 = vadd.f32 %v91, %v154
    %v218 = vadd.f32 %v92, %v155
    %v219 = vadd.f32 %v93, %v156
    %v220 = vadd.f32 %v94, %v157
    %v221 = vadd.f32 %v95, %v158
    %v222 = vadd.f32 %v96, %v159
    %v223 = vadd.f32 %v97, %v160
    %v224 = vadd.f32 %v98, %v161
    %v225 = vadd.f32 %v99, %v162
    %v226 = vadd.f32 %v100, %v163
    %v227 = vadd.f32 %v101, %v164
    %v228 = vadd.f32 %v102, %v165
    %v229 = vadd.f32 %v103, %v166
    %v230 = vadd.f32 %v104, %v167
    %v231 = vadd.f32 %v105, %v168
    %v232 = vadd.f32 %v106, %v169
    %v233 = vadd.f32 %v107, %v170
    %v234 = vadd.f32 %v108, %v171
    %v235 = vadd.f32 %v109, %v172
    %v236 = vadd.f32 %v110, %v173
    %v237 = vadd.f32 %v111, %v174
    %v238 = vadd.f32 %v112, %v175
    %v239 = vld [vmem:[%s2] sm:$0xf]
    %v240 = vld [vmem:[%s2 + $0x4] sm:$0xf]
    %v241 = vld [vmem:[%s2 + $0x8] sm:$0xf]
    %v242 = vld [vmem:[%s2 + $0xc] sm:$0xf]
    %v243 = vld [vmem:[%s2 + $0x10] sm:$0xf]
    %v244 = vld [vmem:[%s2 + $0x14] sm:$0xf]
    %v245 = vld [vmem:[%s2 + $0x18] sm:$0xf]
    %v246 = vld [vmem:[%s2 + $0x1c] sm:$0xf]
    %v247 = vld [vmem:[%s2 + $0x20] sm:$0xf]
    %v248 = vld [vmem:[%s2 + $0x24] sm:$0xf]
    %v249 = vld [vmem:[%s2 + $0x28] sm:$0xf]
    %v250 = vld [vmem:[%s2 + $0x2c] sm:$0xf]
    %v251 = vld [vmem:[%s2 + $0x30] sm:$0xf]
    %v252 = vld [vmem:[%s2 + $0x34] sm:$0xf]
    %v253 = vld [vmem:[%s2 + $0x38] sm:$0xf]
    %v254 = vld [vmem:[%s2 + $0x3c] sm:$0xf]
    %v255 = vld [vmem:[%s2 + $0x40] sm:$0xf]
    %v256 = vld [vmem:[%s2 + $0x44] sm:$0xf]
    %v257 = vld [vmem:[%s2 + $0x48] sm:$0xf]
    %v258 = vld [vmem:[%s2 + $0x4c] sm:$0xf]
    %v259 = vld [vmem:[%s2 + $0x50] sm:$0xf]
    %v260 = vld [vmem:[%s2 + $0x54] sm:$0xf]
    %v261 = vld [vmem:[%s2 + $0x58] sm:$0xf]
    %v262 = vld [vmem:[%s2 + $0x5c] sm:$0xf]
    %v263 = vld [vmem:[%s2 + $0x60] sm:$0xf]
    %v264 = vld [vmem:[%s2 + $0x64] sm:$0xf]
    %v265 = vld [vmem:[%s2 + $0x68] sm:$0xf]
    %v266 = vld [vmem:[%s2 + $0x6c] sm:$0xf]
    %v267 = vld [vmem:[%s2 + $0x70] sm:$0xf]
    %v268 = vld [vmem:[%s2 + $0x74] sm:$0xf]
    %v269 = vld [vmem:[%s2 + $0x78] sm:$0xf]
    %v270 = vld [vmem:[%s2 + $0x7c] sm:$0xf]
    %v271 = vld [vmem:[%s2 + $0x80] sm:$0xf]
    %v272 = vld [vmem:[%s2 + $0x84] sm:$0xf]
    %v273 = vld [vmem:[%s2 + $0x88] sm:$0xf]
    %v274 = vld [vmem:[%s2 + $0x8c] sm:$0xf]
    %v275 = vld [vmem:[%s2 + $0x90] sm:$0xf]
    %v276 = vld [vmem:[%s2 + $0x94] sm:$0xf]
    %v277 = vld [vmem:[%s2 + $0x98] sm:$0xf]
    %v278 = vld [vmem:[%s2 + $0x9c] sm:$0xf]
    %v279 = vld [vmem:[%s2 + $0xa0] sm:$0xf]
    %v280 = vld [vmem:[%s2 + $0xa4] sm:$0xf]
    %v281 = vld [vmem:[%s2 + $0xa8] sm:$0xf]
    %v282 = vld [vmem:[%s2 + $0xac] sm:$0xf]
    %v283 = vld [vmem:[%s2 + $0xb0] sm:$0xf]
    %v284 = vld [vmem:[%s2 + $0xb4] sm:$0xf]
    %v285 = vld [vmem:[%s2 + $0xb8] sm:$0xf]
    %v286 = vld [vmem:[%s2 + $0xbc] sm:$0xf]
    %v287 = vld [vmem:[%s2 + $0xc0] sm:$0xf]
    %v288 = vld [vmem:[%s2 + $0xc4] sm:$0xf]
    %v289 = vld [vmem:[%s2 + $0xc8] sm:$0xf]
    %v290 = vld [vmem:[%s2 + $0xcc] sm:$0xf]
    %v291 = vld [vmem:[%s2 + $0xd0] sm:$0xf]
    %v292 = vld [vmem:[%s2 + $0xd4] sm:$0xf]
    %v293 = vpack.c.bf16 %v183, %v176
    %v294 = vpack.c.bf16 %v184, %v177
    %v295 = vpack.c.bf16 %v185, %v178
    %v296 = vpack.c.bf16 %v186, %v179
    %v297 = vpack.c.bf16 %v187, %v180
    %v298 = vpack.c.bf16 %v188, %v181
    %v299 = vpack.c.bf16 %v189, %v182
    %v300 = vpack.c.bf16 %v197, %v190
    %v301 = vpack.c.bf16 %v198, %v191
    %v302 = vpack.c.bf16 %v199, %v192
    %v303 = vpack.c.bf16 %v200, %v193
    %v304 = vpack.c.bf16 %v201, %v194
    %v305 = vpack.c.bf16 %v202, %v195
    %v306 = vpack.c.bf16 %v203, %v196
    %v307 = vpack.c.bf16 %v211, %v204
    %v308 = vpack.c.bf16 %v212, %v205
    %v309 = vpack.c.bf16 %v213, %v206
    %v310 = vpack.c.bf16 %v214, %v207
    %v311 = vpack.c.bf16 %v215, %v208
    %v312 = vpack.c.bf16 %v216, %v209
    %v313 = vpack.c.bf16 %v217, %v210
    %v314 = vpack.c.bf16 %v225, %v218
    %v315 = vpack.c.bf16 %v226, %v219
    %v316 = vpack.c.bf16 %v227, %v220
    %v317 = vpack.c.bf16 %v228, %v221
    %v318 = vpack.c.bf16 %v229, %v222
    %v319 = vpack.c.bf16 %v230, %v223
    %v320 = vpack.c.bf16 %v231, %v224
    %v321 = vpack.c.bf16 %v232, %v232
    %v322 = vpack.c.bf16 %v233, %v233
    %v323 = vpack.c.bf16 %v234, %v234
    %v324 = vpack.c.bf16 %v235, %v235
    %v325 = vpack.c.bf16 %v236, %v236
    %v326 = vpack.c.bf16 %v237, %v237
    %v327 = vpack.c.bf16 %v238, %v238
    %v382 = vunpack.c.l.b16 %v239
    %v383 = vunpack.c.l.b16 %v240
    %v384 = vunpack.c.l.b16 %v241
    %v385 = vunpack.c.l.b16 %v242
    %v386 = vunpack.c.l.b16 %v243
    %v387 = vunpack.c.l.b16 %v244
    %v388 = vunpack.c.l.b16 %v245
    %v389 = vunpack.c.l.b16 %v246
    %v390 = vunpack.c.l.b16 %v247
    %v391 = vunpack.c.l.b16 %v248
    %v392 = vunpack.c.l.b16 %v249
    %v393 = vunpack.c.l.b16 %v250
    %v394 = vunpack.c.l.b16 %v251
    %v395 = vunpack.c.l.b16 %v252
    %v396 = vunpack.c.l.b16 %v253
    %v397 = vunpack.c.l.b16 %v254
    %v398 = vunpack.c.l.b16 %v255
    %v399 = vunpack.c.l.b16 %v256
    %v400 = vunpack.c.l.b16 %v257
    %v401 = vunpack.c.l.b16 %v258
    %v402 = vunpack.c.l.b16 %v259
    %v403 = vunpack.c.l.b16 %v260
    %v404 = vunpack.c.l.b16 %v261
    %v405 = vunpack.c.l.b16 %v262
    %v406 = vunpack.c.l.b16 %v263
    %v407 = vunpack.c.l.b16 %v264
    %v408 = vunpack.c.l.b16 %v265
    %v409 = vunpack.c.l.b16 %v266
    %v410 = vunpack.c.l.b16 %v267
    %v411 = vunpack.c.l.b16 %v268
    %v412 = vunpack.c.l.b16 %v269
    %v413 = vunpack.c.l.b16 %v270
    %v414 = vunpack.c.l.b16 %v271
    %v415 = vunpack.c.l.b16 %v272
    %v416 = vunpack.c.l.b16 %v273
    %v417 = vunpack.c.l.b16 %v274
    %v418 = vunpack.c.l.b16 %v275
    %v419 = vunpack.c.l.b16 %v276
    %v420 = vunpack.c.l.b16 %v277
    %v421 = vunpack.c.l.b16 %v278
    %v422 = vunpack.c.l.b16 %v279
    %v423 = vunpack.c.l.b16 %v280
    %v424 = vunpack.c.l.b16 %v281
    %v425 = vunpack.c.l.b16 %v282
    %v426 = vunpack.c.l.b16 %v283
    %v427 = vunpack.c.l.b16 %v284
    %v428 = vunpack.c.l.b16 %v285
    %v429 = vunpack.c.l.b16 %v286
    %v430 = vunpack.c.l.b16 %v287
    %v431 = vunpack.c.l.b16 %v288
    %v432 = vunpack.c.l.b16 %v289
    %v433 = vunpack.c.l.b16 %v290
    %v434 = vunpack.c.l.b16 %v291
    %v435 = vunpack.c.l.b16 %v292
    %v436 = vpack.c.b16 %v383, %v382
    %v437 = vpack.c.b16 %v385, %v384
    %v438 = vpack.c.b16 %v387, %v386
    %v439 = vpack.c.b16 %v389, %v388
    %v440 = vpack.c.b16 %v391, %v390
    %v441 = vpack.c.b16 %v393, %v392
    %v442 = vpack.c.b16 %v395, %v394
    %v443 = vpack.c.b16 %v397, %v396
    %v444 = vpack.c.b16 %v399, %v398
    %v445 = vpack.c.b16 %v401, %v400
    %v446 = vpack.c.b16 %v403, %v402
    %v447 = vpack.c.b16 %v405, %v404
    %v448 = vpack.c.b16 %v407, %v406
    %v449 = vpack.c.b16 %v409, %v408
    %v450 = vpack.c.b16 %v411, %v410
    %v451 = vpack.c.b16 %v413, %v412
    %v452 = vpack.c.b16 %v415, %v414
    %v453 = vpack.c.b16 %v417, %v416
    %v454 = vpack.c.b16 %v419, %v418
    %v455 = vpack.c.b16 %v421, %v420
    %v456 = vpack.c.b16 %v423, %v422
    %v457 = vpack.c.b16 %v425, %v424
    %v458 = vpack.c.b16 %v427, %v426
    %v459 = vpack.c.b16 %v429, %v428
    %v460 = vpack.c.b16 %v431, %v430
    %v461 = vpack.c.b16 %v433, %v432
    %v462 = vpack.c.b16 %v435, %v434
    %vm463 = vcmask 588800
    %v465 = vsel %vm463, %v436, 0
    %v468 = vsel %vm463, %v437, 0
    %v471 = vsel %vm463, %v438, 0
    %v474 = vsel %vm463, %v439, 0
    %v477 = vsel %vm463, %v440, 0
    %v480 = vsel %vm463, %v441, 0
    %v483 = vsel %vm463, %v442, 0
    %v486 = vsel %vm463, %v443, 0
    %v489 = vsel %vm463, %v444, 0
    %v492 = vsel %vm463, %v445, 0
    %v495 = vsel %vm463, %v446, 0
    %v498 = vsel %vm463, %v447, 0
    %v501 = vsel %vm463, %v448, 0
    %v504 = vsel %vm463, %v449, 0
    %v507 = vsel %vm463, %v450, 0
    %v510 = vsel %vm463, %v451, 0
    %v513 = vsel %vm463, %v452, 0
    %v516 = vsel %vm463, %v453, 0
    %v519 = vsel %vm463, %v454, 0
    %v522 = vsel %vm463, %v455, 0
    %v525 = vsel %vm463, %v456, 0
    %v528 = vsel %vm463, %v457, 0
    %v531 = vsel %vm463, %v458, 0
    %v534 = vsel %vm463, %v459, 0
    %v537 = vsel %vm463, %v460, 0
    %v540 = vsel %vm463, %v461, 0
    %v543 = vsel %vm463, %v462, 0
    %vm545 = vcmask 1043456
    %v547 = vsel %vm545, %v321, 0
    %v550 = vsel %vm545, %v322, 0
    %v553 = vsel %vm545, %v323, 0
    %v556 = vsel %vm545, %v324, 0
    %v559 = vsel %vm545, %v325, 0
    %v562 = vsel %vm545, %v326, 0
    %v565 = vsel %vm545, %v327, 0
    %567 = vmatprep.subr.bf16.mxu0 0
    %568 = vmatpush1.bf16.msra.mxu0 0
    %569 = vmatprep.subr.bf16.mxu0 0
    %570 = vmatpush1.bf16.msra.mxu0 0
    %571 = vmatprep.subr.bf16.mxu0 0
    %572 = vmatpush1.bf16.msra.mxu0 0
    %573 = vmatprep.subr.bf16.mxu0 %v550
    %574 = vmatpush1.bf16.msra.mxu0 %v547
    %575 = vmatprep.subr.bf16.mxu0 %v315
    %576 = vmatpush1.bf16.msra.mxu0 %v314
    %577 = vmatprep.subr.bf16.mxu0 %v308
    %578 = vmatpush1.bf16.msra.mxu0 %v307
    %579 = vmatprep.subr.bf16.mxu0 %v301
    %580 = vmatpush1.bf16.msra.mxu0 %v300
    %581 = vmatprep.subr.bf16.mxu0 %v294
    %582 = vmatpush1.bf16.msra.mxu0 %v293
    %583 = vmatprep.subr.bf16.mxu0 0
    %584 = vmatpush2.bf16.msra.mxu0 0
    %585 = vmatprep.subr.bf16.mxu0 0
    %586 = vmatpush2.bf16.msra.mxu0 0
    %587 = vmatprep.subr.bf16.mxu0 0
    %588 = vmatpush2.bf16.msra.mxu0 0
    %589 = vmatprep.subr.bf16.mxu0 0
    %590 = vmatpush2.bf16.msra.mxu0 0
    %591 = vmatprep.subr.bf16.mxu0 0
    %592 = vmatpush2.bf16.msra.mxu0 0
    %593 = vmatprep.subr.bf16.mxu0 0
    %594 = vmatpush2.bf16.msra.mxu0 0
    %595 = vmatprep.subr.bf16.mxu0 0
    %596 = vmatpush2.bf16.msra.mxu0 0
    %597 = vmatprep.subr.bf16.mxu0 0
    %598 = vmatpush2.bf16.msra.mxu0 0
    %599 = vmatprep.mubr.bf16.mxu0 0
    %600 = vmatmul.mubr.bf16.gmra.mxu0 %v465
    %v601 = vpop.f32.mrf.mxu0
    %v602 = vadd.f32 0.0, %v601
    %v603 = vpop.f32.mrf.mxu0
    %v604 = vadd.f32 0.0, %v603
    %v605 = vpop.f32.mrf.mxu0
    %v606 = vadd.f32 0.0, %v605
    %v607 = vpop.f32.mrf.mxu0
    %v608 = vadd.f32 0.0, %v607
    %609 = vmatprep.mubr.bf16.mxu0 0
    %610 = vmatmul.mubr.bf16.gmra.mxu0 %v468
    %v611 = vpop.f32.mrf.mxu0
    %v612 = vadd.f32 0.0, %v611
    %v613 = vpop.f32.mrf.mxu0
    %v614 = vadd.f32 0.0, %v613
    %v615 = vpop.f32.mrf.mxu0
    %v616 = vadd.f32 0.0, %v615
    %v617 = vpop.f32.mrf.mxu0
    %v618 = vadd.f32 0.0, %v617
    %619 = vmatprep.mubr.bf16.mxu0 0
    %620 = vmatmul.mubr.bf16.gmra.mxu0 %v471
    %v621 = vpop.f32.mrf.mxu0
    %v622 = vadd.f32 0.0, %v621
    %v623 = vpop.f32.mrf.mxu0
    %v624 = vadd.f32 0.0, %v623
    %v625 = vpop.f32.mrf.mxu0
    %v626 = vadd.f32 0.0, %v625
    %v627 = vpop.f32.mrf.mxu0
    %v628 = vadd.f32 0.0, %v627
    %629 = vmatprep.mubr.bf16.mxu0 0
    %630 = vmatmul.mubr.bf16.gmra.mxu0 %v474
    %v631 = vpop.f32.mrf.mxu0
    %v632 = vadd.f32 0.0, %v631
    %v633 = vpop.f32.mrf.mxu0
    %v634 = vadd.f32 0.0, %v633
    %v635 = vpop.f32.mrf.mxu0
    %v636 = vadd.f32 0.0, %v635
    %v637 = vpop.f32.mrf.mxu0
    %v638 = vadd.f32 0.0, %v637
    %639 = vmatprep.mubr.bf16.mxu0 0
    %640 = vmatmul.mubr.bf16.gmra.mxu0 %v477
    %v641 = vpop.f32.mrf.mxu0
    %v642 = vadd.f32 0.0, %v641
    %v643 = vpop.f32.mrf.mxu0
    %v644 = vadd.f32 0.0, %v643
    %v645 = vpop.f32.mrf.mxu0
    %v646 = vadd.f32 0.0, %v645
    %v647 = vpop.f32.mrf.mxu0
    %v648 = vadd.f32 0.0, %v647
    %649 = vmatprep.mubr.bf16.mxu0 0
    %650 = vmatmul.mubr.bf16.gmra.mxu0 %v480
    %v651 = vpop.f32.mrf.mxu0
    %v652 = vadd.f32 0.0, %v651
    %v653 = vpop.f32.mrf.mxu0
    %v654 = vadd.f32 0.0, %v653
    %v655 = vpop.f32.mrf.mxu0
    %v656 = vadd.f32 0.0, %v655
    %v657 = vpop.f32.mrf.mxu0
    %v658 = vadd.f32 0.0, %v657
    %659 = vmatprep.mubr.bf16.mxu0 0
    %660 = vmatmul.mubr.bf16.gmra.mxu0 %v483
    %v661 = vpop.f32.mrf.mxu0
    %v662 = vadd.f32 0.0, %v661
    %v663 = vpop.f32.mrf.mxu0
    %v664 = vadd.f32 0.0, %v663
    %v665 = vpop.f32.mrf.mxu0
    %v666 = vadd.f32 0.0, %v665
    %v667 = vpop.f32.mrf.mxu0
    %v668 = vadd.f32 0.0, %v667
    %669 = vmatprep.mubr.bf16.mxu0 0
    %670 = vmatmul.mubr.bf16.gmra.mxu0 %v486
    %v671 = vpop.f32.mrf.mxu0
    %v672 = vadd.f32 0.0, %v671
    %v673 = vpop.f32.mrf.mxu0
    %v674 = vadd.f32 0.0, %v673
    %v675 = vpop.f32.mrf.mxu0
    %v676 = vadd.f32 0.0, %v675
    %v677 = vpop.f32.mrf.mxu0
    %v678 = vadd.f32 0.0, %v677
    %679 = vmatprep.mubr.bf16.mxu0 0
    %680 = vmatmul.mubr.bf16.gmra.mxu0 %v489
    %v681 = vpop.f32.mrf.mxu0
    %v682 = vadd.f32 0.0, %v681
    %v683 = vpop.f32.mrf.mxu0
    %v684 = vadd.f32 0.0, %v683
    %v685 = vpop.f32.mrf.mxu0
    %v686 = vadd.f32 0.0, %v685
    %v687 = vpop.f32.mrf.mxu0
    %v688 = vadd.f32 0.0, %v687
    %689 = vmatprep.mubr.bf16.mxu0 0
    %690 = vmatmul.mubr.bf16.gmra.mxu0 %v492
    %v691 = vpop.f32.mrf.mxu0
    %v692 = vadd.f32 0.0, %v691
    %v693 = vpop.f32.mrf.mxu0
    %v694 = vadd.f32 0.0, %v693
    %v695 = vpop.f32.mrf.mxu0
    %v696 = vadd.f32 0.0, %v695
    %v697 = vpop.f32.mrf.mxu0
    %v698 = vadd.f32 0.0, %v697
    %699 = vmatprep.mubr.bf16.mxu0 0
    %700 = vmatmul.mubr.bf16.gmra.mxu0 %v495
    %v701 = vpop.f32.mrf.mxu0
    %v702 = vadd.f32 0.0, %v701
    %v703 = vpop.f32.mrf.mxu0
    %v704 = vadd.f32 0.0, %v703
    %v705 = vpop.f32.mrf.mxu0
    %v706 = vadd.f32 0.0, %v705
    %v707 = vpop.f32.mrf.mxu0
    %v708 = vadd.f32 0.0, %v707
    %709 = vmatprep.mubr.bf16.mxu0 0
    %710 = vmatmul.mubr.bf16.gmra.mxu0 %v498
    %v711 = vpop.f32.mrf.mxu0
    %v712 = vadd.f32 0.0, %v711
    %v713 = vpop.f32.mrf.mxu0
    %v714 = vadd.f32 0.0, %v713
    %v715 = vpop.f32.mrf.mxu0
    %v716 = vadd.f32 0.0, %v715
    %v717 = vpop.f32.mrf.mxu0
    %v718 = vadd.f32 0.0, %v717
    %719 = vmatprep.mubr.bf16.mxu0 0
    %720 = vmatmul.mubr.bf16.gmra.mxu0 %v501
    %v721 = vpop.f32.mrf.mxu0
    %v722 = vadd.f32 0.0, %v721
    %v723 = vpop.f32.mrf.mxu0
    %v724 = vadd.f32 0.0, %v723
    %v725 = vpop.f32.mrf.mxu0
    %v726 = vadd.f32 0.0, %v725
    %v727 = vpop.f32.mrf.mxu0
    %v728 = vadd.f32 0.0, %v727
    %729 = vmatprep.mubr.bf16.mxu0 0
    %730 = vmatmul.mubr.bf16.gmra.mxu0 %v504
    %v731 = vpop.f32.mrf.mxu0
    %v732 = vadd.f32 0.0, %v731
    %v733 = vpop.f32.mrf.mxu0
    %v734 = vadd.f32 0.0, %v733
    %v735 = vpop.f32.mrf.mxu0
    %v736 = vadd.f32 0.0, %v735
    %v737 = vpop.f32.mrf.mxu0
    %v738 = vadd.f32 0.0, %v737
    %739 = vmatprep.mubr.bf16.mxu0 0
    %740 = vmatmul.mubr.bf16.gmra.mxu0 %v507
    %v741 = vpop.f32.mrf.mxu0
    %v742 = vadd.f32 0.0, %v741
    %v743 = vpop.f32.mrf.mxu0
    %v744 = vadd.f32 0.0, %v743
    %v745 = vpop.f32.mrf.mxu0
    %v746 = vadd.f32 0.0, %v745
    %v747 = vpop.f32.mrf.mxu0
    %v748 = vadd.f32 0.0, %v747
    %749 = vmatprep.mubr.bf16.mxu0 0
    %750 = vmatmul.mubr.bf16.gmra.mxu0 %v510
    %v751 = vpop.f32.mrf.mxu0
    %v752 = vadd.f32 0.0, %v751
    %v753 = vpop.f32.mrf.mxu0
    %v754 = vadd.f32 0.0, %v753
    %v755 = vpop.f32.mrf.mxu0
    %v756 = vadd.f32 0.0, %v755
    %v757 = vpop.f32.mrf.mxu0
    %v758 = vadd.f32 0.0, %v757
    %759 = vmatprep.mubr.bf16.mxu0 0
    %760 = vmatmul.mubr.bf16.gmra.mxu0 %v513
    %v761 = vpop.f32.mrf.mxu0
    %v762 = vadd.f32 0.0, %v761
    %v763 = vpop.f32.mrf.mxu0
    %v764 = vadd.f32 0.0, %v763
    %v765 = vpop.f32.mrf.mxu0
    %v766 = vadd.f32 0.0, %v765
    %v767 = vpop.f32.mrf.mxu0
    %v768 = vadd.f32 0.0, %v767
    %769 = vmatprep.mubr.bf16.mxu0 0
    %770 = vmatmul.mubr.bf16.gmra.mxu0 %v516
    %v771 = vpop.f32.mrf.mxu0
    %v772 = vadd.f32 0.0, %v771
    %v773 = vpop.f32.mrf.mxu0
    %v774 = vadd.f32 0.0, %v773
    %v775 = vpop.f32.mrf.mxu0
    %v776 = vadd.f32 0.0, %v775
    %v777 = vpop.f32.mrf.mxu0
    %v778 = vadd.f32 0.0, %v777
    %779 = vmatprep.mubr.bf16.mxu0 0
    %780 = vmatmul.mubr.bf16.gmra.mxu0 %v519
    %v781 = vpop.f32.mrf.mxu0
    %v782 = vadd.f32 0.0, %v781
    %v783 = vpop.f32.mrf.mxu0
    %v784 = vadd.f32 0.0, %v783
    %v785 = vpop.f32.mrf.mxu0
    %v786 = vadd.f32 0.0, %v785
    %v787 = vpop.f32.mrf.mxu0
    %v788 = vadd.f32 0.0, %v787
    %789 = vmatprep.mubr.bf16.mxu0 0
    %790 = vmatmul.mubr.bf16.gmra.mxu0 %v522
    %v791 = vpop.f32.mrf.mxu0
    %v792 = vadd.f32 0.0, %v791
    %v793 = vpop.f32.mrf.mxu0
    %v794 = vadd.f32 0.0, %v793
    %v795 = vpop.f32.mrf.mxu0
    %v796 = vadd.f32 0.0, %v795
    %v797 = vpop.f32.mrf.mxu0
    %v798 = vadd.f32 0.0, %v797
    %799 = vmatprep.mubr.bf16.mxu0 0
    %800 = vmatmul.mubr.bf16.gmra.mxu0 %v525
    %v801 = vpop.f32.mrf.mxu0
    %v802 = vadd.f32 0.0, %v801
    %v803 = vpop.f32.mrf.mxu0
    %v804 = vadd.f32 0.0, %v803
    %v805 = vpop.f32.mrf.mxu0
    %v806 = vadd.f32 0.0, %v805
    %v807 = vpop.f32.mrf.mxu0
    %v808 = vadd.f32 0.0, %v807
    %809 = vmatprep.mubr.bf16.mxu0 0
    %810 = vmatmul.mubr.bf16.gmra.mxu0 %v528
    %v811 = vpop.f32.mrf.mxu0
    %v812 = vadd.f32 0.0, %v811
    %v813 = vpop.f32.mrf.mxu0
    %v814 = vadd.f32 0.0, %v813
    %v815 = vpop.f32.mrf.mxu0
    %v816 = vadd.f32 0.0, %v815
    %v817 = vpop.f32.mrf.mxu0
    %v818 = vadd.f32 0.0, %v817
    %819 = vmatprep.mubr.bf16.mxu0 0
    %820 = vmatmul.mubr.bf16.gmra.mxu0 %v531
    %v821 = vpop.f32.mrf.mxu0
    %v822 = vadd.f32 0.0, %v821
    %v823 = vpop.f32.mrf.mxu0
    %v824 = vadd.f32 0.0, %v823
    %v825 = vpop.f32.mrf.mxu0
    %v826 = vadd.f32 0.0, %v825
    %v827 = vpop.f32.mrf.mxu0
    %v828 = vadd.f32 0.0, %v827
    %829 = vmatprep.mubr.bf16.mxu0 0
    %830 = vmatmul.mubr.bf16.gmra.mxu0 %v534
    %v831 = vpop.f32.mrf.mxu0
    %v832 = vadd.f32 0.0, %v831
    %v833 = vpop.f32.mrf.mxu0
    %v834 = vadd.f32 0.0, %v833
    %v835 = vpop.f32.mrf.mxu0
    %v836 = vadd.f32 0.0, %v835
    %v837 = vpop.f32.mrf.mxu0
    %v838 = vadd.f32 0.0, %v837
    %839 = vmatprep.mubr.bf16.mxu0 0
    %840 = vmatmul.mubr.bf16.gmra.mxu0 %v537
    %v841 = vpop.f32.mrf.mxu0
    %v842 = vadd.f32 0.0, %v841
    %v843 = vpop.f32.mrf.mxu0
    %v844 = vadd.f32 0.0, %v843
    %v845 = vpop.f32.mrf.mxu0
    %v846 = vadd.f32 0.0, %v845
    %v847 = vpop.f32.mrf.mxu0
    %v848 = vadd.f32 0.0, %v847
    %849 = vmatprep.mubr.bf16.mxu0 0
    %850 = vmatmul.mubr.bf16.gmra.mxu0 %v540
    %v851 = vpop.f32.mrf.mxu0
    %v852 = vadd.f32 0.0, %v851
    %v853 = vpop.f32.mrf.mxu0
    %v854 = vadd.f32 0.0, %v853
    %v855 = vpop.f32.mrf.mxu0
    %v856 = vadd.f32 0.0, %v855
    %v857 = vpop.f32.mrf.mxu0
    %v858 = vadd.f32 0.0, %v857
    %859 = vmatprep.mubr.bf16.mxu0 0
    %860 = vmatmul.mubr.bf16.gmra.mxu0 %v543
    %v861 = vpop.f32.mrf.mxu0
    %v862 = vadd.f32 0.0, %v861
    %v863 = vpop.f32.mrf.mxu0
    %v864 = vadd.f32 0.0, %v863
    %v865 = vpop.f32.mrf.mxu0
    %v866 = vadd.f32 0.0, %v865
    %v867 = vpop.f32.mrf.mxu0
    %v868 = vadd.f32 0.0, %v867
    %869 = vdwg.mxu0
    %870 = vmatprep.subr.bf16.mxu0 0
    %871 = vmatpush1.bf16.msra.mxu0 0
    %872 = vmatprep.subr.bf16.mxu0 0
    %873 = vmatpush1.bf16.msra.mxu0 0
    %874 = vmatprep.subr.bf16.mxu0 0
    %875 = vmatpush1.bf16.msra.mxu0 0
    %876 = vmatprep.subr.bf16.mxu0 %v556
    %877 = vmatpush1.bf16.msra.mxu0 %v553
    %878 = vmatprep.subr.bf16.mxu0 %v317
    %879 = vmatpush1.bf16.msra.mxu0 %v316
    %880 = vmatprep.subr.bf16.mxu0 %v310
    %881 = vmatpush1.bf16.msra.mxu0 %v309
    %882 = vmatprep.subr.bf16.mxu0 %v303
    %883 = vmatpush1.bf16.msra.mxu0 %v302
    %884 = vmatprep.subr.bf16.mxu0 %v296
    %885 = vmatpush1.bf16.msra.mxu0 %v295
    %886 = vmatprep.subr.bf16.mxu0 0
    %887 = vmatpush2.bf16.msra.mxu0 0
    %888 = vmatprep.subr.bf16.mxu0 0
    %889 = vmatpush2.bf16.msra.mxu0 0
    %890 = vmatprep.subr.bf16.mxu0 0
    %891 = vmatpush2.bf16.msra.mxu0 0
    %892 = vmatprep.subr.bf16.mxu0 0
    %893 = vmatpush2.bf16.msra.mxu0 0
    %894 = vmatprep.subr.bf16.mxu0 0
    %895 = vmatpush2.bf16.msra.mxu0 0
    %896 = vmatprep.subr.bf16.mxu0 0
    %897 = vmatpush2.bf16.msra.mxu0 0
    %898 = vmatprep.subr.bf16.mxu0 0
    %899 = vmatpush2.bf16.msra.mxu0 0
    %900 = vmatprep.subr.bf16.mxu0 0
    %901 = vmatpush2.bf16.msra.mxu0 0
    %902 = vmatprep.mubr.bf16.mxu0 0
    %903 = vmatmul.mubr.bf16.gmra.mxu0 %v465
    %v904 = vpop.f32.mrf.mxu0
    %v905 = vadd.f32 0.0, %v904
    %v906 = vpop.f32.mrf.mxu0
    %v907 = vadd.f32 0.0, %v906
    %v908 = vpop.f32.mrf.mxu0
    %v909 = vadd.f32 0.0, %v908
    %v910 = vpop.f32.mrf.mxu0
    %v911 = vadd.f32 0.0, %v910
    %912 = vmatprep.mubr.bf16.mxu0 0
    %913 = vmatmul.mubr.bf16.gmra.mxu0 %v468
    %v914 = vpop.f32.mrf.mxu0
    %v915 = vadd.f32 0.0, %v914
    %v916 = vpop.f32.mrf.mxu0
    %v917 = vadd.f32 0.0, %v916
    %v918 = vpop.f32.mrf.mxu0
    %v919 = vadd.f32 0.0, %v918
    %v920 = vpop.f32.mrf.mxu0
    %v921 = vadd.f32 0.0, %v920
    %922 = vmatprep.mubr.bf16.mxu0 0
    %923 = vmatmul.mubr.bf16.gmra.mxu0 %v471
    %v924 = vpop.f32.mrf.mxu0
    %v925 = vadd.f32 0.0, %v924
    %v926 = vpop.f32.mrf.mxu0
    %v927 = vadd.f32 0.0, %v926
    %v928 = vpop.f32.mrf.mxu0
    %v929 = vadd.f32 0.0, %v928
    %v930 = vpop.f32.mrf.mxu0
    %v931 = vadd.f32 0.0, %v930
    %932 = vmatprep.mubr.bf16.mxu0 0
    %933 = vmatmul.mubr.bf16.gmra.mxu0 %v474
    %v934 = vpop.f32.mrf.mxu0
    %v935 = vadd.f32 0.0, %v934
    %v936 = vpop.f32.mrf.mxu0
    %v937 = vadd.f32 0.0, %v936
    %v938 = vpop.f32.mrf.mxu0
    %v939 = vadd.f32 0.0, %v938
    %v940 = vpop.f32.mrf.mxu0
    %v941 = vadd.f32 0.0, %v940
    %942 = vmatprep.mubr.bf16.mxu0 0
    %943 = vmatmul.mubr.bf16.gmra.mxu0 %v477
    %v944 = vpop.f32.mrf.mxu0
    %v945 = vadd.f32 0.0, %v944
    %v946 = vpop.f32.mrf.mxu0
    %v947 = vadd.f32 0.0, %v946
    %v948 = vpop.f32.mrf.mxu0
    %v949 = vadd.f32 0.0, %v948
    %v950 = vpop.f32.mrf.mxu0
    %v951 = vadd.f32 0.0, %v950
    %952 = vmatprep.mubr.bf16.mxu0 0
    %953 = vmatmul.mubr.bf16.gmra.mxu0 %v480
    %v954 = vpop.f32.mrf.mxu0
    %v955 = vadd.f32 0.0, %v954
    %v956 = vpop.f32.mrf.mxu0
    %v957 = vadd.f32 0.0, %v956
    %v958 = vpop.f32.mrf.mxu0
    %v959 = vadd.f32 0.0, %v958
    %v960 = vpop.f32.mrf.mxu0
    %v961 = vadd.f32 0.0, %v960
    %962 = vmatprep.mubr.bf16.mxu0 0
    %963 = vmatmul.mubr.bf16.gmra.mxu0 %v483
    %v964 = vpop.f32.mrf.mxu0
    %v965 = vadd.f32 0.0, %v964
    %v966 = vpop.f32.mrf.mxu0
    %v967 = vadd.f32 0.0, %v966
    %v968 = vpop.f32.mrf.mxu0
    %v969 = vadd.f32 0.0, %v968
    %v970 = vpop.f32.mrf.mxu0
    %v971 = vadd.f32 0.0, %v970
    %972 = vmatprep.mubr.bf16.mxu0 0
    %973 = vmatmul.mubr.bf16.gmra.mxu0 %v486
    %v974 = vpop.f32.mrf.mxu0
    %v975 = vadd.f32 0.0, %v974
    %v976 = vpop.f32.mrf.mxu0
    %v977 = vadd.f32 0.0, %v976
    %v978 = vpop.f32.mrf.mxu0
    %v979 = vadd.f32 0.0, %v978
    %v980 = vpop.f32.mrf.mxu0
    %v981 = vadd.f32 0.0, %v980
    %982 = vmatprep.mubr.bf16.mxu0 0
    %983 = vmatmul.mubr.bf16.gmra.mxu0 %v489
    %v984 = vpop.f32.mrf.mxu0
    %v985 = vadd.f32 0.0, %v984
    %v986 = vpop.f32.mrf.mxu0
    %v987 = vadd.f32 0.0, %v986
    %v988 = vpop.f32.mrf.mxu0
    %v989 = vadd.f32 0.0, %v988
    %v990 = vpop.f32.mrf.mxu0
    %v991 = vadd.f32 0.0, %v990
    %992 = vmatprep.mubr.bf16.mxu0 0
    %993 = vmatmul.mubr.bf16.gmra.mxu0 %v492
    %v994 = vpop.f32.mrf.mxu0
    %v995 = vadd.f32 0.0, %v994
    %v996 = vpop.f32.mrf.mxu0
    %v997 = vadd.f32 0.0, %v996
    %v998 = vpop.f32.mrf.mxu0
    %v999 = vadd.f32 0.0, %v998
    %v1000 = vpop.f32.mrf.mxu0
    %v1001 = vadd.f32 0.0, %v1000
    %1002 = vmatprep.mubr.bf16.mxu0 0
    %1003 = vmatmul.mubr.bf16.gmra.mxu0 %v495
    %v1004 = vpop.f32.mrf.mxu0
    %v1005 = vadd.f32 0.0, %v1004
    %v1006 = vpop.f32.mrf.mxu0
    %v1007 = vadd.f32 0.0, %v1006
    %v1008 = vpop.f32.mrf.mxu0
    %v1009 = vadd.f32 0.0, %v1008
    %v1010 = vpop.f32.mrf.mxu0
    %v1011 = vadd.f32 0.0, %v1010
    %1012 = vmatprep.mubr.bf16.mxu0 0
    %1013 = vmatmul.mubr.bf16.gmra.mxu0 %v498
    %v1014 = vpop.f32.mrf.mxu0
    %v1015 = vadd.f32 0.0, %v1014
    %v1016 = vpop.f32.mrf.mxu0
    %v1017 = vadd.f32 0.0, %v1016
    %v1018 = vpop.f32.mrf.mxu0
    %v1019 = vadd.f32 0.0, %v1018
    %v1020 = vpop.f32.mrf.mxu0
    %v1021 = vadd.f32 0.0, %v1020
    %1022 = vmatprep.mubr.bf16.mxu0 0
    %1023 = vmatmul.mubr.bf16.gmra.mxu0 %v501
    %v1024 = vpop.f32.mrf.mxu0
    %v1025 = vadd.f32 0.0, %v1024
    %v1026 = vpop.f32.mrf.mxu0
    %v1027 = vadd.f32 0.0, %v1026
    %v1028 = vpop.f32.mrf.mxu0
    %v1029 = vadd.f32 0.0, %v1028
    %v1030 = vpop.f32.mrf.mxu0
    %v1031 = vadd.f32 0.0, %v1030
    %1032 = vmatprep.mubr.bf16.mxu0 0
    %1033 = vmatmul.mubr.bf16.gmra.mxu0 %v504
    %v1034 = vpop.f32.mrf.mxu0
    %v1035 = vadd.f32 0.0, %v1034
    %v1036 = vpop.f32.mrf.mxu0
    %v1037 = vadd.f32 0.0, %v1036
    %v1038 = vpop.f32.mrf.mxu0
    %v1039 = vadd.f32 0.0, %v1038
    %v1040 = vpop.f32.mrf.mxu0
    %v1041 = vadd.f32 0.0, %v1040
    %1042 = vmatprep.mubr.bf16.mxu0 0
    %1043 = vmatmul.mubr.bf16.gmra.mxu0 %v507
    %v1044 = vpop.f32.mrf.mxu0
    %v1045 = vadd.f32 0.0, %v1044
    %v1046 = vpop.f32.mrf.mxu0
    %v1047 = vadd.f32 0.0, %v1046
    %v1048 = vpop.f32.mrf.mxu0
    %v1049 = vadd.f32 0.0, %v1048
    %v1050 = vpop.f32.mrf.mxu0
    %v1051 = vadd.f32 0.0, %v1050
    %1052 = vmatprep.mubr.bf16.mxu0 0
    %1053 = vmatmul.mubr.bf16.gmra.mxu0 %v510
    %v1054 = vpop.f32.mrf.mxu0
    %v1055 = vadd.f32 0.0, %v1054
    %v1056 = vpop.f32.mrf.mxu0
    %v1057 = vadd.f32 0.0, %v1056
    %v1058 = vpop.f32.mrf.mxu0
    %v1059 = vadd.f32 0.0, %v1058
    %v1060 = vpop.f32.mrf.mxu0
    %v1061 = vadd.f32 0.0, %v1060
    %1062 = vmatprep.mubr.bf16.mxu0 0
    %1063 = vmatmul.mubr.bf16.gmra.mxu0 %v513
    %v1064 = vpop.f32.mrf.mxu0
    %v1065 = vadd.f32 0.0, %v1064
    %v1066 = vpop.f32.mrf.mxu0
    %v1067 = vadd.f32 0.0, %v1066
    %v1068 = vpop.f32.mrf.mxu0
    %v1069 = vadd.f32 0.0, %v1068
    %v1070 = vpop.f32.mrf.mxu0
    %v1071 = vadd.f32 0.0, %v1070
    %1072 = vmatprep.mubr.bf16.mxu0 0
    %1073 = vmatmul.mubr.bf16.gmra.mxu0 %v516
    %v1074 = vpop.f32.mrf.mxu0
    %v1075 = vadd.f32 0.0, %v1074
    %v1076 = vpop.f32.mrf.mxu0
    %v1077 = vadd.f32 0.0, %v1076
    %v1078 = vpop.f32.mrf.mxu0
    %v1079 = vadd.f32 0.0, %v1078
    %v1080 = vpop.f32.mrf.mxu0
    %v1081 = vadd.f32 0.0, %v1080
    %1082 = vmatprep.mubr.bf16.mxu0 0
    %1083 = vmatmul.mubr.bf16.gmra.mxu0 %v519
    %v1084 = vpop.f32.mrf.mxu0
    %v1085 = vadd.f32 0.0, %v1084
    %v1086 = vpop.f32.mrf.mxu0
    %v1087 = vadd.f32 0.0, %v1086
    %v1088 = vpop.f32.mrf.mxu0
    %v1089 = vadd.f32 0.0, %v1088
    %v1090 = vpop.f32.mrf.mxu0
    %v1091 = vadd.f32 0.0, %v1090
    %1092 = vmatprep.mubr.bf16.mxu0 0
    %1093 = vmatmul.mubr.bf16.gmra.mxu0 %v522
    %v1094 = vpop.f32.mrf.mxu0
    %v1095 = vadd.f32 0.0, %v1094
    %v1096 = vpop.f32.mrf.mxu0
    %v1097 = vadd.f32 0.0, %v1096
    %v1098 = vpop.f32.mrf.mxu0
    %v1099 = vadd.f32 0.0, %v1098
    %v1100 = vpop.f32.mrf.mxu0
    %v1101 = vadd.f32 0.0, %v1100
    %1102 = vmatprep.mubr.bf16.mxu0 0
    %1103 = vmatmul.mubr.bf16.gmra.mxu0 %v525
    %v1104 = vpop.f32.mrf.mxu0
    %v1105 = vadd.f32 0.0, %v1104
    %v1106 = vpop.f32.mrf.mxu0
    %v1107 = vadd.f32 0.0, %v1106
    %v1108 = vpop.f32.mrf.mxu0
    %v1109 = vadd.f32 0.0, %v1108
    %v1110 = vpop.f32.mrf.mxu0
    %v1111 = vadd.f32 0.0, %v1110
    %1112 = vmatprep.mubr.bf16.mxu0 0
    %1113 = vmatmul.mubr.bf16.gmra.mxu0 %v528
    %v1114 = vpop.f32.mrf.mxu0
    %v1115 = vadd.f32 0.0, %v1114
    %v1116 = vpop.f32.mrf.mxu0
    %v1117 = vadd.f32 0.0, %v1116
    %v1118 = vpop.f32.mrf.mxu0
    %v1119 = vadd.f32 0.0, %v1118
    %v1120 = vpop.f32.mrf.mxu0
    %v1121 = vadd.f32 0.0, %v1120
    %1122 = vmatprep.mubr.bf16.mxu0 0
    %1123 = vmatmul.mubr.bf16.gmra.mxu0 %v531
    %v1124 = vpop.f32.mrf.mxu0
    %v1125 = vadd.f32 0.0, %v1124
    %v1126 = vpop.f32.mrf.mxu0
    %v1127 = vadd.f32 0.0, %v1126
    %v1128 = vpop.f32.mrf.mxu0
    %v1129 = vadd.f32 0.0, %v1128
    %v1130 = vpop.f32.mrf.mxu0
    %v1131 = vadd.f32 0.0, %v1130
    %1132 = vmatprep.mubr.bf16.mxu0 0
    %1133 = vmatmul.mubr.bf16.gmra.mxu0 %v534
    %v1134 = vpop.f32.mrf.mxu0
    %v1135 = vadd.f32 0.0, %v1134
    %v1136 = vpop.f32.mrf.mxu0
    %v1137 = vadd.f32 0.0, %v1136
    %v1138 = vpop.f32.mrf.mxu0
    %v1139 = vadd.f32 0.0, %v1138
    %v1140 = vpop.f32.mrf.mxu0
    %v1141 = vadd.f32 0.0, %v1140
    %1142 = vmatprep.mubr.bf16.mxu0 0
    %1143 = vmatmul.mubr.bf16.gmra.mxu0 %v537
    %v1144 = vpop.f32.mrf.mxu0
    %v1145 = vadd.f32 0.0, %v1144
    %v1146 = vpop.f32.mrf.mxu0
    %v1147 = vadd.f32 0.0, %v1146
    %v1148 = vpop.f32.mrf.mxu0
    %v1149 = vadd.f32 0.0, %v1148
    %v1150 = vpop.f32.mrf.mxu0
    %v1151 = vadd.f32 0.0, %v1150
    %1152 = vmatprep.mubr.bf16.mxu0 0
    %1153 = vmatmul.mubr.bf16.gmra.mxu0 %v540
    %v1154 = vpop.f32.mrf.mxu0
    %v1155 = vadd.f32 0.0, %v1154
    %v1156 = vpop.f32.mrf.mxu0
    %v1157 = vadd.f32 0.0, %v1156
    %v1158 = vpop.f32.mrf.mxu0
    %v1159 = vadd.f32 0.0, %v1158
    %v1160 = vpop.f32.mrf.mxu0
    %v1161 = vadd.f32 0.0, %v1160
    %1162 = vmatprep.mubr.bf16.mxu0 0
    %1163 = vmatmul.mubr.bf16.gmra.mxu0 %v543
    %v1164 = vpop.f32.mrf.mxu0
    %v1165 = vadd.f32 0.0, %v1164
    %v1166 = vpop.f32.mrf.mxu0
    %v1167 = vadd.f32 0.0, %v1166
    %v1168 = vpop.f32.mrf.mxu0
    %v1169 = vadd.f32 0.0, %v1168
    %v1170 = vpop.f32.mrf.mxu0
    %v1171 = vadd.f32 0.0, %v1170
    %1172 = vdwg.mxu0
    %1173 = vmatprep.subr.bf16.mxu0 0
    %1174 = vmatpush1.bf16.msra.mxu0 0
    %1175 = vmatprep.subr.bf16.mxu0 0
    %1176 = vmatpush1.bf16.msra.mxu0 0
    %1177 = vmatprep.subr.bf16.mxu0 0
    %1178 = vmatpush1.bf16.msra.mxu0 0
    %1179 = vmatprep.subr.bf16.mxu0 %v562
    %1180 = vmatpush1.bf16.msra.mxu0 %v559
    %1181 = vmatprep.subr.bf16.mxu0 %v319
    %1182 = vmatpush1.bf16.msra.mxu0 %v318
    %1183 = vmatprep.subr.bf16.mxu0 %v312
    %1184 = vmatpush1.bf16.msra.mxu0 %v311
    %1185 = vmatprep.subr.bf16.mxu0 %v305
    %1186 = vmatpush1.bf16.msra.mxu0 %v304
    %1187 = vmatprep.subr.bf16.mxu0 %v298
    %1188 = vmatpush1.bf16.msra.mxu0 %v297
    %1189 = vmatprep.subr.bf16.mxu0 0
    %1190 = vmatpush2.bf16.msra.mxu0 0
    %1191 = vmatprep.subr.bf16.mxu0 0
    %1192 = vmatpush2.bf16.msra.mxu0 0
    %1193 = vmatprep.subr.bf16.mxu0 0
    %1194 = vmatpush2.bf16.msra.mxu0 0
    %1195 = vmatprep.subr.bf16.mxu0 0
    %1196 = vmatpush2.bf16.msra.mxu0 0
    %1197 = vmatprep.subr.bf16.mxu0 0
    %1198 = vmatpush2.bf16.msra.mxu0 0
    %1199 = vmatprep.subr.bf16.mxu0 0
    %1200 = vmatpush2.bf16.msra.mxu0 0
    %1201 = vmatprep.subr.bf16.mxu0 0
    %1202 = vmatpush2.bf16.msra.mxu0 0
    %1203 = vmatprep.subr.bf16.mxu0 0
    %1204 = vmatpush2.bf16.msra.mxu0 0
    %1205 = vmatprep.mubr.bf16.mxu0 0
    %1206 = vmatmul.mubr.bf16.gmra.mxu0 %v465
    %v1207 = vpop.f32.mrf.mxu0
    %v1208 = vadd.f32 0.0, %v1207
    %v1209 = vpop.f32.mrf.mxu0
    %v1210 = vadd.f32 0.0, %v1209
    %v1211 = vpop.f32.mrf.mxu0
    %v1212 = vadd.f32 0.0, %v1211
    %v1213 = vpop.f32.mrf.mxu0
    %v1214 = vadd.f32 0.0, %v1213
    %1215 = vmatprep.mubr.bf16.mxu0 0
    %1216 = vmatmul.mubr.bf16.gmra.mxu0 %v468
    %v1217 = vpop.f32.mrf.mxu0
    %v1218 = vadd.f32 0.0, %v1217
    %v1219 = vpop.f32.mrf.mxu0
    %v1220 = vadd.f32 0.0, %v1219
    %v1221 = vpop.f32.mrf.mxu0
    %v1222 = vadd.f32 0.0, %v1221
    %v1223 = vpop.f32.mrf.mxu0
    %v1224 = vadd.f32 0.0, %v1223
    %1225 = vmatprep.mubr.bf16.mxu0 0
    %1226 = vmatmul.mubr.bf16.gmra.mxu0 %v471
    %v1227 = vpop.f32.mrf.mxu0
    %v1228 = vadd.f32 0.0, %v1227
    %v1229 = vpop.f32.mrf.mxu0
    %v1230 = vadd.f32 0.0, %v1229
    %v1231 = vpop.f32.mrf.mxu0
    %v1232 = vadd.f32 0.0, %v1231
    %v1233 = vpop.f32.mrf.mxu0
    %v1234 = vadd.f32 0.0, %v1233
    %1235 = vmatprep.mubr.bf16.mxu0 0
    %1236 = vmatmul.mubr.bf16.gmra.mxu0 %v474
    %v1237 = vpop.f32.mrf.mxu0
    %v1238 = vadd.f32 0.0, %v1237
    %v1239 = vpop.f32.mrf.mxu0
    %v1240 = vadd.f32 0.0, %v1239
    %v1241 = vpop.f32.mrf.mxu0
    %v1242 = vadd.f32 0.0, %v1241
    %v1243 = vpop.f32.mrf.mxu0
    %v1244 = vadd.f32 0.0, %v1243
    %1245 = vmatprep.mubr.bf16.mxu0 0
    %1246 = vmatmul.mubr.bf16.gmra.mxu0 %v477
    %v1247 = vpop.f32.mrf.mxu0
    %v1248 = vadd.f32 0.0, %v1247
    %v1249 = vpop.f32.mrf.mxu0
    %v1250 = vadd.f32 0.0, %v1249
    %v1251 = vpop.f32.mrf.mxu0
    %v1252 = vadd.f32 0.0, %v1251
    %v1253 = vpop.f32.mrf.mxu0
    %v1254 = vadd.f32 0.0, %v1253
    %1255 = vmatprep.mubr.bf16.mxu0 0
    %1256 = vmatmul.mubr.bf16.gmra.mxu0 %v480
    %v1257 = vpop.f32.mrf.mxu0
    %v1258 = vadd.f32 0.0, %v1257
    %v1259 = vpop.f32.mrf.mxu0
    %v1260 = vadd.f32 0.0, %v1259
    %v1261 = vpop.f32.mrf.mxu0
    %v1262 = vadd.f32 0.0, %v1261
    %v1263 = vpop.f32.mrf.mxu0
    %v1264 = vadd.f32 0.0, %v1263
    %1265 = vmatprep.mubr.bf16.mxu0 0
    %1266 = vmatmul.mubr.bf16.gmra.mxu0 %v483
    %v1267 = vpop.f32.mrf.mxu0
    %v1268 = vadd.f32 0.0, %v1267
    %v1269 = vpop.f32.mrf.mxu0
    %v1270 = vadd.f32 0.0, %v1269
    %v1271 = vpop.f32.mrf.mxu0
    %v1272 = vadd.f32 0.0, %v1271
    %v1273 = vpop.f32.mrf.mxu0
    %v1274 = vadd.f32 0.0, %v1273
    %1275 = vmatprep.mubr.bf16.mxu0 0
    %1276 = vmatmul.mubr.bf16.gmra.mxu0 %v486
    %v1277 = vpop.f32.mrf.mxu0
    %v1278 = vadd.f32 0.0, %v1277
    %v1279 = vpop.f32.mrf.mxu0
    %v1280 = vadd.f32 0.0, %v1279
    %v1281 = vpop.f32.mrf.mxu0
    %v1282 = vadd.f32 0.0, %v1281
    %v1283 = vpop.f32.mrf.mxu0
    %v1284 = vadd.f32 0.0, %v1283
    %1285 = vmatprep.mubr.bf16.mxu0 0
    %1286 = vmatmul.mubr.bf16.gmra.mxu0 %v489
    %v1287 = vpop.f32.mrf.mxu0
    %v1288 = vadd.f32 0.0, %v1287
    %v1289 = vpop.f32.mrf.mxu0
    %v1290 = vadd.f32 0.0, %v1289
    %v1291 = vpop.f32.mrf.mxu0
    %v1292 = vadd.f32 0.0, %v1291
    %v1293 = vpop.f32.mrf.mxu0
    %v1294 = vadd.f32 0.0, %v1293
    %1295 = vmatprep.mubr.bf16.mxu0 0
    %1296 = vmatmul.mubr.bf16.gmra.mxu0 %v492
    %v1297 = vpop.f32.mrf.mxu0
    %v1298 = vadd.f32 0.0, %v1297
    %v1299 = vpop.f32.mrf.mxu0
    %v1300 = vadd.f32 0.0, %v1299
    %v1301 = vpop.f32.mrf.mxu0
    %v1302 = vadd.f32 0.0, %v1301
    %v1303 = vpop.f32.mrf.mxu0
    %v1304 = vadd.f32 0.0, %v1303
    %1305 = vmatprep.mubr.bf16.mxu0 0
    %1306 = vmatmul.mubr.bf16.gmra.mxu0 %v495
    %v1307 = vpop.f32.mrf.mxu0
    %v1308 = vadd.f32 0.0, %v1307
    %v1309 = vpop.f32.mrf.mxu0
    %v1310 = vadd.f32 0.0, %v1309
    %v1311 = vpop.f32.mrf.mxu0
    %v1312 = vadd.f32 0.0, %v1311
    %v1313 = vpop.f32.mrf.mxu0
    %v1314 = vadd.f32 0.0, %v1313
    %1315 = vmatprep.mubr.bf16.mxu0 0
    %1316 = vmatmul.mubr.bf16.gmra.mxu0 %v498
    %v1317 = vpop.f32.mrf.mxu0
    %v1318 = vadd.f32 0.0, %v1317
    %v1319 = vpop.f32.mrf.mxu0
    %v1320 = vadd.f32 0.0, %v1319
    %v1321 = vpop.f32.mrf.mxu0
    %v1322 = vadd.f32 0.0, %v1321
    %v1323 = vpop.f32.mrf.mxu0
    %v1324 = vadd.f32 0.0, %v1323
    %1325 = vmatprep.mubr.bf16.mxu0 0
    %1326 = vmatmul.mubr.bf16.gmra.mxu0 %v501
    %v1327 = vpop.f32.mrf.mxu0
    %v1328 = vadd.f32 0.0, %v1327
    %v1329 = vpop.f32.mrf.mxu0
    %v1330 = vadd.f32 0.0, %v1329
    %v1331 = vpop.f32.mrf.mxu0
    %v1332 = vadd.f32 0.0, %v1331
    %v1333 = vpop.f32.mrf.mxu0
    %v1334 = vadd.f32 0.0, %v1333
    %1335 = vmatprep.mubr.bf16.mxu0 0
    %1336 = vmatmul.mubr.bf16.gmra.mxu0 %v504
    %v1337 = vpop.f32.mrf.mxu0
    %v1338 = vadd.f32 0.0, %v1337
    %v1339 = vpop.f32.mrf.mxu0
    %v1340 = vadd.f32 0.0, %v1339
    %v1341 = vpop.f32.mrf.mxu0
    %v1342 = vadd.f32 0.0, %v1341
    %v1343 = vpop.f32.mrf.mxu0
    %v1344 = vadd.f32 0.0, %v1343
    %1345 = vmatprep.mubr.bf16.mxu0 0
    %1346 = vmatmul.mubr.bf16.gmra.mxu0 %v507
    %v1347 = vpop.f32.mrf.mxu0
    %v1348 = vadd.f32 0.0, %v1347
    %v1349 = vpop.f32.mrf.mxu0
    %v1350 = vadd.f32 0.0, %v1349
    %v1351 = vpop.f32.mrf.mxu0
    %v1352 = vadd.f32 0.0, %v1351
    %v1353 = vpop.f32.mrf.mxu0
    %v1354 = vadd.f32 0.0, %v1353
    %1355 = vmatprep.mubr.bf16.mxu0 0
    %1356 = vmatmul.mubr.bf16.gmra.mxu0 %v510
    %v1357 = vpop.f32.mrf.mxu0
    %v1358 = vadd.f32 0.0, %v1357
    %v1359 = vpop.f32.mrf.mxu0
    %v1360 = vadd.f32 0.0, %v1359
    %v1361 = vpop.f32.mrf.mxu0
    %v1362 = vadd.f32 0.0, %v1361
    %v1363 = vpop.f32.mrf.mxu0
    %v1364 = vadd.f32 0.0, %v1363
    %1365 = vmatprep.mubr.bf16.mxu0 0
    %1366 = vmatmul.mubr.bf16.gmra.mxu0 %v513
    %v1367 = vpop.f32.mrf.mxu0
    %v1368 = vadd.f32 0.0, %v1367
    %v1369 = vpop.f32.mrf.mxu0
    %v1370 = vadd.f32 0.0, %v1369
    %v1371 = vpop.f32.mrf.mxu0
    %v1372 = vadd.f32 0.0, %v1371
    %v1373 = vpop.f32.mrf.mxu0
    %v1374 = vadd.f32 0.0, %v1373
    %1375 = vmatprep.mubr.bf16.mxu0 0
    %1376 = vmatmul.mubr.bf16.gmra.mxu0 %v516
    %v1377 = vpop.f32.mrf.mxu0
    %v1378 = vadd.f32 0.0, %v1377
    %v1379 = vpop.f32.mrf.mxu0
    %v1380 = vadd.f32 0.0, %v1379
    %v1381 = vpop.f32.mrf.mxu0
    %v1382 = vadd.f32 0.0, %v1381
    %v1383 = vpop.f32.mrf.mxu0
    %v1384 = vadd.f32 0.0, %v1383
    %1385 = vmatprep.mubr.bf16.mxu0 0
    %1386 = vmatmul.mubr.bf16.gmra.mxu0 %v519
    %v1387 = vpop.f32.mrf.mxu0
    %v1388 = vadd.f32 0.0, %v1387
    %v1389 = vpop.f32.mrf.mxu0
    %v1390 = vadd.f32 0.0, %v1389
    %v1391 = vpop.f32.mrf.mxu0
    %v1392 = vadd.f32 0.0, %v1391
    %v1393 = vpop.f32.mrf.mxu0
    %v1394 = vadd.f32 0.0, %v1393
    %1395 = vmatprep.mubr.bf16.mxu0 0
    %1396 = vmatmul.mubr.bf16.gmra.mxu0 %v522
    %v1397 = vpop.f32.mrf.mxu0
    %v1398 = vadd.f32 0.0, %v1397
    %v1399 = vpop.f32.mrf.mxu0
    %v1400 = vadd.f32 0.0, %v1399
    %v1401 = vpop.f32.mrf.mxu0
    %v1402 = vadd.f32 0.0, %v1401
    %v1403 = vpop.f32.mrf.mxu0
    %v1404 = vadd.f32 0.0, %v1403
    %1405 = vmatprep.mubr.bf16.mxu0 0
    %1406 = vmatmul.mubr.bf16.gmra.mxu0 %v525
    %v1407 = vpop.f32.mrf.mxu0
    %v1408 = vadd.f32 0.0, %v1407
    %v1409 = vpop.f32.mrf.mxu0
    %v1410 = vadd.f32 0.0, %v1409
    %v1411 = vpop.f32.mrf.mxu0
    %v1412 = vadd.f32 0.0, %v1411
    %v1413 = vpop.f32.mrf.mxu0
    %v1414 = vadd.f32 0.0, %v1413
    %1415 = vmatprep.mubr.bf16.mxu0 0
    %1416 = vmatmul.mubr.bf16.gmra.mxu0 %v528
    %v1417 = vpop.f32.mrf.mxu0
    %v1418 = vadd.f32 0.0, %v1417
    %v1419 = vpop.f32.mrf.mxu0
    %v1420 = vadd.f32 0.0, %v1419
    %v1421 = vpop.f32.mrf.mxu0
    %v1422 = vadd.f32 0.0, %v1421
    %v1423 = vpop.f32.mrf.mxu0
    %v1424 = vadd.f32 0.0, %v1423
    %1425 = vmatprep.mubr.bf16.mxu0 0
    %1426 = vmatmul.mubr.bf16.gmra.mxu0 %v531
    %v1427 = vpop.f32.mrf.mxu0
    %v1428 = vadd.f32 0.0, %v1427
    %v1429 = vpop.f32.mrf.mxu0
    %v1430 = vadd.f32 0.0, %v1429
    %v1431 = vpop.f32.mrf.mxu0
    %v1432 = vadd.f32 0.0, %v1431
    %v1433 = vpop.f32.mrf.mxu0
    %v1434 = vadd.f32 0.0, %v1433
    %1435 = vmatprep.mubr.bf16.mxu0 0
    %1436 = vmatmul.mubr.bf16.gmra.mxu0 %v534
    %v1437 = vpop.f32.mrf.mxu0
    %v1438 = vadd.f32 0.0, %v1437
    %v1439 = vpop.f32.mrf.mxu0
    %v1440 = vadd.f32 0.0, %v1439
    %v1441 = vpop.f32.mrf.mxu0
    %v1442 = vadd.f32 0.0, %v1441
    %v1443 = vpop.f32.mrf.mxu0
    %v1444 = vadd.f32 0.0, %v1443
    %1445 = vmatprep.mubr.bf16.mxu0 0
    %1446 = vmatmul.mubr.bf16.gmra.mxu0 %v537
    %v1447 = vpop.f32.mrf.mxu0
    %v1448 = vadd.f32 0.0, %v1447
    %v1449 = vpop.f32.mrf.mxu0
    %v1450 = vadd.f32 0.0, %v1449
    %v1451 = vpop.f32.mrf.mxu0
    %v1452 = vadd.f32 0.0, %v1451
    %v1453 = vpop.f32.mrf.mxu0
    %v1454 = vadd.f32 0.0, %v1453
    %1455 = vmatprep.mubr.bf16.mxu0 0
    %1456 = vmatmul.mubr.bf16.gmra.mxu0 %v540
    %v1457 = vpop.f32.mrf.mxu0
    %v1458 = vadd.f32 0.0, %v1457
    %v1459 = vpop.f32.mrf.mxu0
    %v1460 = vadd.f32 0.0, %v1459
    %v1461 = vpop.f32.mrf.mxu0
    %v1462 = vadd.f32 0.0, %v1461
    %v1463 = vpop.f32.mrf.mxu0
    %v1464 = vadd.f32 0.0, %v1463
    %1465 = vmatprep.mubr.bf16.mxu0 0
    %1466 = vmatmul.mubr.bf16.gmra.mxu0 %v543
    %v1467 = vpop.f32.mrf.mxu0
    %v1468 = vadd.f32 0.0, %v1467
    %v1469 = vpop.f32.mrf.mxu0
    %v1470 = vadd.f32 0.0, %v1469
    %v1471 = vpop.f32.mrf.mxu0
    %v1472 = vadd.f32 0.0, %v1471
    %v1473 = vpop.f32.mrf.mxu0
    %v1474 = vadd.f32 0.0, %v1473
    %1475 = vdwg.mxu0
    %1476 = vmatprep.subr.bf16.mxu0 0
    %1477 = vmatpush1.bf16.msra.mxu0 0
    %1478 = vmatprep.subr.bf16.mxu0 0
    %1479 = vmatpush1.bf16.msra.mxu0 0
    %1480 = vmatprep.subr.bf16.mxu0 0
    %1481 = vmatpush1.bf16.msra.mxu0 0
    %1482 = vmatprep.subr.bf16.mxu0 0
    %1483 = vmatpush1.bf16.msra.mxu0 %v565
    %1484 = vmatprep.subr.bf16.mxu0 0
    %1485 = vmatpush1.bf16.msra.mxu0 %v320
    %1486 = vmatprep.subr.bf16.mxu0 0
    %1487 = vmatpush1.bf16.msra.mxu0 %v313
    %1488 = vmatprep.subr.bf16.mxu0 0
    %1489 = vmatpush1.bf16.msra.mxu0 %v306
    %1490 = vmatprep.subr.bf16.mxu0 0
    %1491 = vmatpush1.bf16.msra.mxu0 %v299
    %1492 = vmatprep.subr.bf16.mxu0 0
    %1493 = vmatpush2.bf16.msra.mxu0 0
    %1494 = vmatprep.subr.bf16.mxu0 0
    %1495 = vmatpush2.bf16.msra.mxu0 0
    %1496 = vmatprep.subr.bf16.mxu0 0
    %1497 = vmatpush2.bf16.msra.mxu0 0
    %1498 = vmatprep.subr.bf16.mxu0 0
    %1499 = vmatpush2.bf16.msra.mxu0 0
    %1500 = vmatprep.subr.bf16.mxu0 0
    %1501 = vmatpush2.bf16.msra.mxu0 0
    %1502 = vmatprep.subr.bf16.mxu0 0
    %1503 = vmatpush2.bf16.msra.mxu0 0
    %1504 = vmatprep.subr.bf16.mxu0 0
    %1505 = vmatpush2.bf16.msra.mxu0 0
    %1506 = vmatprep.subr.bf16.mxu0 0
    %1507 = vmatpush2.bf16.msra.mxu0 0
    %1508 = vmatprep.mubr.bf16.mxu0 0
    %1509 = vmatmul.mubr.bf16.gmra.mxu0 %v465
    %v1510 = vpop.f32.mrf.mxu0
    %v1511 = vadd.f32 0.0, %v1510
    %v1512 = vpop.f32.mrf.mxu0
    %v1513 = vpop.f32.mrf.mxu0
    %v1514 = vadd.f32 0.0, %v1513
    %v1515 = vpop.f32.mrf.mxu0
    %1516 = vmatprep.mubr.bf16.mxu0 0
    %1517 = vmatmul.mubr.bf16.gmra.mxu0 %v468
    %v1518 = vpop.f32.mrf.mxu0
    %v1519 = vadd.f32 0.0, %v1518
    %v1520 = vpop.f32.mrf.mxu0
    %v1521 = vpop.f32.mrf.mxu0
    %v1522 = vadd.f32 0.0, %v1521
    %v1523 = vpop.f32.mrf.mxu0
    %1524 = vmatprep.mubr.bf16.mxu0 0
    %1525 = vmatmul.mubr.bf16.gmra.mxu0 %v471
    %v1526 = vpop.f32.mrf.mxu0
    %v1527 = vadd.f32 0.0, %v1526
    %v1528 = vpop.f32.mrf.mxu0
    %v1529 = vpop.f32.mrf.mxu0
    %v1530 = vadd.f32 0.0, %v1529
    %v1531 = vpop.f32.mrf.mxu0
    %1532 = vmatprep.mubr.bf16.mxu0 0
    %1533 = vmatmul.mubr.bf16.gmra.mxu0 %v474
    %v1534 = vpop.f32.mrf.mxu0
    %v1535 = vadd.f32 0.0, %v1534
    %v1536 = vpop.f32.mrf.mxu0
    %v1537 = vpop.f32.mrf.mxu0
    %v1538 = vadd.f32 0.0, %v1537
    %v1539 = vpop.f32.mrf.mxu0
    %1540 = vmatprep.mubr.bf16.mxu0 0
    %1541 = vmatmul.mubr.bf16.gmra.mxu0 %v477
    %v1542 = vpop.f32.mrf.mxu0
    %v1543 = vadd.f32 0.0, %v1542
    %v1544 = vpop.f32.mrf.mxu0
    %v1545 = vpop.f32.mrf.mxu0
    %v1546 = vadd.f32 0.0, %v1545
    %v1547 = vpop.f32.mrf.mxu0
    %1548 = vmatprep.mubr.bf16.mxu0 0
    %1549 = vmatmul.mubr.bf16.gmra.mxu0 %v480
    %v1550 = vpop.f32.mrf.mxu0
    %v1551 = vadd.f32 0.0, %v1550
    %v1552 = vpop.f32.mrf.mxu0
    %v1553 = vpop.f32.mrf.mxu0
    %v1554 = vadd.f32 0.0, %v1553
    %v1555 = vpop.f32.mrf.mxu0
    %1556 = vmatprep.mubr.bf16.mxu0 0
    %1557 = vmatmul.mubr.bf16.gmra.mxu0 %v483
    %v1558 = vpop.f32.mrf.mxu0
    %v1559 = vadd.f32 0.0, %v1558
    %v1560 = vpop.f32.mrf.mxu0
    %v1561 = vpop.f32.mrf.mxu0
    %v1562 = vadd.f32 0.0, %v1561
    %v1563 = vpop.f32.mrf.mxu0
    %1564 = vmatprep.mubr.bf16.mxu0 0
    %1565 = vmatmul.mubr.bf16.gmra.mxu0 %v486
    %v1566 = vpop.f32.mrf.mxu0
    %v1567 = vadd.f32 0.0, %v1566
    %v1568 = vpop.f32.mrf.mxu0
    %v1569 = vpop.f32.mrf.mxu0
    %v1570 = vadd.f32 0.0, %v1569
    %v1571 = vpop.f32.mrf.mxu0
    %1572 = vmatprep.mubr.bf16.mxu0 0
    %1573 = vmatmul.mubr.bf16.gmra.mxu0 %v489
    %v1574 = vpop.f32.mrf.mxu0
    %v1575 = vadd.f32 0.0, %v1574
    %v1576 = vpop.f32.mrf.mxu0
    %v1577 = vpop.f32.mrf.mxu0
    %v1578 = vadd.f32 0.0, %v1577
    %v1579 = vpop.f32.mrf.mxu0
    %1580 = vmatprep.mubr.bf16.mxu0 0
    %1581 = vmatmul.mubr.bf16.gmra.mxu0 %v492
    %v1582 = vpop.f32.mrf.mxu0
    %v1583 = vadd.f32 0.0, %v1582
    %v1584 = vpop.f32.mrf.mxu0
    %v1585 = vpop.f32.mrf.mxu0
    %v1586 = vadd.f32 0.0, %v1585
    %v1587 = vpop.f32.mrf.mxu0
    %1588 = vmatprep.mubr.bf16.mxu0 0
    %1589 = vmatmul.mubr.bf16.gmra.mxu0 %v495
    %v1590 = vpop.f32.mrf.mxu0
    %v1591 = vadd.f32 0.0, %v1590
    %v1592 = vpop.f32.mrf.mxu0
    %v1593 = vpop.f32.mrf.mxu0
    %v1594 = vadd.f32 0.0, %v1593
    %v1595 = vpop.f32.mrf.mxu0
    %1596 = vmatprep.mubr.bf16.mxu0 0
    %1597 = vmatmul.mubr.bf16.gmra.mxu0 %v498
    %v1598 = vpop.f32.mrf.mxu0
    %v1599 = vadd.f32 0.0, %v1598
    %v1600 = vpop.f32.mrf.mxu0
    %v1601 = vpop.f32.mrf.mxu0
    %v1602 = vadd.f32 0.0, %v1601
    %v1603 = vpop.f32.mrf.mxu0
    %1604 = vmatprep.mubr.bf16.mxu0 0
    %1605 = vmatmul.mubr.bf16.gmra.mxu0 %v501
    %v1606 = vpop.f32.mrf.mxu0
    %v1607 = vadd.f32 0.0, %v1606
    %v1608 = vpop.f32.mrf.mxu0
    %v1609 = vpop.f32.mrf.mxu0
    %v1610 = vadd.f32 0.0, %v1609
    %v1611 = vpop.f32.mrf.mxu0
    %1612 = vmatprep.mubr.bf16.mxu0 0
    %1613 = vmatmul.mubr.bf16.gmra.mxu0 %v504
    %v1614 = vpop.f32.mrf.mxu0
    %v1615 = vadd.f32 0.0, %v1614
    %v1616 = vpop.f32.mrf.mxu0
    %v1617 = vpop.f32.mrf.mxu0
    %v1618 = vadd.f32 0.0, %v1617
    %v1619 = vpop.f32.mrf.mxu0
    %1620 = vmatprep.mubr.bf16.mxu0 0
    %1621 = vmatmul.mubr.bf16.gmra.mxu0 %v507
    %v1622 = vpop.f32.mrf.mxu0
    %v1623 = vadd.f32 0.0, %v1622
    %v1624 = vpop.f32.mrf.mxu0
    %v1625 = vpop.f32.mrf.mxu0
    %v1626 = vadd.f32 0.0, %v1625
    %v1627 = vpop.f32.mrf.mxu0
    %1628 = vmatprep.mubr.bf16.mxu0 0
    %1629 = vmatmul.mubr.bf16.gmra.mxu0 %v510
    %v1630 = vpop.f32.mrf.mxu0
    %v1631 = vadd.f32 0.0, %v1630
    %v1632 = vpop.f32.mrf.mxu0
    %v1633 = vpop.f32.mrf.mxu0
    %v1634 = vadd.f32 0.0, %v1633
    %v1635 = vpop.f32.mrf.mxu0
    %1636 = vmatprep.mubr.bf16.mxu0 0
    %1637 = vmatmul.mubr.bf16.gmra.mxu0 %v513
    %v1638 = vpop.f32.mrf.mxu0
    %v1639 = vadd.f32 0.0, %v1638
    %v1640 = vpop.f32.mrf.mxu0
    %v1641 = vpop.f32.mrf.mxu0
    %v1642 = vadd.f32 0.0, %v1641
    %v1643 = vpop.f32.mrf.mxu0
    %1644 = vmatprep.mubr.bf16.mxu0 0
    %1645 = vmatmul.mubr.bf16.gmra.mxu0 %v516
    %v1646 = vpop.f32.mrf.mxu0
    %v1647 = vadd.f32 0.0, %v1646
    %v1648 = vpop.f32.mrf.mxu0
    %v1649 = vpop.f32.mrf.mxu0
    %v1650 = vadd.f32 0.0, %v1649
    %v1651 = vpop.f32.mrf.mxu0
    %1652 = vmatprep.mubr.bf16.mxu0 0
    %1653 = vmatmul.mubr.bf16.gmra.mxu0 %v519
    %v1654 = vpop.f32.mrf.mxu0
    %v1655 = vadd.f32 0.0, %v1654
    %v1656 = vpop.f32.mrf.mxu0
    %v1657 = vpop.f32.mrf.mxu0
    %v1658 = vadd.f32 0.0, %v1657
    %v1659 = vpop.f32.mrf.mxu0
    %1660 = vmatprep.mubr.bf16.mxu0 0
    %1661 = vmatmul.mubr.bf16.gmra.mxu0 %v522
    %v1662 = vpop.f32.mrf.mxu0
    %v1663 = vadd.f32 0.0, %v1662
    %v1664 = vpop.f32.mrf.mxu0
    %v1665 = vpop.f32.mrf.mxu0
    %v1666 = vadd.f32 0.0, %v1665
    %v1667 = vpop.f32.mrf.mxu0
    %1668 = vmatprep.mubr.bf16.mxu0 0
    %1669 = vmatmul.mubr.bf16.gmra.mxu0 %v525
    %v1670 = vpop.f32.mrf.mxu0
    %v1671 = vadd.f32 0.0, %v1670
    %v1672 = vpop.f32.mrf.mxu0
    %v1673 = vpop.f32.mrf.mxu0
    %v1674 = vadd.f32 0.0, %v1673
    %v1675 = vpop.f32.mrf.mxu0
    %1676 = vmatprep.mubr.bf16.mxu0 0
    %1677 = vmatmul.mubr.bf16.gmra.mxu0 %v528
    %v1678 = vpop.f32.mrf.mxu0
    %v1679 = vadd.f32 0.0, %v1678
    %v1680 = vpop.f32.mrf.mxu0
    %v1681 = vpop.f32.mrf.mxu0
    %v1682 = vadd.f32 0.0, %v1681
    %v1683 = vpop.f32.mrf.mxu0
    %1684 = vmatprep.mubr.bf16.mxu0 0
    %1685 = vmatmul.mubr.bf16.gmra.mxu0 %v531
    %v1686 = vpop.f32.mrf.mxu0
    %v1687 = vadd.f32 0.0, %v1686
    %v1688 = vpop.f32.mrf.mxu0
    %v1689 = vpop.f32.mrf.mxu0
    %v1690 = vadd.f32 0.0, %v1689
    %v1691 = vpop.f32.mrf.mxu0
    %1692 = vmatprep.mubr.bf16.mxu0 0
    %1693 = vmatmul.mubr.bf16.gmra.mxu0 %v534
    %v1694 = vpop.f32.mrf.mxu0
    %v1695 = vadd.f32 0.0, %v1694
    %v1696 = vpop.f32.mrf.mxu0
    %v1697 = vpop.f32.mrf.mxu0
    %v1698 = vadd.f32 0.0, %v1697
    %v1699 = vpop.f32.mrf.mxu0
    %1700 = vmatprep.mubr.bf16.mxu0 0
    %1701 = vmatmul.mubr.bf16.gmra.mxu0 %v537
    %v1702 = vpop.f32.mrf.mxu0
    %v1703 = vadd.f32 0.0, %v1702
    %v1704 = vpop.f32.mrf.mxu0
    %v1705 = vpop.f32.mrf.mxu0
    %v1706 = vadd.f32 0.0, %v1705
    %v1707 = vpop.f32.mrf.mxu0
    %1708 = vmatprep.mubr.bf16.mxu0 0
    %1709 = vmatmul.mubr.bf16.gmra.mxu0 %v540
    %v1710 = vpop.f32.mrf.mxu0
    %v1711 = vadd.f32 0.0, %v1710
    %v1712 = vpop.f32.mrf.mxu0
    %v1713 = vpop.f32.mrf.mxu0
    %v1714 = vadd.f32 0.0, %v1713
    %v1715 = vpop.f32.mrf.mxu0
    %1716 = vmatprep.mubr.bf16.mxu0 0
    %1717 = vmatmul.mubr.bf16.gmra.mxu0 %v543
    %v1718 = vpop.f32.mrf.mxu0
    %v1719 = vadd.f32 0.0, %v1718
    %v1720 = vpop.f32.mrf.mxu0
    %v1721 = vpop.f32.mrf.mxu0
    %v1722 = vadd.f32 0.0, %v1721
    %v1723 = vpop.f32.mrf.mxu0
    %1724 = vdwg.mxu0
    %v1725 = vadd.f32 %v602, %v604
    %v1726 = vadd.f32 %v1725, %v905
    %v1727 = vadd.f32 %v1726, %v907
    %v1728 = vadd.f32 %v1727, %v1208
    %v1729 = vadd.f32 %v1728, %v1210
    %vm1730 = vcmask 130048
    %v1731 = vsel %vm1730, %v1511, 0.0
    %v1732 = vadd.f32 %v1729, %v1731
    %1733 = vadd.xlane.f32.xlu0 %v1732
    %v1734 = vpop.xlane.xlu0 %1733
    %v1735 = vadd.f32 %v606, %v608
    %v1736 = vadd.f32 %v1735, %v909
    %v1737 = vadd.f32 %v1736, %v911
    %v1738 = vadd.f32 %v1737, %v1212
    %v1739 = vadd.f32 %v1738, %v1214
    %v1740 = vsel %vm1730, %v1514, 0.0
    %v1741 = vadd.f32 %v1739, %v1740
    %1742 = vadd.xlane.f32.xlu0 %v1741
    %v1743 = vpop.xlane.xlu0 %1742
    %v1744 = vadd.f32 %v612, %v614
    %v1745 = vadd.f32 %v1744, %v915
    %v1746 = vadd.f32 %v1745, %v917
    %v1747 = vadd.f32 %v1746, %v1218
    %v1748 = vadd.f32 %v1747, %v1220
    %v1749 = vsel %vm1730, %v1519, 0.0
    %v1750 = vadd.f32 %v1748, %v1749
    %1751 = vadd.xlane.f32.xlu0 %v1750
    %v1752 = vpop.xlane.xlu0 %1751
    %v1753 = vadd.f32 %v616, %v618
    %v1754 = vadd.f32 %v1753, %v919
    %v1755 = vadd.f32 %v1754, %v921
    %v1756 = vadd.f32 %v1755, %v1222
    %v1757 = vadd.f32 %v1756, %v1224
    %v1758 = vsel %vm1730, %v1522, 0.0
    %v1759 = vadd.f32 %v1757, %v1758
    %1760 = vadd.xlane.f32.xlu0 %v1759
    %v1761 = vpop.xlane.xlu0 %1760
    %v1762 = vadd.f32 %v622, %v624
    %v1763 = vadd.f32 %v1762, %v925
    %v1764 = vadd.f32 %v1763, %v927
    %v1765 = vadd.f32 %v1764, %v1228
    %v1766 = vadd.f32 %v1765, %v1230
    %v1767 = vsel %vm1730, %v1527, 0.0
    %v1768 = vadd.f32 %v1766, %v1767
    %1769 = vadd.xlane.f32.xlu0 %v1768
    %v1770 = vpop.xlane.xlu0 %1769
    %v1771 = vadd.f32 %v626, %v628
    %v1772 = vadd.f32 %v1771, %v929
    %v1773 = vadd.f32 %v1772, %v931
    %v1774 = vadd.f32 %v1773, %v1232
    %v1775 = vadd.f32 %v1774, %v1234
    %v1776 = vsel %vm1730, %v1530, 0.0
    %v1777 = vadd.f32 %v1775, %v1776
    %1778 = vadd.xlane.f32.xlu0 %v1777
    %v1779 = vpop.xlane.xlu0 %1778
    %v1780 = vadd.f32 %v632, %v634
    %v1781 = vadd.f32 %v1780, %v935
    %v1782 = vadd.f32 %v1781, %v937
    %v1783 = vadd.f32 %v1782, %v1238
    %v1784 = vadd.f32 %v1783, %v1240
    %v1785 = vsel %vm1730, %v1535, 0.0
    %v1786 = vadd.f32 %v1784, %v1785
    %1787 = vadd.xlane.f32.xlu0 %v1786
    %v1788 = vpop.xlane.xlu0 %1787
    %v1789 = vadd.f32 %v636, %v638
    %v1790 = vadd.f32 %v1789, %v939
    %v1791 = vadd.f32 %v1790, %v941
    %v1792 = vadd.f32 %v1791, %v1242
    %v1793 = vadd.f32 %v1792, %v1244
    %v1794 = vsel %vm1730, %v1538, 0.0
    %v1795 = vadd.f32 %v1793, %v1794
    %1796 = vadd.xlane.f32.xlu0 %v1795
    %v1797 = vpop.xlane.xlu0 %1796
    %v1798 = vadd.f32 %v642, %v644
    %v1799 = vadd.f32 %v1798, %v945
    %v1800 = vadd.f32 %v1799, %v947
    %v1801 = vadd.f32 %v1800, %v1248
    %v1802 = vadd.f32 %v1801, %v1250
    %v1803 = vsel %vm1730, %v1543, 0.0
    %v1804 = vadd.f32 %v1802, %v1803
    %1805 = vadd.xlane.f32.xlu0 %v1804
    %v1806 = vpop.xlane.xlu0 %1805
    %v1807 = vadd.f32 %v646, %v648
    %v1808 = vadd.f32 %v1807, %v949
    %v1809 = vadd.f32 %v1808, %v951
    %v1810 = vadd.f32 %v1809, %v1252
    %v1811 = vadd.f32 %v1810, %v1254
    %v1812 = vsel %vm1730, %v1546, 0.0
    %v1813 = vadd.f32 %v1811, %v1812
    %1814 = vadd.xlane.f32.xlu0 %v1813
    %v1815 = vpop.xlane.xlu0 %1814
    %v1816 = vadd.f32 %v652, %v654
    %v1817 = vadd.f32 %v1816, %v955
    %v1818 = vadd.f32 %v1817, %v957
    %v1819 = vadd.f32 %v1818, %v1258
    %v1820 = vadd.f32 %v1819, %v1260
    %v1821 = vsel %vm1730, %v1551, 0.0
    %v1822 = vadd.f32 %v1820, %v1821
    %1823 = vadd.xlane.f32.xlu0 %v1822
    %v1824 = vpop.xlane.xlu0 %1823
    %v1825 = vadd.f32 %v656, %v658
    %v1826 = vadd.f32 %v1825, %v959
    %v1827 = vadd.f32 %v1826, %v961
    %v1828 = vadd.f32 %v1827, %v1262
    %v1829 = vadd.f32 %v1828, %v1264
    %v1830 = vsel %vm1730, %v1554, 0.0
    %v1831 = vadd.f32 %v1829, %v1830
    %1832 = vadd.xlane.f32.xlu0 %v1831
    %v1833 = vpop.xlane.xlu0 %1832
    %v1834 = vadd.f32 %v662, %v664
    %v1835 = vadd.f32 %v1834, %v965
    %v1836 = vadd.f32 %v1835, %v967
    %v1837 = vadd.f32 %v1836, %v1268
    %v1838 = vadd.f32 %v1837, %v1270
    %v1839 = vsel %vm1730, %v1559, 0.0
    %v1840 = vadd.f32 %v1838, %v1839
    %1841 = vadd.xlane.f32.xlu0 %v1840
    %v1842 = vpop.xlane.xlu0 %1841
    %v1843 = vadd.f32 %v666, %v668
    %v1844 = vadd.f32 %v1843, %v969
    %v1845 = vadd.f32 %v1844, %v971
    %v1846 = vadd.f32 %v1845, %v1272
    %v1847 = vadd.f32 %v1846, %v1274
    %v1848 = vsel %vm1730, %v1562, 0.0
    %v1849 = vadd.f32 %v1847, %v1848
    %1850 = vadd.xlane.f32.xlu0 %v1849
    %v1851 = vpop.xlane.xlu0 %1850
    %v1852 = vadd.f32 %v672, %v674
    %v1853 = vadd.f32 %v1852, %v975
    %v1854 = vadd.f32 %v1853, %v977
    %v1855 = vadd.f32 %v1854, %v1278
    %v1856 = vadd.f32 %v1855, %v1280
    %v1857 = vsel %vm1730, %v1567, 0.0
    %v1858 = vadd.f32 %v1856, %v1857
    %1859 = vadd.xlane.f32.xlu0 %v1858
    %v1860 = vpop.xlane.xlu0 %1859
    %v1861 = vadd.f32 %v676, %v678
    %v1862 = vadd.f32 %v1861, %v979
    %v1863 = vadd.f32 %v1862, %v981
    %v1864 = vadd.f32 %v1863, %v1282
    %v1865 = vadd.f32 %v1864, %v1284
    %v1866 = vsel %vm1730, %v1570, 0.0
    %v1867 = vadd.f32 %v1865, %v1866
    %1868 = vadd.xlane.f32.xlu0 %v1867
    %v1869 = vpop.xlane.xlu0 %1868
    %v1870 = vadd.f32 %v682, %v684
    %v1871 = vadd.f32 %v1870, %v985
    %v1872 = vadd.f32 %v1871, %v987
    %v1873 = vadd.f32 %v1872, %v1288
    %v1874 = vadd.f32 %v1873, %v1290
    %v1875 = vsel %vm1730, %v1575, 0.0
    %v1876 = vadd.f32 %v1874, %v1875
    %1877 = vadd.xlane.f32.xlu0 %v1876
    %v1878 = vpop.xlane.xlu0 %1877
    %v1879 = vadd.f32 %v686, %v688
    %v1880 = vadd.f32 %v1879, %v989
    %v1881 = vadd.f32 %v1880, %v991
    %v1882 = vadd.f32 %v1881, %v1292
    %v1883 = vadd.f32 %v1882, %v1294
    %v1884 = vsel %vm1730, %v1578, 0.0
    %v1885 = vadd.f32 %v1883, %v1884
    %1886 = vadd.xlane.f32.xlu0 %v1885
    %v1887 = vpop.xlane.xlu0 %1886
    %v1888 = vadd.f32 %v692, %v694
    %v1889 = vadd.f32 %v1888, %v995
    %v1890 = vadd.f32 %v1889, %v997
    %v1891 = vadd.f32 %v1890, %v1298
    %v1892 = vadd.f32 %v1891, %v1300
    %v1893 = vsel %vm1730, %v1583, 0.0
    %v1894 = vadd.f32 %v1892, %v1893
    %1895 = vadd.xlane.f32.xlu0 %v1894
    %v1896 = vpop.xlane.xlu0 %1895
    %v1897 = vadd.f32 %v696, %v698
    %v1898 = vadd.f32 %v1897, %v999
    %v1899 = vadd.f32 %v1898, %v1001
    %v1900 = vadd.f32 %v1899, %v1302
    %v1901 = vadd.f32 %v1900, %v1304
    %v1902 = vsel %vm1730, %v1586, 0.0
    %v1903 = vadd.f32 %v1901, %v1902
    %1904 = vadd.xlane.f32.xlu0 %v1903
    %v1905 = vpop.xlane.xlu0 %1904
    %v1906 = vadd.f32 %v702, %v704
    %v1907 = vadd.f32 %v1906, %v1005
    %v1908 = vadd.f32 %v1907, %v1007
    %v1909 = vadd.f32 %v1908, %v1308
    %v1910 = vadd.f32 %v1909, %v1310
    %v1911 = vsel %vm1730, %v1591, 0.0
    %v1912 = vadd.f32 %v1910, %v1911
    %1913 = vadd.xlane.f32.xlu0 %v1912
    %v1914 = vpop.xlane.xlu0 %1913
    %v1915 = vadd.f32 %v706, %v708
    %v1916 = vadd.f32 %v1915, %v1009
    %v1917 = vadd.f32 %v1916, %v1011
    %v1918 = vadd.f32 %v1917, %v1312
    %v1919 = vadd.f32 %v1918, %v1314
    %v1920 = vsel %vm1730, %v1594, 0.0
    %v1921 = vadd.f32 %v1919, %v1920
    %1922 = vadd.xlane.f32.xlu0 %v1921
    %v1923 = vpop.xlane.xlu0 %1922
    %v1924 = vadd.f32 %v712, %v714
    %v1925 = vadd.f32 %v1924, %v1015
    %v1926 = vadd.f32 %v1925, %v1017
    %v1927 = vadd.f32 %v1926, %v1318
    %v1928 = vadd.f32 %v1927, %v1320
    %v1929 = vsel %vm1730, %v1599, 0.0
    %v1930 = vadd.f32 %v1928, %v1929
    %1931 = vadd.xlane.f32.xlu0 %v1930
    %v1932 = vpop.xlane.xlu0 %1931
    %v1933 = vadd.f32 %v716, %v718
    %v1934 = vadd.f32 %v1933, %v1019
    %v1935 = vadd.f32 %v1934, %v1021
    %v1936 = vadd.f32 %v1935, %v1322
    %v1937 = vadd.f32 %v1936, %v1324
    %v1938 = vsel %vm1730, %v1602, 0.0
    %v1939 = vadd.f32 %v1937, %v1938
    %1940 = vadd.xlane.f32.xlu0 %v1939
    %v1941 = vpop.xlane.xlu0 %1940
    %v1942 = vadd.f32 %v722, %v724
    %v1943 = vadd.f32 %v1942, %v1025
    %v1944 = vadd.f32 %v1943, %v1027
    %v1945 = vadd.f32 %v1944, %v1328
    %v1946 = vadd.f32 %v1945, %v1330
    %v1947 = vsel %vm1730, %v1607, 0.0
    %v1948 = vadd.f32 %v1946, %v1947
    %1949 = vadd.xlane.f32.xlu0 %v1948
    %v1950 = vpop.xlane.xlu0 %1949
    %v1951 = vadd.f32 %v726, %v728
    %v1952 = vadd.f32 %v1951, %v1029
    %v1953 = vadd.f32 %v1952, %v1031
    %v1954 = vadd.f32 %v1953, %v1332
    %v1955 = vadd.f32 %v1954, %v1334
    %v1956 = vsel %vm1730, %v1610, 0.0
    %v1957 = vadd.f32 %v1955, %v1956
    %1958 = vadd.xlane.f32.xlu0 %v1957
    %v1959 = vpop.xlane.xlu0 %1958
    %v1960 = vadd.f32 %v732, %v734
    %v1961 = vadd.f32 %v1960, %v1035
    %v1962 = vadd.f32 %v1961, %v1037
    %v1963 = vadd.f32 %v1962, %v1338
    %v1964 = vadd.f32 %v1963, %v1340
    %v1965 = vsel %vm1730, %v1615, 0.0
    %v1966 = vadd.f32 %v1964, %v1965
    %1967 = vadd.xlane.f32.xlu0 %v1966
    %v1968 = vpop.xlane.xlu0 %1967
    %v1969 = vadd.f32 %v736, %v738
    %v1970 = vadd.f32 %v1969, %v1039
    %v1971 = vadd.f32 %v1970, %v1041
    %v1972 = vadd.f32 %v1971, %v1342
    %v1973 = vadd.f32 %v1972, %v1344
    %v1974 = vsel %vm1730, %v1618, 0.0
    %v1975 = vadd.f32 %v1973, %v1974
    %1976 = vadd.xlane.f32.xlu0 %v1975
    %v1977 = vpop.xlane.xlu0 %1976
    %v1978 = vadd.f32 %v742, %v744
    %v1979 = vadd.f32 %v1978, %v1045
    %v1980 = vadd.f32 %v1979, %v1047
    %v1981 = vadd.f32 %v1980, %v1348
    %v1982 = vadd.f32 %v1981, %v1350
    %v1983 = vsel %vm1730, %v1623, 0.0
    %v1984 = vadd.f32 %v1982, %v1983
    %1985 = vadd.xlane.f32.xlu0 %v1984
    %v1986 = vpop.xlane.xlu0 %1985
    %v1987 = vadd.f32 %v746, %v748
    %v1988 = vadd.f32 %v1987, %v1049
    %v1989 = vadd.f32 %v1988, %v1051
    %v1990 = vadd.f32 %v1989, %v1352
    %v1991 = vadd.f32 %v1990, %v1354
    %v1992 = vsel %vm1730, %v1626, 0.0
    %v1993 = vadd.f32 %v1991, %v1992
    %1994 = vadd.xlane.f32.xlu0 %v1993
    %v1995 = vpop.xlane.xlu0 %1994
    %v1996 = vadd.f32 %v752, %v754
    %v1997 = vadd.f32 %v1996, %v1055
    %v1998 = vadd.f32 %v1997, %v1057
    %v1999 = vadd.f32 %v1998, %v1358
    %v2000 = vadd.f32 %v1999, %v1360
    %v2001 = vsel %vm1730, %v1631, 0.0
    %v2002 = vadd.f32 %v2000, %v2001
    %2003 = vadd.xlane.f32.xlu0 %v2002
    %v2004 = vpop.xlane.xlu0 %2003
    %v2005 = vadd.f32 %v756, %v758
    %v2006 = vadd.f32 %v2005, %v1059
    %v2007 = vadd.f32 %v2006, %v1061
    %v2008 = vadd.f32 %v2007, %v1362
    %v2009 = vadd.f32 %v2008, %v1364
    %v2010 = vsel %vm1730, %v1634, 0.0
    %v2011 = vadd.f32 %v2009, %v2010
    %2012 = vadd.xlane.f32.xlu0 %v2011
    %v2013 = vpop.xlane.xlu0 %2012
    %v2014 = vadd.f32 %v762, %v764
    %v2015 = vadd.f32 %v2014, %v1065
    %v2016 = vadd.f32 %v2015, %v1067
    %v2017 = vadd.f32 %v2016, %v1368
    %v2018 = vadd.f32 %v2017, %v1370
    %v2019 = vsel %vm1730, %v1639, 0.0
    %v2020 = vadd.f32 %v2018, %v2019
    %2021 = vadd.xlane.f32.xlu0 %v2020
    %v2022 = vpop.xlane.xlu0 %2021
    %v2023 = vadd.f32 %v766, %v768
    %v2024 = vadd.f32 %v2023, %v1069
    %v2025 = vadd.f32 %v2024, %v1071
    %v2026 = vadd.f32 %v2025, %v1372
    %v2027 = vadd.f32 %v2026, %v1374
    %v2028 = vsel %vm1730, %v1642, 0.0
    %v2029 = vadd.f32 %v2027, %v2028
    %2030 = vadd.xlane.f32.xlu0 %v2029
    %v2031 = vpop.xlane.xlu0 %2030
    %v2032 = vadd.f32 %v772, %v774
    %v2033 = vadd.f32 %v2032, %v1075
    %v2034 = vadd.f32 %v2033, %v1077
    %v2035 = vadd.f32 %v2034, %v1378
    %v2036 = vadd.f32 %v2035, %v1380
    %v2037 = vsel %vm1730, %v1647, 0.0
    %v2038 = vadd.f32 %v2036, %v2037
    %2039 = vadd.xlane.f32.xlu0 %v2038
    %v2040 = vpop.xlane.xlu0 %2039
    %v2041 = vadd.f32 %v776, %v778
    %v2042 = vadd.f32 %v2041, %v1079
    %v2043 = vadd.f32 %v2042, %v1081
    %v2044 = vadd.f32 %v2043, %v1382
    %v2045 = vadd.f32 %v2044, %v1384
    %v2046 = vsel %vm1730, %v1650, 0.0
    %v2047 = vadd.f32 %v2045, %v2046
    %2048 = vadd.xlane.f32.xlu0 %v2047
    %v2049 = vpop.xlane.xlu0 %2048
    %v2050 = vadd.f32 %v782, %v784
    %v2051 = vadd.f32 %v2050, %v1085
    %v2052 = vadd.f32 %v2051, %v1087
    %v2053 = vadd.f32 %v2052, %v1388
    %v2054 = vadd.f32 %v2053, %v1390
    %v2055 = vsel %vm1730, %v1655, 0.0
    %v2056 = vadd.f32 %v2054, %v2055
    %2057 = vadd.xlane.f32.xlu0 %v2056
    %v2058 = vpop.xlane.xlu0 %2057
    %v2059 = vadd.f32 %v786, %v788
    %v2060 = vadd.f32 %v2059, %v1089
    %v2061 = vadd.f32 %v2060, %v1091
    %v2062 = vadd.f32 %v2061, %v1392
    %v2063 = vadd.f32 %v2062, %v1394
    %v2064 = vsel %vm1730, %v1658, 0.0
    %v2065 = vadd.f32 %v2063, %v2064
    %2066 = vadd.xlane.f32.xlu0 %v2065
    %v2067 = vpop.xlane.xlu0 %2066
    %v2068 = vadd.f32 %v792, %v794
    %v2069 = vadd.f32 %v2068, %v1095
    %v2070 = vadd.f32 %v2069, %v1097
    %v2071 = vadd.f32 %v2070, %v1398
    %v2072 = vadd.f32 %v2071, %v1400
    %v2073 = vsel %vm1730, %v1663, 0.0
    %v2074 = vadd.f32 %v2072, %v2073
    %2075 = vadd.xlane.f32.xlu0 %v2074
    %v2076 = vpop.xlane.xlu0 %2075
    %v2077 = vadd.f32 %v796, %v798
    %v2078 = vadd.f32 %v2077, %v1099
    %v2079 = vadd.f32 %v2078, %v1101
    %v2080 = vadd.f32 %v2079, %v1402
    %v2081 = vadd.f32 %v2080, %v1404
    %v2082 = vsel %vm1730, %v1666, 0.0
    %v2083 = vadd.f32 %v2081, %v2082
    %2084 = vadd.xlane.f32.xlu0 %v2083
    %v2085 = vpop.xlane.xlu0 %2084
    %v2086 = vadd.f32 %v802, %v804
    %v2087 = vadd.f32 %v2086, %v1105
    %v2088 = vadd.f32 %v2087, %v1107
    %v2089 = vadd.f32 %v2088, %v1408
    %v2090 = vadd.f32 %v2089, %v1410
    %v2091 = vsel %vm1730, %v1671, 0.0
    %v2092 = vadd.f32 %v2090, %v2091
    %2093 = vadd.xlane.f32.xlu0 %v2092
    %v2094 = vpop.xlane.xlu0 %2093
    %v2095 = vadd.f32 %v806, %v808
    %v2096 = vadd.f32 %v2095, %v1109
    %v2097 = vadd.f32 %v2096, %v1111
    %v2098 = vadd.f32 %v2097, %v1412
    %v2099 = vadd.f32 %v2098, %v1414
    %v2100 = vsel %vm1730, %v1674, 0.0
    %v2101 = vadd.f32 %v2099, %v2100
    %2102 = vadd.xlane.f32.xlu0 %v2101
    %v2103 = vpop.xlane.xlu0 %2102
    %v2104 = vadd.f32 %v812, %v814
    %v2105 = vadd.f32 %v2104, %v1115
    %v2106 = vadd.f32 %v2105, %v1117
    %v2107 = vadd.f32 %v2106, %v1418
    %v2108 = vadd.f32 %v2107, %v1420
    %v2109 = vsel %vm1730, %v1679, 0.0
    %v2110 = vadd.f32 %v2108, %v2109
    %2111 = vadd.xlane.f32.xlu0 %v2110
    %v2112 = vpop.xlane.xlu0 %2111
    %v2113 = vadd.f32 %v816, %v818
    %v2114 = vadd.f32 %v2113, %v1119
    %v2115 = vadd.f32 %v2114, %v1121
    %v2116 = vadd.f32 %v2115, %v1422
    %v2117 = vadd.f32 %v2116, %v1424
    %v2118 = vsel %vm1730, %v1682, 0.0
    %v2119 = vadd.f32 %v2117, %v2118
    %2120 = vadd.xlane.f32.xlu0 %v2119
    %v2121 = vpop.xlane.xlu0 %2120
    %v2122 = vadd.f32 %v822, %v824
    %v2123 = vadd.f32 %v2122, %v1125
    %v2124 = vadd.f32 %v2123, %v1127
    %v2125 = vadd.f32 %v2124, %v1428
    %v2126 = vadd.f32 %v2125, %v1430
    %v2127 = vsel %vm1730, %v1687, 0.0
    %v2128 = vadd.f32 %v2126, %v2127
    %2129 = vadd.xlane.f32.xlu0 %v2128
    %v2130 = vpop.xlane.xlu0 %2129
    %v2131 = vadd.f32 %v826, %v828
    %v2132 = vadd.f32 %v2131, %v1129
    %v2133 = vadd.f32 %v2132, %v1131
    %v2134 = vadd.f32 %v2133, %v1432
    %v2135 = vadd.f32 %v2134, %v1434
    %v2136 = vsel %vm1730, %v1690, 0.0
    %v2137 = vadd.f32 %v2135, %v2136
    %2138 = vadd.xlane.f32.xlu0 %v2137
    %v2139 = vpop.xlane.xlu0 %2138
    %v2140 = vadd.f32 %v832, %v834
    %v2141 = vadd.f32 %v2140, %v1135
    %v2142 = vadd.f32 %v2141, %v1137
    %v2143 = vadd.f32 %v2142, %v1438
    %v2144 = vadd.f32 %v2143, %v1440
    %v2145 = vsel %vm1730, %v1695, 0.0
    %v2146 = vadd.f32 %v2144, %v2145
    %2147 = vadd.xlane.f32.xlu0 %v2146
    %v2148 = vpop.xlane.xlu0 %2147
    %v2149 = vadd.f32 %v836, %v838
    %v2150 = vadd.f32 %v2149, %v1139
    %v2151 = vadd.f32 %v2150, %v1141
    %v2152 = vadd.f32 %v2151, %v1442
    %v2153 = vadd.f32 %v2152, %v1444
    %v2154 = vsel %vm1730, %v1698, 0.0
    %v2155 = vadd.f32 %v2153, %v2154
    %2156 = vadd.xlane.f32.xlu0 %v2155
    %v2157 = vpop.xlane.xlu0 %2156
    %v2158 = vadd.f32 %v842, %v844
    %v2159 = vadd.f32 %v2158, %v1145
    %v2160 = vadd.f32 %v2159, %v1147
    %v2161 = vadd.f32 %v2160, %v1448
    %v2162 = vadd.f32 %v2161, %v1450
    %v2163 = vsel %vm1730, %v1703, 0.0
    %v2164 = vadd.f32 %v2162, %v2163
    %2165 = vadd.xlane.f32.xlu0 %v2164
    %v2166 = vpop.xlane.xlu0 %2165
    %v2167 = vadd.f32 %v846, %v848
    %v2168 = vadd.f32 %v2167, %v1149
    %v2169 = vadd.f32 %v2168, %v1151
    %v2170 = vadd.f32 %v2169, %v1452
    %v2171 = vadd.f32 %v2170, %v1454
    %v2172 = vsel %vm1730, %v1706, 0.0
    %v2173 = vadd.f32 %v2171, %v2172
    %2174 = vadd.xlane.f32.xlu0 %v2173
    %v2175 = vpop.xlane.xlu0 %2174
    %v2176 = vadd.f32 %v852, %v854
    %v2177 = vadd.f32 %v2176, %v1155
    %v2178 = vadd.f32 %v2177, %v1157
    %v2179 = vadd.f32 %v2178, %v1458
    %v2180 = vadd.f32 %v2179, %v1460
    %v2181 = vsel %vm1730, %v1711, 0.0
    %v2182 = vadd.f32 %v2180, %v2181
    %2183 = vadd.xlane.f32.xlu0 %v2182
    %v2184 = vpop.xlane.xlu0 %2183
    %v2185 = vadd.f32 %v856, %v858
    %v2186 = vadd.f32 %v2185, %v1159
    %v2187 = vadd.f32 %v2186, %v1161
    %v2188 = vadd.f32 %v2187, %v1462
    %v2189 = vadd.f32 %v2188, %v1464
    %v2190 = vsel %vm1730, %v1714, 0.0
    %v2191 = vadd.f32 %v2189, %v2190
    %2192 = vadd.xlane.f32.xlu0 %v2191
    %v2193 = vpop.xlane.xlu0 %2192
    %v2194 = vadd.f32 %v862, %v864
    %v2195 = vadd.f32 %v2194, %v1165
    %v2196 = vadd.f32 %v2195, %v1167
    %v2197 = vadd.f32 %v2196, %v1468
    %v2198 = vadd.f32 %v2197, %v1470
    %v2199 = vsel %vm1730, %v1719, 0.0
    %v2200 = vadd.f32 %v2198, %v2199
    %2201 = vadd.xlane.f32.xlu0 %v2200
    %v2202 = vpop.xlane.xlu0 %2201
    %v2203 = vadd.f32 %v866, %v868
    %v2204 = vadd.f32 %v2203, %v1169
    %v2205 = vadd.f32 %v2204, %v1171
    %v2206 = vadd.f32 %v2205, %v1472
    %v2207 = vadd.f32 %v2206, %v1474
    %v2208 = vsel %vm1730, %v1722, 0.0
    %v2209 = vadd.f32 %v2207, %v2208
    %2210 = vadd.xlane.f32.xlu0 %v2209
    %v2211 = vpop.xlane.xlu0 %2210
    %v2212 = vmul.f32 %v1734, 0.0012755102
    %v2213 = vmul.f32 %v1743, 0.0012755102
    %v2214 = vmul.f32 %v1752, 0.0012755102
    %v2215 = vmul.f32 %v1761, 0.0012755102
    %v2216 = vmul.f32 %v1770, 0.0012755102
    %v2217 = vmul.f32 %v1779, 0.0012755102
    %v2218 = vmul.f32 %v1788, 0.0012755102
    %v2219 = vmul.f32 %v1797, 0.0012755102
    %v2220 = vmul.f32 %v1806, 0.0012755102
    %v2221 = vmul.f32 %v1815, 0.0012755102
    %v2222 = vmul.f32 %v1824, 0.0012755102
    %v2223 = vmul.f32 %v1833, 0.0012755102
    %v2224 = vmul.f32 %v1842, 0.0012755102
    %v2225 = vmul.f32 %v1851, 0.0012755102
    %v2226 = vmul.f32 %v1860, 0.0012755102
    %v2227 = vmul.f32 %v1869, 0.0012755102
    %v2228 = vmul.f32 %v1878, 0.0012755102
    %v2229 = vmul.f32 %v1887, 0.0012755102
    %v2230 = vmul.f32 %v1896, 0.0012755102
    %v2231 = vmul.f32 %v1905, 0.0012755102
    %v2232 = vmul.f32 %v1914, 0.0012755102
    %v2233 = vmul.f32 %v1923, 0.0012755102
    %v2234 = vmul.f32 %v1932, 0.0012755102
    %v2235 = vmul.f32 %v1941, 0.0012755102
    %v2236 = vmul.f32 %v1950, 0.0012755102
    %v2237 = vmul.f32 %v1959, 0.0012755102
    %v2238 = vmul.f32 %v1968, 0.0012755102
    %v2239 = vmul.f32 %v1977, 0.0012755102
    %v2240 = vmul.f32 %v1986, 0.0012755102
    %v2241 = vmul.f32 %v1995, 0.0012755102
    %v2242 = vmul.f32 %v2004, 0.0012755102
    %v2243 = vmul.f32 %v2013, 0.0012755102
    %v2244 = vmul.f32 %v2022, 0.0012755102
    %v2245 = vmul.f32 %v2031, 0.0012755102
    %v2246 = vmul.f32 %v2040, 0.0012755102
    %v2247 = vmul.f32 %v2049, 0.0012755102
    %v2248 = vmul.f32 %v2058, 0.0012755102
    %v2249 = vmul.f32 %v2067, 0.0012755102
    %v2250 = vmul.f32 %v2076, 0.0012755102
    %v2251 = vmul.f32 %v2085, 0.0012755102
    %v2252 = vmul.f32 %v2094, 0.0012755102
    %v2253 = vmul.f32 %v2103, 0.0012755102
    %v2254 = vmul.f32 %v2112, 0.0012755102
    %v2255 = vmul.f32 %v2121, 0.0012755102
    %v2256 = vmul.f32 %v2130, 0.0012755102
    %v2257 = vmul.f32 %v2139, 0.0012755102
    %v2258 = vmul.f32 %v2148, 0.0012755102
    %v2259 = vmul.f32 %v2157, 0.0012755102
    %v2260 = vmul.f32 %v2166, 0.0012755102
    %v2261 = vmul.f32 %v2175, 0.0012755102
    %v2262 = vmul.f32 %v2184, 0.0012755102
    %v2263 = vmul.f32 %v2193, 0.0012755102
    %v2264 = vmul.f32 %v2202, 0.0012755102
    %v2265 = vmul.f32 %v2211, 0.0012755102
    %v2266 = vsub.f32 %v602, %v2212
    %v2267 = vsub.f32 %v604, %v2212
    %v2268 = vsub.f32 %v905, %v2212
    %v2269 = vsub.f32 %v907, %v2212
    %v2270 = vsub.f32 %v1208, %v2212
    %v2271 = vsub.f32 %v1210, %v2212
    %v2272 = vsub.f32 %v1511, %v2212
    %v2273 = vsub.f32 %v606, %v2213
    %v2274 = vsub.f32 %v608, %v2213
    %v2275 = vsub.f32 %v909, %v2213
    %v2276 = vsub.f32 %v911, %v2213
    %v2277 = vsub.f32 %v1212, %v2213
    %v2278 = vsub.f32 %v1214, %v2213
    %v2279 = vsub.f32 %v1514, %v2213
    %v2280 = vsub.f32 %v612, %v2214
    %v2281 = vsub.f32 %v614, %v2214
    %v2282 = vsub.f32 %v915, %v2214
    %v2283 = vsub.f32 %v917, %v2214
    %v2284 = vsub.f32 %v1218, %v2214
    %v2285 = vsub.f32 %v1220, %v2214
    %v2286 = vsub.f32 %v1519, %v2214
    %v2287 = vsub.f32 %v616, %v2215
    %v2288 = vsub.f32 %v618, %v2215
    %v2289 = vsub.f32 %v919, %v2215
    %v2290 = vsub.f32 %v921, %v2215
    %v2291 = vsub.f32 %v1222, %v2215
    %v2292 = vsub.f32 %v1224, %v2215
    %v2293 = vsub.f32 %v1522, %v2215
    %v2294 = vsub.f32 %v622, %v2216
    %v2295 = vsub.f32 %v624, %v2216
    %v2296 = vsub.f32 %v925, %v2216
    %v2297 = vsub.f32 %v927, %v2216
    %v2298 = vsub.f32 %v1228, %v2216
    %v2299 = vsub.f32 %v1230, %v2216
    %v2300 = vsub.f32 %v1527, %v2216
    %v2301 = vsub.f32 %v626, %v2217
    %v2302 = vsub.f32 %v628, %v2217
    %v2303 = vsub.f32 %v929, %v2217
    %v2304 = vsub.f32 %v931, %v2217
    %v2305 = vsub.f32 %v1232, %v2217
    %v2306 = vsub.f32 %v1234, %v2217
    %v2307 = vsub.f32 %v1530, %v2217
    %v2308 = vsub.f32 %v632, %v2218
    %v2309 = vsub.f32 %v634, %v2218
    %v2310 = vsub.f32 %v935, %v2218
    %v2311 = vsub.f32 %v937, %v2218
    %v2312 = vsub.f32 %v1238, %v2218
    %v2313 = vsub.f32 %v1240, %v2218
    %v2314 = vsub.f32 %v1535, %v2218
    %v2315 = vsub.f32 %v636, %v2219
    %v2316 = vsub.f32 %v638, %v2219
    %v2317 = vsub.f32 %v939, %v2219
    %v2318 = vsub.f32 %v941, %v2219
    %v2319 = vsub.f32 %v1242, %v2219
    %v2320 = vsub.f32 %v1244, %v2219
    %v2321 = vsub.f32 %v1538, %v2219
    %v2322 = vsub.f32 %v642, %v2220
    %v2323 = vsub.f32 %v644, %v2220
    %v2324 = vsub.f32 %v945, %v2220
    %v2325 = vsub.f32 %v947, %v2220
    %v2326 = vsub.f32 %v1248, %v2220
    %v2327 = vsub.f32 %v1250, %v2220
    %v2328 = vsub.f32 %v1543, %v2220
    %v2329 = vsub.f32 %v646, %v2221
    %v2330 = vsub.f32 %v648, %v2221
    %v2331 = vsub.f32 %v949, %v2221
    %v2332 = vsub.f32 %v951, %v2221
    %v2333 = vsub.f32 %v1252, %v2221
    %v2334 = vsub.f32 %v1254, %v2221
    %v2335 = vsub.f32 %v1546, %v2221
    %v2336 = vsub.f32 %v652, %v2222
    %v2337 = vsub.f32 %v654, %v2222
    %v2338 = vsub.f32 %v955, %v2222
    %v2339 = vsub.f32 %v957, %v2222
    %v2340 = vsub.f32 %v1258, %v2222
    %v2341 = vsub.f32 %v1260, %v2222
    %v2342 = vsub.f32 %v1551, %v2222
    %v2343 = vsub.f32 %v656, %v2223
    %v2344 = vsub.f32 %v658, %v2223
    %v2345 = vsub.f32 %v959, %v2223
    %v2346 = vsub.f32 %v961, %v2223
    %v2347 = vsub.f32 %v1262, %v2223
    %v2348 = vsub.f32 %v1264, %v2223
    %v2349 = vsub.f32 %v1554, %v2223
    %v2350 = vsub.f32 %v662, %v2224
    %v2351 = vsub.f32 %v664, %v2224
    %v2352 = vsub.f32 %v965, %v2224
    %v2353 = vsub.f32 %v967, %v2224
    %v2354 = vsub.f32 %v1268, %v2224
    %v2355 = vsub.f32 %v1270, %v2224
    %v2356 = vsub.f32 %v1559, %v2224
    %v2357 = vsub.f32 %v666, %v2225
    %v2358 = vsub.f32 %v668, %v2225
    %v2359 = vsub.f32 %v969, %v2225
    %v2360 = vsub.f32 %v971, %v2225
    %v2361 = vsub.f32 %v1272, %v2225
    %v2362 = vsub.f32 %v1274, %v2225
    %v2363 = vsub.f32 %v1562, %v2225
    %v2364 = vsub.f32 %v672, %v2226
    %v2365 = vsub.f32 %v674, %v2226
    %v2366 = vsub.f32 %v975, %v2226
    %v2367 = vsub.f32 %v977, %v2226
    %v2368 = vsub.f32 %v1278, %v2226
    %v2369 = vsub.f32 %v1280, %v2226
    %v2370 = vsub.f32 %v1567, %v2226
    %v2371 = vsub.f32 %v676, %v2227
    %v2372 = vsub.f32 %v678, %v2227
    %v2373 = vsub.f32 %v979, %v2227
    %v2374 = vsub.f32 %v981, %v2227
    %v2375 = vsub.f32 %v1282, %v2227
    %v2376 = vsub.f32 %v1284, %v2227
    %v2377 = vsub.f32 %v1570, %v2227
    %v2378 = vsub.f32 %v682, %v2228
    %v2379 = vsub.f32 %v684, %v2228
    %v2380 = vsub.f32 %v985, %v2228
    %v2381 = vsub.f32 %v987, %v2228
    %v2382 = vsub.f32 %v1288, %v2228
    %v2383 = vsub.f32 %v1290, %v2228
    %v2384 = vsub.f32 %v1575, %v2228
    %v2385 = vsub.f32 %v686, %v2229
    %v2386 = vsub.f32 %v688, %v2229
    %v2387 = vsub.f32 %v989, %v2229
    %v2388 = vsub.f32 %v991, %v2229
    %v2389 = vsub.f32 %v1292, %v2229
    %v2390 = vsub.f32 %v1294, %v2229
    %v2391 = vsub.f32 %v1578, %v2229
    %v2392 = vsub.f32 %v692, %v2230
    %v2393 = vsub.f32 %v694, %v2230
    %v2394 = vsub.f32 %v995, %v2230
    %v2395 = vsub.f32 %v997, %v2230
    %v2396 = vsub.f32 %v1298, %v2230
    %v2397 = vsub.f32 %v1300, %v2230
    %v2398 = vsub.f32 %v1583, %v2230
    %v2399 = vsub.f32 %v696, %v2231
    %v2400 = vsub.f32 %v698, %v2231
    %v2401 = vsub.f32 %v999, %v2231
    %v2402 = vsub.f32 %v1001, %v2231
    %v2403 = vsub.f32 %v1302, %v2231
    %v2404 = vsub.f32 %v1304, %v2231
    %v2405 = vsub.f32 %v1586, %v2231
    %v2406 = vsub.f32 %v702, %v2232
    %v2407 = vsub.f32 %v704, %v2232
    %v2408 = vsub.f32 %v1005, %v2232
    %v2409 = vsub.f32 %v1007, %v2232
    %v2410 = vsub.f32 %v1308, %v2232
    %v2411 = vsub.f32 %v1310, %v2232
    %v2412 = vsub.f32 %v1591, %v2232
    %v2413 = vsub.f32 %v706, %v2233
    %v2414 = vsub.f32 %v708, %v2233
    %v2415 = vsub.f32 %v1009, %v2233
    %v2416 = vsub.f32 %v1011, %v2233
    %v2417 = vsub.f32 %v1312, %v2233
    %v2418 = vsub.f32 %v1314, %v2233
    %v2419 = vsub.f32 %v1594, %v2233
    %v2420 = vsub.f32 %v712, %v2234
    %v2421 = vsub.f32 %v714, %v2234
    %v2422 = vsub.f32 %v1015, %v2234
    %v2423 = vsub.f32 %v1017, %v2234
    %v2424 = vsub.f32 %v1318, %v2234
    %v2425 = vsub.f32 %v1320, %v2234
    %v2426 = vsub.f32 %v1599, %v2234
    %v2427 = vsub.f32 %v716, %v2235
    %v2428 = vsub.f32 %v718, %v2235
    %v2429 = vsub.f32 %v1019, %v2235
    %v2430 = vsub.f32 %v1021, %v2235
    %v2431 = vsub.f32 %v1322, %v2235
    %v2432 = vsub.f32 %v1324, %v2235
    %v2433 = vsub.f32 %v1602, %v2235
    %v2434 = vsub.f32 %v722, %v2236
    %v2435 = vsub.f32 %v724, %v2236
    %v2436 = vsub.f32 %v1025, %v2236
    %v2437 = vsub.f32 %v1027, %v2236
    %v2438 = vsub.f32 %v1328, %v2236
    %v2439 = vsub.f32 %v1330, %v2236
    %v2440 = vsub.f32 %v1607, %v2236
    %v2441 = vsub.f32 %v726, %v2237
    %v2442 = vsub.f32 %v728, %v2237
    %v2443 = vsub.f32 %v1029, %v2237
    %v2444 = vsub.f32 %v1031, %v2237
    %v2445 = vsub.f32 %v1332, %v2237
    %v2446 = vsub.f32 %v1334, %v2237
    %v2447 = vsub.f32 %v1610, %v2237
    %v2448 = vsub.f32 %v732, %v2238
    %v2449 = vsub.f32 %v734, %v2238
    %v2450 = vsub.f32 %v1035, %v2238
    %v2451 = vsub.f32 %v1037, %v2238
    %v2452 = vsub.f32 %v1338, %v2238
    %v2453 = vsub.f32 %v1340, %v2238
    %v2454 = vsub.f32 %v1615, %v2238
    %v2455 = vsub.f32 %v736, %v2239
    %v2456 = vsub.f32 %v738, %v2239
    %v2457 = vsub.f32 %v1039, %v2239
    %v2458 = vsub.f32 %v1041, %v2239
    %v2459 = vsub.f32 %v1342, %v2239
    %v2460 = vsub.f32 %v1344, %v2239
    %v2461 = vsub.f32 %v1618, %v2239
    %v2462 = vsub.f32 %v742, %v2240
    %v2463 = vsub.f32 %v744, %v2240
    %v2464 = vsub.f32 %v1045, %v2240
    %v2465 = vsub.f32 %v1047, %v2240
    %v2466 = vsub.f32 %v1348, %v2240
    %v2467 = vsub.f32 %v1350, %v2240
    %v2468 = vsub.f32 %v1623, %v2240
    %v2469 = vsub.f32 %v746, %v2241
    %v2470 = vsub.f32 %v748, %v2241
    %v2471 = vsub.f32 %v1049, %v2241
    %v2472 = vsub.f32 %v1051, %v2241
    %v2473 = vsub.f32 %v1352, %v2241
    %v2474 = vsub.f32 %v1354, %v2241
    %v2475 = vsub.f32 %v1626, %v2241
    %v2476 = vsub.f32 %v752, %v2242
    %v2477 = vsub.f32 %v754, %v2242
    %v2478 = vsub.f32 %v1055, %v2242
    %v2479 = vsub.f32 %v1057, %v2242
    %v2480 = vsub.f32 %v1358, %v2242
    %v2481 = vsub.f32 %v1360, %v2242
    %v2482 = vsub.f32 %v1631, %v2242
    %v2483 = vsub.f32 %v756, %v2243
    %v2484 = vsub.f32 %v758, %v2243
    %v2485 = vsub.f32 %v1059, %v2243
    %v2486 = vsub.f32 %v1061, %v2243
    %v2487 = vsub.f32 %v1362, %v2243
    %v2488 = vsub.f32 %v1364, %v2243
    %v2489 = vsub.f32 %v1634, %v2243
    %v2490 = vsub.f32 %v762, %v2244
    %v2491 = vsub.f32 %v764, %v2244
    %v2492 = vsub.f32 %v1065, %v2244
    %v2493 = vsub.f32 %v1067, %v2244
    %v2494 = vsub.f32 %v1368, %v2244
    %v2495 = vsub.f32 %v1370, %v2244
    %v2496 = vsub.f32 %v1639, %v2244
    %v2497 = vsub.f32 %v766, %v2245
    %v2498 = vsub.f32 %v768, %v2245
    %v2499 = vsub.f32 %v1069, %v2245
    %v2500 = vsub.f32 %v1071, %v2245
    %v2501 = vsub.f32 %v1372, %v2245
    %v2502 = vsub.f32 %v1374, %v2245
    %v2503 = vsub.f32 %v1642, %v2245
    %v2504 = vsub.f32 %v772, %v2246
    %v2505 = vsub.f32 %v774, %v2246
    %v2506 = vsub.f32 %v1075, %v2246
    %v2507 = vsub.f32 %v1077, %v2246
    %v2508 = vsub.f32 %v1378, %v2246
    %v2509 = vsub.f32 %v1380, %v2246
    %v2510 = vsub.f32 %v1647, %v2246
    %v2511 = vsub.f32 %v776, %v2247
    %v2512 = vsub.f32 %v778, %v2247
    %v2513 = vsub.f32 %v1079, %v2247
    %v2514 = vsub.f32 %v1081, %v2247
    %v2515 = vsub.f32 %v1382, %v2247
    %v2516 = vsub.f32 %v1384, %v2247
    %v2517 = vsub.f32 %v1650, %v2247
    %v2518 = vsub.f32 %v782, %v2248
    %v2519 = vsub.f32 %v784, %v2248
    %v2520 = vsub.f32 %v1085, %v2248
    %v2521 = vsub.f32 %v1087, %v2248
    %v2522 = vsub.f32 %v1388, %v2248
    %v2523 = vsub.f32 %v1390, %v2248
    %v2524 = vsub.f32 %v1655, %v2248
    %v2525 = vsub.f32 %v786, %v2249
    %v2526 = vsub.f32 %v788, %v2249
    %v2527 = vsub.f32 %v1089, %v2249
    %v2528 = vsub.f32 %v1091, %v2249
    %v2529 = vsub.f32 %v1392, %v2249
    %v2530 = vsub.f32 %v1394, %v2249
    %v2531 = vsub.f32 %v1658, %v2249
    %v2532 = vsub.f32 %v792, %v2250
    %v2533 = vsub.f32 %v794, %v2250
    %v2534 = vsub.f32 %v1095, %v2250
    %v2535 = vsub.f32 %v1097, %v2250
    %v2536 = vsub.f32 %v1398, %v2250
    %v2537 = vsub.f32 %v1400, %v2250
    %v2538 = vsub.f32 %v1663, %v2250
    %v2539 = vsub.f32 %v796, %v2251
    %v2540 = vsub.f32 %v798, %v2251
    %v2541 = vsub.f32 %v1099, %v2251
    %v2542 = vsub.f32 %v1101, %v2251
    %v2543 = vsub.f32 %v1402, %v2251
    %v2544 = vsub.f32 %v1404, %v2251
    %v2545 = vsub.f32 %v1666, %v2251
    %v2546 = vsub.f32 %v802, %v2252
    %v2547 = vsub.f32 %v804, %v2252
    %v2548 = vsub.f32 %v1105, %v2252
    %v2549 = vsub.f32 %v1107, %v2252
    %v2550 = vsub.f32 %v1408, %v2252
    %v2551 = vsub.f32 %v1410, %v2252
    %v2552 = vsub.f32 %v1671, %v2252
    %v2553 = vsub.f32 %v806, %v2253
    %v2554 = vsub.f32 %v808, %v2253
    %v2555 = vsub.f32 %v1109, %v2253
    %v2556 = vsub.f32 %v1111, %v2253
    %v2557 = vsub.f32 %v1412, %v2253
    %v2558 = vsub.f32 %v1414, %v2253
    %v2559 = vsub.f32 %v1674, %v2253
    %v2560 = vsub.f32 %v812, %v2254
    %v2561 = vsub.f32 %v814, %v2254
    %v2562 = vsub.f32 %v1115, %v2254
    %v2563 = vsub.f32 %v1117, %v2254
    %v2564 = vsub.f32 %v1418, %v2254
    %v2565 = vsub.f32 %v1420, %v2254
    %v2566 = vsub.f32 %v1679, %v2254
    %v2567 = vsub.f32 %v816, %v2255
    %v2568 = vsub.f32 %v818, %v2255
    %v2569 = vsub.f32 %v1119, %v2255
    %v2570 = vsub.f32 %v1121, %v2255
    %v2571 = vsub.f32 %v1422, %v2255
    %v2572 = vsub.f32 %v1424, %v2255
    %v2573 = vsub.f32 %v1682, %v2255
    %v2574 = vsub.f32 %v822, %v2256
    %v2575 = vsub.f32 %v824, %v2256
    %v2576 = vsub.f32 %v1125, %v2256
    %v2577 = vsub.f32 %v1127, %v2256
    %v2578 = vsub.f32 %v1428, %v2256
    %v2579 = vsub.f32 %v1430, %v2256
    %v2580 = vsub.f32 %v1687, %v2256
    %v2581 = vsub.f32 %v826, %v2257
    %v2582 = vsub.f32 %v828, %v2257
    %v2583 = vsub.f32 %v1129, %v2257
    %v2584 = vsub.f32 %v1131, %v2257
    %v2585 = vsub.f32 %v1432, %v2257
    %v2586 = vsub.f32 %v1434, %v2257
    %v2587 = vsub.f32 %v1690, %v2257
    %v2588 = vsub.f32 %v832, %v2258
    %v2589 = vsub.f32 %v834, %v2258
    %v2590 = vsub.f32 %v1135, %v2258
    %v2591 = vsub.f32 %v1137, %v2258
    %v2592 = vsub.f32 %v1438, %v2258
    %v2593 = vsub.f32 %v1440, %v2258
    %v2594 = vsub.f32 %v1695, %v2258
    %v2595 = vsub.f32 %v836, %v2259
    %v2596 = vsub.f32 %v838, %v2259
    %v2597 = vsub.f32 %v1139, %v2259
    %v2598 = vsub.f32 %v1141, %v2259
    %v2599 = vsub.f32 %v1442, %v2259
    %v2600 = vsub.f32 %v1444, %v2259
    %v2601 = vsub.f32 %v1698, %v2259
    %v2602 = vsub.f32 %v842, %v2260
    %v2603 = vsub.f32 %v844, %v2260
    %v2604 = vsub.f32 %v1145, %v2260
    %v2605 = vsub.f32 %v1147, %v2260
    %v2606 = vsub.f32 %v1448, %v2260
    %v2607 = vsub.f32 %v1450, %v2260
    %v2608 = vsub.f32 %v1703, %v2260
    %v2609 = vsub.f32 %v846, %v2261
    %v2610 = vsub.f32 %v848, %v2261
    %v2611 = vsub.f32 %v1149, %v2261
    %v2612 = vsub.f32 %v1151, %v2261
    %v2613 = vsub.f32 %v1452, %v2261
    %v2614 = vsub.f32 %v1454, %v2261
    %v2615 = vsub.f32 %v1706, %v2261
    %v2616 = vsub.f32 %v852, %v2262
    %v2617 = vsub.f32 %v854, %v2262
    %v2618 = vsub.f32 %v1155, %v2262
    %v2619 = vsub.f32 %v1157, %v2262
    %v2620 = vsub.f32 %v1458, %v2262
    %v2621 = vsub.f32 %v1460, %v2262
    %v2622 = vsub.f32 %v1711, %v2262
    %v2623 = vsub.f32 %v856, %v2263
    %v2624 = vsub.f32 %v858, %v2263
    %v2625 = vsub.f32 %v1159, %v2263
    %v2626 = vsub.f32 %v1161, %v2263
    %v2627 = vsub.f32 %v1462, %v2263
    %v2628 = vsub.f32 %v1464, %v2263
    %v2629 = vsub.f32 %v1714, %v2263
    %v2630 = vsub.f32 %v862, %v2264
    %v2631 = vsub.f32 %v864, %v2264
    %v2632 = vsub.f32 %v1165, %v2264
    %v2633 = vsub.f32 %v1167, %v2264
    %v2634 = vsub.f32 %v1468, %v2264
    %v2635 = vsub.f32 %v1470, %v2264
    %v2636 = vsub.f32 %v1719, %v2264
    %v2637 = vsub.f32 %v866, %v2265
    %v2638 = vsub.f32 %v868, %v2265
    %v2639 = vsub.f32 %v1169, %v2265
    %v2640 = vsub.f32 %v1171, %v2265
    %v2641 = vsub.f32 %v1472, %v2265
    %v2642 = vsub.f32 %v1474, %v2265
    %v2643 = vsub.f32 %v1722, %v2265
    %v2644 = vmul.f32 %v2266, %v2266
    %v2645 = vmul.f32 %v2267, %v2267
    %v2646 = vmul.f32 %v2268, %v2268
    %v2647 = vmul.f32 %v2269, %v2269
    %v2648 = vmul.f32 %v2270, %v2270
    %v2649 = vmul.f32 %v2271, %v2271
    %v2650 = vmul.f32 %v2272, %v2272
    %v2651 = vmul.f32 %v2273, %v2273
    %v2652 = vmul.f32 %v2274, %v2274
    %v2653 = vmul.f32 %v2275, %v2275
    %v2654 = vmul.f32 %v2276, %v2276
    %v2655 = vmul.f32 %v2277, %v2277
    %v2656 = vmul.f32 %v2278, %v2278
    %v2657 = vmul.f32 %v2279, %v2279
    %v2658 = vmul.f32 %v2280, %v2280
    %v2659 = vmul.f32 %v2281, %v2281
    %v2660 = vmul.f32 %v2282, %v2282
    %v2661 = vmul.f32 %v2283, %v2283
    %v2662 = vmul.f32 %v2284, %v2284
    %v2663 = vmul.f32 %v2285, %v2285
    %v2664 = vmul.f32 %v2286, %v2286
    %v2665 = vmul.f32 %v2287, %v2287
    %v2666 = vmul.f32 %v2288, %v2288
    %v2667 = vmul.f32 %v2289, %v2289
    %v2668 = vmul.f32 %v2290, %v2290
    %v2669 = vmul.f32 %v2291, %v2291
    %v2670 = vmul.f32 %v2292, %v2292
    %v2671 = vmul.f32 %v2293, %v2293
    %v2672 = vmul.f32 %v2294, %v2294
    %v2673 = vmul.f32 %v2295, %v2295
    %v2674 = vmul.f32 %v2296, %v2296
    %v2675 = vmul.f32 %v2297, %v2297
    %v2676 = vmul.f32 %v2298, %v2298
    %v2677 = vmul.f32 %v2299, %v2299
    %v2678 = vmul.f32 %v2300, %v2300
    %v2679 = vmul.f32 %v2301, %v2301
    %v2680 = vmul.f32 %v2302, %v2302
    %v2681 = vmul.f32 %v2303, %v2303
    %v2682 = vmul.f32 %v2304, %v2304
    %v2683 = vmul.f32 %v2305, %v2305
    %v2684 = vmul.f32 %v2306, %v2306
    %v2685 = vmul.f32 %v2307, %v2307
    %v2686 = vmul.f32 %v2308, %v2308
    %v2687 = vmul.f32 %v2309, %v2309
    %v2688 = vmul.f32 %v2310, %v2310
    %v2689 = vmul.f32 %v2311, %v2311
    %v2690 = vmul.f32 %v2312, %v2312
    %v2691 = vmul.f32 %v2313, %v2313
    %v2692 = vmul.f32 %v2314, %v2314
    %v2693 = vmul.f32 %v2315, %v2315
    %v2694 = vmul.f32 %v2316, %v2316
    %v2695 = vmul.f32 %v2317, %v2317
    %v2696 = vmul.f32 %v2318, %v2318
    %v2697 = vmul.f32 %v2319, %v2319
    %v2698 = vmul.f32 %v2320, %v2320
    %v2699 = vmul.f32 %v2321, %v2321
    %v2700 = vmul.f32 %v2322, %v2322
    %v2701 = vmul.f32 %v2323, %v2323
    %v2702 = vmul.f32 %v2324, %v2324
    %v2703 = vmul.f32 %v2325, %v2325
    %v2704 = vmul.f32 %v2326, %v2326
    %v2705 = vmul.f32 %v2327, %v2327
    %v2706 = vmul.f32 %v2328, %v2328
    %v2707 = vmul.f32 %v2329, %v2329
    %v2708 = vmul.f32 %v2330, %v2330
    %v2709 = vmul.f32 %v2331, %v2331
    %v2710 = vmul.f32 %v2332, %v2332
    %v2711 = vmul.f32 %v2333, %v2333
    %v2712 = vmul.f32 %v2334, %v2334
    %v2713 = vmul.f32 %v2335, %v2335
    %v2714 = vmul.f32 %v2336, %v2336
    %v2715 = vmul.f32 %v2337, %v2337
    %v2716 = vmul.f32 %v2338, %v2338
    %v2717 = vmul.f32 %v2339, %v2339
    %v2718 = vmul.f32 %v2340, %v2340
    %v2719 = vmul.f32 %v2341, %v2341
    %v2720 = vmul.f32 %v2342, %v2342
    %v2721 = vmul.f32 %v2343, %v2343
    %v2722 = vmul.f32 %v2344, %v2344
    %v2723 = vmul.f32 %v2345, %v2345
    %v2724 = vmul.f32 %v2346, %v2346
    %v2725 = vmul.f32 %v2347, %v2347
    %v2726 = vmul.f32 %v2348, %v2348
    %v2727 = vmul.f32 %v2349, %v2349
    %v2728 = vmul.f32 %v2350, %v2350
    %v2729 = vmul.f32 %v2351, %v2351
    %v2730 = vmul.f32 %v2352, %v2352
    %v2731 = vmul.f32 %v2353, %v2353
    %v2732 = vmul.f32 %v2354, %v2354
    %v2733 = vmul.f32 %v2355, %v2355
    %v2734 = vmul.f32 %v2356, %v2356
    %v2735 = vmul.f32 %v2357, %v2357
    %v2736 = vmul.f32 %v2358, %v2358
    %v2737 = vmul.f32 %v2359, %v2359
    %v2738 = vmul.f32 %v2360, %v2360
    %v2739 = vmul.f32 %v2361, %v2361
    %v2740 = vmul.f32 %v2362, %v2362
    %v2741 = vmul.f32 %v2363, %v2363
    %v2742 = vmul.f32 %v2364, %v2364
    %v2743 = vmul.f32 %v2365, %v2365
    %v2744 = vmul.f32 %v2366, %v2366
    %v2745 = vmul.f32 %v2367, %v2367
    %v2746 = vmul.f32 %v2368, %v2368
    %v2747 = vmul.f32 %v2369, %v2369
    %v2748 = vmul.f32 %v2370, %v2370
    %v2749 = vmul.f32 %v2371, %v2371
    %v2750 = vmul.f32 %v2372, %v2372
    %v2751 = vmul.f32 %v2373, %v2373
    %v2752 = vmul.f32 %v2374, %v2374
    %v2753 = vmul.f32 %v2375, %v2375
    %v2754 = vmul.f32 %v2376, %v2376
    %v2755 = vmul.f32 %v2377, %v2377
    %v2756 = vmul.f32 %v2378, %v2378
    %v2757 = vmul.f32 %v2379, %v2379
    %v2758 = vmul.f32 %v2380, %v2380
    %v2759 = vmul.f32 %v2381, %v2381
    %v2760 = vmul.f32 %v2382, %v2382
    %v2761 = vmul.f32 %v2383, %v2383
    %v2762 = vmul.f32 %v2384, %v2384
    %v2763 = vmul.f32 %v2385, %v2385
    %v2764 = vmul.f32 %v2386, %v2386
    %v2765 = vmul.f32 %v2387, %v2387
    %v2766 = vmul.f32 %v2388, %v2388
    %v2767 = vmul.f32 %v2389, %v2389
    %v2768 = vmul.f32 %v2390, %v2390
    %v2769 = vmul.f32 %v2391, %v2391
    %v2770 = vmul.f32 %v2392, %v2392
    %v2771 = vmul.f32 %v2393, %v2393
    %v2772 = vmul.f32 %v2394, %v2394
    %v2773 = vmul.f32 %v2395, %v2395
    %v2774 = vmul.f32 %v2396, %v2396
    %v2775 = vmul.f32 %v2397, %v2397
    %v2776 = vmul.f32 %v2398, %v2398
    %v2777 = vmul.f32 %v2399, %v2399
    %v2778 = vmul.f32 %v2400, %v2400
    %v2779 = vmul.f32 %v2401, %v2401
    %v2780 = vmul.f32 %v2402, %v2402
    %v2781 = vmul.f32 %v2403, %v2403
    %v2782 = vmul.f32 %v2404, %v2404
    %v2783 = vmul.f32 %v2405, %v2405
    %v2784 = vmul.f32 %v2406, %v2406
    %v2785 = vmul.f32 %v2407, %v2407
    %v2786 = vmul.f32 %v2408, %v2408
    %v2787 = vmul.f32 %v2409, %v2409
    %v2788 = vmul.f32 %v2410, %v2410
    %v2789 = vmul.f32 %v2411, %v2411
    %v2790 = vmul.f32 %v2412, %v2412
    %v2791 = vmul.f32 %v2413, %v2413
    %v2792 = vmul.f32 %v2414, %v2414
    %v2793 = vmul.f32 %v2415, %v2415
    %v2794 = vmul.f32 %v2416, %v2416
    %v2795 = vmul.f32 %v2417, %v2417
    %v2796 = vmul.f32 %v2418, %v2418
    %v2797 = vmul.f32 %v2419, %v2419
    %v2798 = vmul.f32 %v2420, %v2420
    %v2799 = vmul.f32 %v2421, %v2421
    %v2800 = vmul.f32 %v2422, %v2422
    %v2801 = vmul.f32 %v2423, %v2423
    %v2802 = vmul.f32 %v2424, %v2424
    %v2803 = vmul.f32 %v2425, %v2425
    %v2804 = vmul.f32 %v2426, %v2426
    %v2805 = vmul.f32 %v2427, %v2427
    %v2806 = vmul.f32 %v2428, %v2428
    %v2807 = vmul.f32 %v2429, %v2429
    %v2808 = vmul.f32 %v2430, %v2430
    %v2809 = vmul.f32 %v2431, %v2431
    %v2810 = vmul.f32 %v2432, %v2432
    %v2811 = vmul.f32 %v2433, %v2433
    %v2812 = vmul.f32 %v2434, %v2434
    %v2813 = vmul.f32 %v2435, %v2435
    %v2814 = vmul.f32 %v2436, %v2436
    %v2815 = vmul.f32 %v2437, %v2437
    %v2816 = vmul.f32 %v2438, %v2438
    %v2817 = vmul.f32 %v2439, %v2439
    %v2818 = vmul.f32 %v2440, %v2440
    %v2819 = vmul.f32 %v2441, %v2441
    %v2820 = vmul.f32 %v2442, %v2442
    %v2821 = vmul.f32 %v2443, %v2443
    %v2822 = vmul.f32 %v2444, %v2444
    %v2823 = vmul.f32 %v2445, %v2445
    %v2824 = vmul.f32 %v2446, %v2446
    %v2825 = vmul.f32 %v2447, %v2447
    %v2826 = vmul.f32 %v2448, %v2448
    %v2827 = vmul.f32 %v2449, %v2449
    %v2828 = vmul.f32 %v2450, %v2450
    %v2829 = vmul.f32 %v2451, %v2451
    %v2830 = vmul.f32 %v2452, %v2452
    %v2831 = vmul.f32 %v2453, %v2453
    %v2832 = vmul.f32 %v2454, %v2454
    %v2833 = vmul.f32 %v2455, %v2455
    %v2834 = vmul.f32 %v2456, %v2456
    %v2835 = vmul.f32 %v2457, %v2457
    %v2836 = vmul.f32 %v2458, %v2458
    %v2837 = vmul.f32 %v2459, %v2459
    %v2838 = vmul.f32 %v2460, %v2460
    %v2839 = vmul.f32 %v2461, %v2461
    %v2840 = vmul.f32 %v2462, %v2462
    %v2841 = vmul.f32 %v2463, %v2463
    %v2842 = vmul.f32 %v2464, %v2464
    %v2843 = vmul.f32 %v2465, %v2465
    %v2844 = vmul.f32 %v2466, %v2466
    %v2845 = vmul.f32 %v2467, %v2467
    %v2846 = vmul.f32 %v2468, %v2468
    %v2847 = vmul.f32 %v2469, %v2469
    %v2848 = vmul.f32 %v2470, %v2470
    %v2849 = vmul.f32 %v2471, %v2471
    %v2850 = vmul.f32 %v2472, %v2472
    %v2851 = vmul.f32 %v2473, %v2473
    %v2852 = vmul.f32 %v2474, %v2474
    %v2853 = vmul.f32 %v2475, %v2475
    %v2854 = vmul.f32 %v2476, %v2476
    %v2855 = vmul.f32 %v2477, %v2477
    %v2856 = vmul.f32 %v2478, %v2478
    %v2857 = vmul.f32 %v2479, %v2479
    %v2858 = vmul.f32 %v2480, %v2480
    %v2859 = vmul.f32 %v2481, %v2481
    %v2860 = vmul.f32 %v2482, %v2482
    %v2861 = vmul.f32 %v2483, %v2483
    %v2862 = vmul.f32 %v2484, %v2484
    %v2863 = vmul.f32 %v2485, %v2485
    %v2864 = vmul.f32 %v2486, %v2486
    %v2865 = vmul.f32 %v2487, %v2487
    %v2866 = vmul.f32 %v2488, %v2488
    %v2867 = vmul.f32 %v2489, %v2489
    %v2868 = vmul.f32 %v2490, %v2490
    %v2869 = vmul.f32 %v2491, %v2491
    %v2870 = vmul.f32 %v2492, %v2492
    %v2871 = vmul.f32 %v2493, %v2493
    %v2872 = vmul.f32 %v2494, %v2494
    %v2873 = vmul.f32 %v2495, %v2495
    %v2874 = vmul.f32 %v2496, %v2496
    %v2875 = vmul.f32 %v2497, %v2497
    %v2876 = vmul.f32 %v2498, %v2498
    %v2877 = vmul.f32 %v2499, %v2499
    %v2878 = vmul.f32 %v2500, %v2500
    %v2879 = vmul.f32 %v2501, %v2501
    %v2880 = vmul.f32 %v2502, %v2502
    %v2881 = vmul.f32 %v2503, %v2503
    %v2882 = vmul.f32 %v2504, %v2504
    %v2883 = vmul.f32 %v2505, %v2505
    %v2884 = vmul.f32 %v2506, %v2506
    %v2885 = vmul.f32 %v2507, %v2507
    %v2886 = vmul.f32 %v2508, %v2508
    %v2887 = vmul.f32 %v2509, %v2509
    %v2888 = vmul.f32 %v2510, %v2510
    %v2889 = vmul.f32 %v2511, %v2511
    %v2890 = vmul.f32 %v2512, %v2512
    %v2891 = vmul.f32 %v2513, %v2513
    %v2892 = vmul.f32 %v2514, %v2514
    %v2893 = vmul.f32 %v2515, %v2515
    %v2894 = vmul.f32 %v2516, %v2516
    %v2895 = vmul.f32 %v2517, %v2517
    %v2896 = vmul.f32 %v2518, %v2518
    %v2897 = vmul.f32 %v2519, %v2519
    %v2898 = vmul.f32 %v2520, %v2520
    %v2899 = vmul.f32 %v2521, %v2521
    %v2900 = vmul.f32 %v2522, %v2522
    %v2901 = vmul.f32 %v2523, %v2523
    %v2902 = vmul.f32 %v2524, %v2524
    %v2903 = vmul.f32 %v2525, %v2525
    %v2904 = vmul.f32 %v2526, %v2526
    %v2905 = vmul.f32 %v2527, %v2527
    %v2906 = vmul.f32 %v2528, %v2528
    %v2907 = vmul.f32 %v2529, %v2529
    %v2908 = vmul.f32 %v2530, %v2530
    %v2909 = vmul.f32 %v2531, %v2531
    %v2910 = vmul.f32 %v2532, %v2532
    %v2911 = vmul.f32 %v2533, %v2533
    %v2912 = vmul.f32 %v2534, %v2534
    %v2913 = vmul.f32 %v2535, %v2535
    %v2914 = vmul.f32 %v2536, %v2536
    %v2915 = vmul.f32 %v2537, %v2537
    %v2916 = vmul.f32 %v2538, %v2538
    %v2917 = vmul.f32 %v2539, %v2539
    %v2918 = vmul.f32 %v2540, %v2540
    %v2919 = vmul.f32 %v2541, %v2541
    %v2920 = vmul.f32 %v2542, %v2542
    %v2921 = vmul.f32 %v2543, %v2543
    %v2922 = vmul.f32 %v2544, %v2544
    %v2923 = vmul.f32 %v2545, %v2545
    %v2924 = vmul.f32 %v2546, %v2546
    %v2925 = vmul.f32 %v2547, %v2547
    %v2926 = vmul.f32 %v2548, %v2548
    %v2927 = vmul.f32 %v2549, %v2549
    %v2928 = vmul.f32 %v2550, %v2550
    %v2929 = vmul.f32 %v2551, %v2551
    %v2930 = vmul.f32 %v2552, %v2552
    %v2931 = vmul.f32 %v2553, %v2553
    %v2932 = vmul.f32 %v2554, %v2554
    %v2933 = vmul.f32 %v2555, %v2555
    %v2934 = vmul.f32 %v2556, %v2556
    %v2935 = vmul.f32 %v2557, %v2557
    %v2936 = vmul.f32 %v2558, %v2558
    %v2937 = vmul.f32 %v2559, %v2559
    %v2938 = vmul.f32 %v2560, %v2560
    %v2939 = vmul.f32 %v2561, %v2561
    %v2940 = vmul.f32 %v2562, %v2562
    %v2941 = vmul.f32 %v2563, %v2563
    %v2942 = vmul.f32 %v2564, %v2564
    %v2943 = vmul.f32 %v2565, %v2565
    %v2944 = vmul.f32 %v2566, %v2566
    %v2945 = vmul.f32 %v2567, %v2567
    %v2946 = vmul.f32 %v2568, %v2568
    %v2947 = vmul.f32 %v2569, %v2569
    %v2948 = vmul.f32 %v2570, %v2570
    %v2949 = vmul.f32 %v2571, %v2571
    %v2950 = vmul.f32 %v2572, %v2572
    %v2951 = vmul.f32 %v2573, %v2573
    %v2952 = vmul.f32 %v2574, %v2574
    %v2953 = vmul.f32 %v2575, %v2575
    %v2954 = vmul.f32 %v2576, %v2576
    %v2955 = vmul.f32 %v2577, %v2577
    %v2956 = vmul.f32 %v2578, %v2578
    %v2957 = vmul.f32 %v2579, %v2579
    %v2958 = vmul.f32 %v2580, %v2580
    %v2959 = vmul.f32 %v2581, %v2581
    %v2960 = vmul.f32 %v2582, %v2582
    %v2961 = vmul.f32 %v2583, %v2583
    %v2962 = vmul.f32 %v2584, %v2584
    %v2963 = vmul.f32 %v2585, %v2585
    %v2964 = vmul.f32 %v2586, %v2586
    %v2965 = vmul.f32 %v2587, %v2587
    %v2966 = vmul.f32 %v2588, %v2588
    %v2967 = vmul.f32 %v2589, %v2589
    %v2968 = vmul.f32 %v2590, %v2590
    %v2969 = vmul.f32 %v2591, %v2591
    %v2970 = vmul.f32 %v2592, %v2592
    %v2971 = vmul.f32 %v2593, %v2593
    %v2972 = vmul.f32 %v2594, %v2594
    %v2973 = vmul.f32 %v2595, %v2595
    %v2974 = vmul.f32 %v2596, %v2596
    %v2975 = vmul.f32 %v2597, %v2597
    %v2976 = vmul.f32 %v2598, %v2598
    %v2977 = vmul.f32 %v2599, %v2599
    %v2978 = vmul.f32 %v2600, %v2600
    %v2979 = vmul.f32 %v2601, %v2601
    %v2980 = vmul.f32 %v2602, %v2602
    %v2981 = vmul.f32 %v2603, %v2603
    %v2982 = vmul.f32 %v2604, %v2604
    %v2983 = vmul.f32 %v2605, %v2605
    %v2984 = vmul.f32 %v2606, %v2606
    %v2985 = vmul.f32 %v2607, %v2607
    %v2986 = vmul.f32 %v2608, %v2608
    %v2987 = vmul.f32 %v2609, %v2609
    %v2988 = vmul.f32 %v2610, %v2610
    %v2989 = vmul.f32 %v2611, %v2611
    %v2990 = vmul.f32 %v2612, %v2612
    %v2991 = vmul.f32 %v2613, %v2613
    %v2992 = vmul.f32 %v2614, %v2614
    %v2993 = vmul.f32 %v2615, %v2615
    %v2994 = vmul.f32 %v2616, %v2616
    %v2995 = vmul.f32 %v2617, %v2617
    %v2996 = vmul.f32 %v2618, %v2618
    %v2997 = vmul.f32 %v2619, %v2619
    %v2998 = vmul.f32 %v2620, %v2620
    %v2999 = vmul.f32 %v2621, %v2621
    %v3000 = vmul.f32 %v2622, %v2622
    %v3001 = vmul.f32 %v2623, %v2623
    %v3002 = vmul.f32 %v2624, %v2624
    %v3003 = vmul.f32 %v2625, %v2625
    %v3004 = vmul.f32 %v2626, %v2626
    %v3005 = vmul.f32 %v2627, %v2627
    %v3006 = vmul.f32 %v2628, %v2628
    %v3007 = vmul.f32 %v2629, %v2629
    %v3008 = vmul.f32 %v2630, %v2630
    %v3009 = vmul.f32 %v2631, %v2631
    %v3010 = vmul.f32 %v2632, %v2632
    %v3011 = vmul.f32 %v2633, %v2633
    %v3012 = vmul.f32 %v2634, %v2634
    %v3013 = vmul.f32 %v2635, %v2635
    %v3014 = vmul.f32 %v2636, %v2636
    %v3015 = vmul.f32 %v2637, %v2637
    %v3016 = vmul.f32 %v2638, %v2638
    %v3017 = vmul.f32 %v2639, %v2639
    %v3018 = vmul.f32 %v2640, %v2640
    %v3019 = vmul.f32 %v2641, %v2641
    %v3020 = vmul.f32 %v2642, %v2642
    %v3021 = vmul.f32 %v2643, %v2643
    %v3022 = vadd.f32 %v2644, %v2645
    %v3023 = vadd.f32 %v3022, %v2646
    %v3024 = vadd.f32 %v3023, %v2647
    %v3025 = vadd.f32 %v3024, %v2648
    %v3026 = vadd.f32 %v3025, %v2649
    %v3027 = vsel %vm1730, %v2650, 0.0
    %v3028 = vadd.f32 %v3026, %v3027
    %3029 = vadd.xlane.f32.xlu0 %v3028
    %v3030 = vpop.xlane.xlu0 %3029
    %v3031 = vadd.f32 %v2651, %v2652
    %v3032 = vadd.f32 %v3031, %v2653
    %v3033 = vadd.f32 %v3032, %v2654
    %v3034 = vadd.f32 %v3033, %v2655
    %v3035 = vadd.f32 %v3034, %v2656
    %v3036 = vsel %vm1730, %v2657, 0.0
    %v3037 = vadd.f32 %v3035, %v3036
    %3038 = vadd.xlane.f32.xlu0 %v3037
    %v3039 = vpop.xlane.xlu0 %3038
    %v3040 = vadd.f32 %v2658, %v2659
    %v3041 = vadd.f32 %v3040, %v2660
    %v3042 = vadd.f32 %v3041, %v2661
    %v3043 = vadd.f32 %v3042, %v2662
    %v3044 = vadd.f32 %v3043, %v2663
    %v3045 = vsel %vm1730, %v2664, 0.0
    %v3046 = vadd.f32 %v3044, %v3045
    %3047 = vadd.xlane.f32.xlu0 %v3046
    %v3048 = vpop.xlane.xlu0 %3047
    %v3049 = vadd.f32 %v2665, %v2666
    %v3050 = vadd.f32 %v3049, %v2667
    %v3051 = vadd.f32 %v3050, %v2668
    %v3052 = vadd.f32 %v3051, %v2669
    %v3053 = vadd.f32 %v3052, %v2670
    %v3054 = vsel %vm1730, %v2671, 0.0
    %v3055 = vadd.f32 %v3053, %v3054
    %3056 = vadd.xlane.f32.xlu0 %v3055
    %v3057 = vpop.xlane.xlu0 %3056
    %v3058 = vadd.f32 %v2672, %v2673
    %v3059 = vadd.f32 %v3058, %v2674
    %v3060 = vadd.f32 %v3059, %v2675
    %v3061 = vadd.f32 %v3060, %v2676
    %v3062 = vadd.f32 %v3061, %v2677
    %v3063 = vsel %vm1730, %v2678, 0.0
    %v3064 = vadd.f32 %v3062, %v3063
    %3065 = vadd.xlane.f32.xlu0 %v3064
    %v3066 = vpop.xlane.xlu0 %3065
    %v3067 = vadd.f32 %v2679, %v2680
    %v3068 = vadd.f32 %v3067, %v2681
    %v3069 = vadd.f32 %v3068, %v2682
    %v3070 = vadd.f32 %v3069, %v2683
    %v3071 = vadd.f32 %v3070, %v2684
    %v3072 = vsel %vm1730, %v2685, 0.0
    %v3073 = vadd.f32 %v3071, %v3072
    %3074 = vadd.xlane.f32.xlu0 %v3073
    %v3075 = vpop.xlane.xlu0 %3074
    %v3076 = vadd.f32 %v2686, %v2687
    %v3077 = vadd.f32 %v3076, %v2688
    %v3078 = vadd.f32 %v3077, %v2689
    %v3079 = vadd.f32 %v3078, %v2690
    %v3080 = vadd.f32 %v3079, %v2691
    %v3081 = vsel %vm1730, %v2692, 0.0
    %v3082 = vadd.f32 %v3080, %v3081
    %3083 = vadd.xlane.f32.xlu0 %v3082
    %v3084 = vpop.xlane.xlu0 %3083
    %v3085 = vadd.f32 %v2693, %v2694
    %v3086 = vadd.f32 %v3085, %v2695
    %v3087 = vadd.f32 %v3086, %v2696
    %v3088 = vadd.f32 %v3087, %v2697
    %v3089 = vadd.f32 %v3088, %v2698
    %v3090 = vsel %vm1730, %v2699, 0.0
    %v3091 = vadd.f32 %v3089, %v3090
    %3092 = vadd.xlane.f32.xlu0 %v3091
    %v3093 = vpop.xlane.xlu0 %3092
    %v3094 = vadd.f32 %v2700, %v2701
    %v3095 = vadd.f32 %v3094, %v2702
    %v3096 = vadd.f32 %v3095, %v2703
    %v3097 = vadd.f32 %v3096, %v2704
    %v3098 = vadd.f32 %v3097, %v2705
    %v3099 = vsel %vm1730, %v2706, 0.0
    %v3100 = vadd.f32 %v3098, %v3099
    %3101 = vadd.xlane.f32.xlu0 %v3100
    %v3102 = vpop.xlane.xlu0 %3101
    %v3103 = vadd.f32 %v2707, %v2708
    %v3104 = vadd.f32 %v3103, %v2709
    %v3105 = vadd.f32 %v3104, %v2710
    %v3106 = vadd.f32 %v3105, %v2711
    %v3107 = vadd.f32 %v3106, %v2712
    %v3108 = vsel %vm1730, %v2713, 0.0
    %v3109 = vadd.f32 %v3107, %v3108
    %3110 = vadd.xlane.f32.xlu0 %v3109
    %v3111 = vpop.xlane.xlu0 %3110
    %v3112 = vadd.f32 %v2714, %v2715
    %v3113 = vadd.f32 %v3112, %v2716
    %v3114 = vadd.f32 %v3113, %v2717
    %v3115 = vadd.f32 %v3114, %v2718
    %v3116 = vadd.f32 %v3115, %v2719
    %v3117 = vsel %vm1730, %v2720, 0.0
    %v3118 = vadd.f32 %v3116, %v3117
    %3119 = vadd.xlane.f32.xlu0 %v3118
    %v3120 = vpop.xlane.xlu0 %3119
    %v3121 = vadd.f32 %v2721, %v2722
    %v3122 = vadd.f32 %v3121, %v2723
    %v3123 = vadd.f32 %v3122, %v2724
    %v3124 = vadd.f32 %v3123, %v2725
    %v3125 = vadd.f32 %v3124, %v2726
    %v3126 = vsel %vm1730, %v2727, 0.0
    %v3127 = vadd.f32 %v3125, %v3126
    %3128 = vadd.xlane.f32.xlu0 %v3127
    %v3129 = vpop.xlane.xlu0 %3128
    %v3130 = vadd.f32 %v2728, %v2729
    %v3131 = vadd.f32 %v3130, %v2730
    %v3132 = vadd.f32 %v3131, %v2731
    %v3133 = vadd.f32 %v3132, %v2732
    %v3134 = vadd.f32 %v3133, %v2733
    %v3135 = vsel %vm1730, %v2734, 0.0
    %v3136 = vadd.f32 %v3134, %v3135
    %3137 = vadd.xlane.f32.xlu0 %v3136
    %v3138 = vpop.xlane.xlu0 %3137
    %v3139 = vadd.f32 %v2735, %v2736
    %v3140 = vadd.f32 %v3139, %v2737
    %v3141 = vadd.f32 %v3140, %v2738
    %v3142 = vadd.f32 %v3141, %v2739
    %v3143 = vadd.f32 %v3142, %v2740
    %v3144 = vsel %vm1730, %v2741, 0.0
    %v3145 = vadd.f32 %v3143, %v3144
    %3146 = vadd.xlane.f32.xlu0 %v3145
    %v3147 = vpop.xlane.xlu0 %3146
    %v3148 = vadd.f32 %v2742, %v2743
    %v3149 = vadd.f32 %v3148, %v2744
    %v3150 = vadd.f32 %v3149, %v2745
    %v3151 = vadd.f32 %v3150, %v2746
    %v3152 = vadd.f32 %v3151, %v2747
    %v3153 = vsel %vm1730, %v2748, 0.0
    %v3154 = vadd.f32 %v3152, %v3153
    %3155 = vadd.xlane.f32.xlu0 %v3154
    %v3156 = vpop.xlane.xlu0 %3155
    %v3157 = vadd.f32 %v2749, %v2750
    %v3158 = vadd.f32 %v3157, %v2751
    %v3159 = vadd.f32 %v3158, %v2752
    %v3160 = vadd.f32 %v3159, %v2753
    %v3161 = vadd.f32 %v3160, %v2754
    %v3162 = vsel %vm1730, %v2755, 0.0
    %v3163 = vadd.f32 %v3161, %v3162
    %3164 = vadd.xlane.f32.xlu0 %v3163
    %v3165 = vpop.xlane.xlu0 %3164
    %v3166 = vadd.f32 %v2756, %v2757
    %v3167 = vadd.f32 %v3166, %v2758
    %v3168 = vadd.f32 %v3167, %v2759
    %v3169 = vadd.f32 %v3168, %v2760
    %v3170 = vadd.f32 %v3169, %v2761
    %v3171 = vsel %vm1730, %v2762, 0.0
    %v3172 = vadd.f32 %v3170, %v3171
    %3173 = vadd.xlane.f32.xlu0 %v3172
    %v3174 = vpop.xlane.xlu0 %3173
    %v3175 = vadd.f32 %v2763, %v2764
    %v3176 = vadd.f32 %v3175, %v2765
    %v3177 = vadd.f32 %v3176, %v2766
    %v3178 = vadd.f32 %v3177, %v2767
    %v3179 = vadd.f32 %v3178, %v2768
    %v3180 = vsel %vm1730, %v2769, 0.0
    %v3181 = vadd.f32 %v3179, %v3180
    %3182 = vadd.xlane.f32.xlu0 %v3181
    %v3183 = vpop.xlane.xlu0 %3182
    %v3184 = vadd.f32 %v2770, %v2771
    %v3185 = vadd.f32 %v3184, %v2772
    %v3186 = vadd.f32 %v3185, %v2773
    %v3187 = vadd.f32 %v3186, %v2774
    %v3188 = vadd.f32 %v3187, %v2775
    %v3189 = vsel %vm1730, %v2776, 0.0
    %v3190 = vadd.f32 %v3188, %v3189
    %3191 = vadd.xlane.f32.xlu0 %v3190
    %v3192 = vpop.xlane.xlu0 %3191
    %v3193 = vadd.f32 %v2777, %v2778
    %v3194 = vadd.f32 %v3193, %v2779
    %v3195 = vadd.f32 %v3194, %v2780
    %v3196 = vadd.f32 %v3195, %v2781
    %v3197 = vadd.f32 %v3196, %v2782
    %v3198 = vsel %vm1730, %v2783, 0.0
    %v3199 = vadd.f32 %v3197, %v3198
    %3200 = vadd.xlane.f32.xlu0 %v3199
    %v3201 = vpop.xlane.xlu0 %3200
    %v3202 = vadd.f32 %v2784, %v2785
    %v3203 = vadd.f32 %v3202, %v2786
    %v3204 = vadd.f32 %v3203, %v2787
    %v3205 = vadd.f32 %v3204, %v2788
    %v3206 = vadd.f32 %v3205, %v2789
    %v3207 = vsel %vm1730, %v2790, 0.0
    %v3208 = vadd.f32 %v3206, %v3207
    %3209 = vadd.xlane.f32.xlu0 %v3208
    %v3210 = vpop.xlane.xlu0 %3209
    %v3211 = vadd.f32 %v2791, %v2792
    %v3212 = vadd.f32 %v3211, %v2793
    %v3213 = vadd.f32 %v3212, %v2794
    %v3214 = vadd.f32 %v3213, %v2795
    %v3215 = vadd.f32 %v3214, %v2796
    %v3216 = vsel %vm1730, %v2797, 0.0
    %v3217 = vadd.f32 %v3215, %v3216
    %3218 = vadd.xlane.f32.xlu0 %v3217
    %v3219 = vpop.xlane.xlu0 %3218
    %v3220 = vadd.f32 %v2798, %v2799
    %v3221 = vadd.f32 %v3220, %v2800
    %v3222 = vadd.f32 %v3221, %v2801
    %v3223 = vadd.f32 %v3222, %v2802
    %v3224 = vadd.f32 %v3223, %v2803
    %v3225 = vsel %vm1730, %v2804, 0.0
    %v3226 = vadd.f32 %v3224, %v3225
    %3227 = vadd.xlane.f32.xlu0 %v3226
    %v3228 = vpop.xlane.xlu0 %3227
    %v3229 = vadd.f32 %v2805, %v2806
    %v3230 = vadd.f32 %v3229, %v2807
    %v3231 = vadd.f32 %v3230, %v2808
    %v3232 = vadd.f32 %v3231, %v2809
    %v3233 = vadd.f32 %v3232, %v2810
    %v3234 = vsel %vm1730, %v2811, 0.0
    %v3235 = vadd.f32 %v3233, %v3234
    %3236 = vadd.xlane.f32.xlu0 %v3235
    %v3237 = vpop.xlane.xlu0 %3236
    %v3238 = vadd.f32 %v2812, %v2813
    %v3239 = vadd.f32 %v3238, %v2814
    %v3240 = vadd.f32 %v3239, %v2815
    %v3241 = vadd.f32 %v3240, %v2816
    %v3242 = vadd.f32 %v3241, %v2817
    %v3243 = vsel %vm1730, %v2818, 0.0
    %v3244 = vadd.f32 %v3242, %v3243
    %3245 = vadd.xlane.f32.xlu0 %v3244
    %v3246 = vpop.xlane.xlu0 %3245
    %v3247 = vadd.f32 %v2819, %v2820
    %v3248 = vadd.f32 %v3247, %v2821
    %v3249 = vadd.f32 %v3248, %v2822
    %v3250 = vadd.f32 %v3249, %v2823
    %v3251 = vadd.f32 %v3250, %v2824
    %v3252 = vsel %vm1730, %v2825, 0.0
    %v3253 = vadd.f32 %v3251, %v3252
    %3254 = vadd.xlane.f32.xlu0 %v3253
    %v3255 = vpop.xlane.xlu0 %3254
    %v3256 = vadd.f32 %v2826, %v2827
    %v3257 = vadd.f32 %v3256, %v2828
    %v3258 = vadd.f32 %v3257, %v2829
    %v3259 = vadd.f32 %v3258, %v2830
    %v3260 = vadd.f32 %v3259, %v2831
    %v3261 = vsel %vm1730, %v2832, 0.0
    %v3262 = vadd.f32 %v3260, %v3261
    %3263 = vadd.xlane.f32.xlu0 %v3262
    %v3264 = vpop.xlane.xlu0 %3263
    %v3265 = vadd.f32 %v2833, %v2834
    %v3266 = vadd.f32 %v3265, %v2835
    %v3267 = vadd.f32 %v3266, %v2836
    %v3268 = vadd.f32 %v3267, %v2837
    %v3269 = vadd.f32 %v3268, %v2838
    %v3270 = vsel %vm1730, %v2839, 0.0
    %v3271 = vadd.f32 %v3269, %v3270
    %3272 = vadd.xlane.f32.xlu0 %v3271
    %v3273 = vpop.xlane.xlu0 %3272
    %v3274 = vadd.f32 %v2840, %v2841
    %v3275 = vadd.f32 %v3274, %v2842
    %v3276 = vadd.f32 %v3275, %v2843
    %v3277 = vadd.f32 %v3276, %v2844
    %v3278 = vadd.f32 %v3277, %v2845
    %v3279 = vsel %vm1730, %v2846, 0.0
    %v3280 = vadd.f32 %v3278, %v3279
    %3281 = vadd.xlane.f32.xlu0 %v3280
    %v3282 = vpop.xlane.xlu0 %3281
    %v3283 = vadd.f32 %v2847, %v2848
    %v3284 = vadd.f32 %v3283, %v2849
    %v3285 = vadd.f32 %v3284, %v2850
    %v3286 = vadd.f32 %v3285, %v2851
    %v3287 = vadd.f32 %v3286, %v2852
    %v3288 = vsel %vm1730, %v2853, 0.0
    %v3289 = vadd.f32 %v3287, %v3288
    %3290 = vadd.xlane.f32.xlu0 %v3289
    %v3291 = vpop.xlane.xlu0 %3290
    %v3292 = vadd.f32 %v2854, %v2855
    %v3293 = vadd.f32 %v3292, %v2856
    %v3294 = vadd.f32 %v3293, %v2857
    %v3295 = vadd.f32 %v3294, %v2858
    %v3296 = vadd.f32 %v3295, %v2859
    %v3297 = vsel %vm1730, %v2860, 0.0
    %v3298 = vadd.f32 %v3296, %v3297
    %3299 = vadd.xlane.f32.xlu0 %v3298
    %v3300 = vpop.xlane.xlu0 %3299
    %v3301 = vadd.f32 %v2861, %v2862
    %v3302 = vadd.f32 %v3301, %v2863
    %v3303 = vadd.f32 %v3302, %v2864
    %v3304 = vadd.f32 %v3303, %v2865
    %v3305 = vadd.f32 %v3304, %v2866
    %v3306 = vsel %vm1730, %v2867, 0.0
    %v3307 = vadd.f32 %v3305, %v3306
    %3308 = vadd.xlane.f32.xlu0 %v3307
    %v3309 = vpop.xlane.xlu0 %3308
    %v3310 = vadd.f32 %v2868, %v2869
    %v3311 = vadd.f32 %v3310, %v2870
    %v3312 = vadd.f32 %v3311, %v2871
    %v3313 = vadd.f32 %v3312, %v2872
    %v3314 = vadd.f32 %v3313, %v2873
    %v3315 = vsel %vm1730, %v2874, 0.0
    %v3316 = vadd.f32 %v3314, %v3315
    %3317 = vadd.xlane.f32.xlu0 %v3316
    %v3318 = vpop.xlane.xlu0 %3317
    %v3319 = vadd.f32 %v2875, %v2876
    %v3320 = vadd.f32 %v3319, %v2877
    %v3321 = vadd.f32 %v3320, %v2878
    %v3322 = vadd.f32 %v3321, %v2879
    %v3323 = vadd.f32 %v3322, %v2880
    %v3324 = vsel %vm1730, %v2881, 0.0
    %v3325 = vadd.f32 %v3323, %v3324
    %3326 = vadd.xlane.f32.xlu0 %v3325
    %v3327 = vpop.xlane.xlu0 %3326
    %v3328 = vadd.f32 %v2882, %v2883
    %v3329 = vadd.f32 %v3328, %v2884
    %v3330 = vadd.f32 %v3329, %v2885
    %v3331 = vadd.f32 %v3330, %v2886
    %v3332 = vadd.f32 %v3331, %v2887
    %v3333 = vsel %vm1730, %v2888, 0.0
    %v3334 = vadd.f32 %v3332, %v3333
    %3335 = vadd.xlane.f32.xlu0 %v3334
    %v3336 = vpop.xlane.xlu0 %3335
    %v3337 = vadd.f32 %v2889, %v2890
    %v3338 = vadd.f32 %v3337, %v2891
    %v3339 = vadd.f32 %v3338, %v2892
    %v3340 = vadd.f32 %v3339, %v2893
    %v3341 = vadd.f32 %v3340, %v2894
    %v3342 = vsel %vm1730, %v2895, 0.0
    %v3343 = vadd.f32 %v3341, %v3342
    %3344 = vadd.xlane.f32.xlu0 %v3343
    %v3345 = vpop.xlane.xlu0 %3344
    %v3346 = vadd.f32 %v2896, %v2897
    %v3347 = vadd.f32 %v3346, %v2898
    %v3348 = vadd.f32 %v3347, %v2899
    %v3349 = vadd.f32 %v3348, %v2900
    %v3350 = vadd.f32 %v3349, %v2901
    %v3351 = vsel %vm1730, %v2902, 0.0
    %v3352 = vadd.f32 %v3350, %v3351
    %3353 = vadd.xlane.f32.xlu0 %v3352
    %v3354 = vpop.xlane.xlu0 %3353
    %v3355 = vadd.f32 %v2903, %v2904
    %v3356 = vadd.f32 %v3355, %v2905
    %v3357 = vadd.f32 %v3356, %v2906
    %v3358 = vadd.f32 %v3357, %v2907
    %v3359 = vadd.f32 %v3358, %v2908
    %v3360 = vsel %vm1730, %v2909, 0.0
    %v3361 = vadd.f32 %v3359, %v3360
    %3362 = vadd.xlane.f32.xlu0 %v3361
    %v3363 = vpop.xlane.xlu0 %3362
    %v3364 = vadd.f32 %v2910, %v2911
    %v3365 = vadd.f32 %v3364, %v2912
    %v3366 = vadd.f32 %v3365, %v2913
    %v3367 = vadd.f32 %v3366, %v2914
    %v3368 = vadd.f32 %v3367, %v2915
    %v3369 = vsel %vm1730, %v2916, 0.0
    %v3370 = vadd.f32 %v3368, %v3369
    %3371 = vadd.xlane.f32.xlu0 %v3370
    %v3372 = vpop.xlane.xlu0 %3371
    %v3373 = vadd.f32 %v2917, %v2918
    %v3374 = vadd.f32 %v3373, %v2919
    %v3375 = vadd.f32 %v3374, %v2920
    %v3376 = vadd.f32 %v3375, %v2921
    %v3377 = vadd.f32 %v3376, %v2922
    %v3378 = vsel %vm1730, %v2923, 0.0
    %v3379 = vadd.f32 %v3377, %v3378
    %3380 = vadd.xlane.f32.xlu0 %v3379
    %v3381 = vpop.xlane.xlu0 %3380
    %v3382 = vadd.f32 %v2924, %v2925
    %v3383 = vadd.f32 %v3382, %v2926
    %v3384 = vadd.f32 %v3383, %v2927
    %v3385 = vadd.f32 %v3384, %v2928
    %v3386 = vadd.f32 %v3385, %v2929
    %v3387 = vsel %vm1730, %v2930, 0.0
    %v3388 = vadd.f32 %v3386, %v3387
    %3389 = vadd.xlane.f32.xlu0 %v3388
    %v3390 = vpop.xlane.xlu0 %3389
    %v3391 = vadd.f32 %v2931, %v2932
    %v3392 = vadd.f32 %v3391, %v2933
    %v3393 = vadd.f32 %v3392, %v2934
    %v3394 = vadd.f32 %v3393, %v2935
    %v3395 = vadd.f32 %v3394, %v2936
    %v3396 = vsel %vm1730, %v2937, 0.0
    %v3397 = vadd.f32 %v3395, %v3396
    %3398 = vadd.xlane.f32.xlu0 %v3397
    %v3399 = vpop.xlane.xlu0 %3398
    %v3400 = vadd.f32 %v2938, %v2939
    %v3401 = vadd.f32 %v3400, %v2940
    %v3402 = vadd.f32 %v3401, %v2941
    %v3403 = vadd.f32 %v3402, %v2942
    %v3404 = vadd.f32 %v3403, %v2943
    %v3405 = vsel %vm1730, %v2944, 0.0
    %v3406 = vadd.f32 %v3404, %v3405
    %3407 = vadd.xlane.f32.xlu0 %v3406
    %v3408 = vpop.xlane.xlu0 %3407
    %v3409 = vadd.f32 %v2945, %v2946
    %v3410 = vadd.f32 %v3409, %v2947
    %v3411 = vadd.f32 %v3410, %v2948
    %v3412 = vadd.f32 %v3411, %v2949
    %v3413 = vadd.f32 %v3412, %v2950
    %v3414 = vsel %vm1730, %v2951, 0.0
    %v3415 = vadd.f32 %v3413, %v3414
    %3416 = vadd.xlane.f32.xlu0 %v3415
    %v3417 = vpop.xlane.xlu0 %3416
    %v3418 = vadd.f32 %v2952, %v2953
    %v3419 = vadd.f32 %v3418, %v2954
    %v3420 = vadd.f32 %v3419, %v2955
    %v3421 = vadd.f32 %v3420, %v2956
    %v3422 = vadd.f32 %v3421, %v2957
    %v3423 = vsel %vm1730, %v2958, 0.0
    %v3424 = vadd.f32 %v3422, %v3423
    %3425 = vadd.xlane.f32.xlu0 %v3424
    %v3426 = vpop.xlane.xlu0 %3425
    %v3427 = vadd.f32 %v2959, %v2960
    %v3428 = vadd.f32 %v3427, %v2961
    %v3429 = vadd.f32 %v3428, %v2962
    %v3430 = vadd.f32 %v3429, %v2963
    %v3431 = vadd.f32 %v3430, %v2964
    %v3432 = vsel %vm1730, %v2965, 0.0
    %v3433 = vadd.f32 %v3431, %v3432
    %3434 = vadd.xlane.f32.xlu0 %v3433
    %v3435 = vpop.xlane.xlu0 %3434
    %v3436 = vadd.f32 %v2966, %v2967
    %v3437 = vadd.f32 %v3436, %v2968
    %v3438 = vadd.f32 %v3437, %v2969
    %v3439 = vadd.f32 %v3438, %v2970
    %v3440 = vadd.f32 %v3439, %v2971
    %v3441 = vsel %vm1730, %v2972, 0.0
    %v3442 = vadd.f32 %v3440, %v3441
    %3443 = vadd.xlane.f32.xlu0 %v3442
    %v3444 = vpop.xlane.xlu0 %3443
    %v3445 = vadd.f32 %v2973, %v2974
    %v3446 = vadd.f32 %v3445, %v2975
    %v3447 = vadd.f32 %v3446, %v2976
    %v3448 = vadd.f32 %v3447, %v2977
    %v3449 = vadd.f32 %v3448, %v2978
    %v3450 = vsel %vm1730, %v2979, 0.0
    %v3451 = vadd.f32 %v3449, %v3450
    %3452 = vadd.xlane.f32.xlu0 %v3451
    %v3453 = vpop.xlane.xlu0 %3452
    %v3454 = vadd.f32 %v2980, %v2981
    %v3455 = vadd.f32 %v3454, %v2982
    %v3456 = vadd.f32 %v3455, %v2983
    %v3457 = vadd.f32 %v3456, %v2984
    %v3458 = vadd.f32 %v3457, %v2985
    %v3459 = vsel %vm1730, %v2986, 0.0
    %v3460 = vadd.f32 %v3458, %v3459
    %3461 = vadd.xlane.f32.xlu0 %v3460
    %v3462 = vpop.xlane.xlu0 %3461
    %v3463 = vadd.f32 %v2987, %v2988
    %v3464 = vadd.f32 %v3463, %v2989
    %v3465 = vadd.f32 %v3464, %v2990
    %v3466 = vadd.f32 %v3465, %v2991
    %v3467 = vadd.f32 %v3466, %v2992
    %v3468 = vsel %vm1730, %v2993, 0.0
    %v3469 = vadd.f32 %v3467, %v3468
    %3470 = vadd.xlane.f32.xlu0 %v3469
    %v3471 = vpop.xlane.xlu0 %3470
    %v3472 = vadd.f32 %v2994, %v2995
    %v3473 = vadd.f32 %v3472, %v2996
    %v3474 = vadd.f32 %v3473, %v2997
    %v3475 = vadd.f32 %v3474, %v2998
    %v3476 = vadd.f32 %v3475, %v2999
    %v3477 = vsel %vm1730, %v3000, 0.0
    %v3478 = vadd.f32 %v3476, %v3477
    %3479 = vadd.xlane.f32.xlu0 %v3478
    %v3480 = vpop.xlane.xlu0 %3479
    %v3481 = vadd.f32 %v3001, %v3002
    %v3482 = vadd.f32 %v3481, %v3003
    %v3483 = vadd.f32 %v3482, %v3004
    %v3484 = vadd.f32 %v3483, %v3005
    %v3485 = vadd.f32 %v3484, %v3006
    %v3486 = vsel %vm1730, %v3007, 0.0
    %v3487 = vadd.f32 %v3485, %v3486
    %3488 = vadd.xlane.f32.xlu0 %v3487
    %v3489 = vpop.xlane.xlu0 %3488
    %v3490 = vadd.f32 %v3008, %v3009
    %v3491 = vadd.f32 %v3490, %v3010
    %v3492 = vadd.f32 %v3491, %v3011
    %v3493 = vadd.f32 %v3492, %v3012
    %v3494 = vadd.f32 %v3493, %v3013
    %v3495 = vsel %vm1730, %v3014, 0.0
    %v3496 = vadd.f32 %v3494, %v3495
    %3497 = vadd.xlane.f32.xlu0 %v3496
    %v3498 = vpop.xlane.xlu0 %3497
    %v3499 = vadd.f32 %v3015, %v3016
    %v3500 = vadd.f32 %v3499, %v3017
    %v3501 = vadd.f32 %v3500, %v3018
    %v3502 = vadd.f32 %v3501, %v3019
    %v3503 = vadd.f32 %v3502, %v3020
    %v3504 = vsel %vm1730, %v3021, 0.0
    %v3505 = vadd.f32 %v3503, %v3504
    %3506 = vadd.xlane.f32.xlu0 %v3505
    %v3507 = vpop.xlane.xlu0 %3506
    %v3508 = vmul.f32 %v3030, 0.0012755102
    %v3509 = vmul.f32 %v3039, 0.0012755102
    %v3510 = vmul.f32 %v3048, 0.0012755102
    %v3511 = vmul.f32 %v3057, 0.0012755102
    %v3512 = vmul.f32 %v3066, 0.0012755102
    %v3513 = vmul.f32 %v3075, 0.0012755102
    %v3514 = vmul.f32 %v3084, 0.0012755102
    %v3515 = vmul.f32 %v3093, 0.0012755102
    %v3516 = vmul.f32 %v3102, 0.0012755102
    %v3517 = vmul.f32 %v3111, 0.0012755102
    %v3518 = vmul.f32 %v3120, 0.0012755102
    %v3519 = vmul.f32 %v3129, 0.0012755102
    %v3520 = vmul.f32 %v3138, 0.0012755102
    %v3521 = vmul.f32 %v3147, 0.0012755102
    %v3522 = vmul.f32 %v3156, 0.0012755102
    %v3523 = vmul.f32 %v3165, 0.0012755102
    %v3524 = vmul.f32 %v3174, 0.0012755102
    %v3525 = vmul.f32 %v3183, 0.0012755102
    %v3526 = vmul.f32 %v3192, 0.0012755102
    %v3527 = vmul.f32 %v3201, 0.0012755102
    %v3528 = vmul.f32 %v3210, 0.0012755102
    %v3529 = vmul.f32 %v3219, 0.0012755102
    %v3530 = vmul.f32 %v3228, 0.0012755102
    %v3531 = vmul.f32 %v3237, 0.0012755102
    %v3532 = vmul.f32 %v3246, 0.0012755102
    %v3533 = vmul.f32 %v3255, 0.0012755102
    %v3534 = vmul.f32 %v3264, 0.0012755102
    %v3535 = vmul.f32 %v3273, 0.0012755102
    %v3536 = vmul.f32 %v3282, 0.0012755102
    %v3537 = vmul.f32 %v3291, 0.0012755102
    %v3538 = vmul.f32 %v3300, 0.0012755102
    %v3539 = vmul.f32 %v3309, 0.0012755102
    %v3540 = vmul.f32 %v3318, 0.0012755102
    %v3541 = vmul.f32 %v3327, 0.0012755102
    %v3542 = vmul.f32 %v3336, 0.0012755102
    %v3543 = vmul.f32 %v3345, 0.0012755102
    %v3544 = vmul.f32 %v3354, 0.0012755102
    %v3545 = vmul.f32 %v3363, 0.0012755102
    %v3546 = vmul.f32 %v3372, 0.0012755102
    %v3547 = vmul.f32 %v3381, 0.0012755102
    %v3548 = vmul.f32 %v3390, 0.0012755102
    %v3549 = vmul.f32 %v3399, 0.0012755102
    %v3550 = vmul.f32 %v3408, 0.0012755102
    %v3551 = vmul.f32 %v3417, 0.0012755102
    %v3552 = vmul.f32 %v3426, 0.0012755102
    %v3553 = vmul.f32 %v3435, 0.0012755102
    %v3554 = vmul.f32 %v3444, 0.0012755102
    %v3555 = vmul.f32 %v3453, 0.0012755102
    %v3556 = vmul.f32 %v3462, 0.0012755102
    %v3557 = vmul.f32 %v3471, 0.0012755102
    %v3558 = vmul.f32 %v3480, 0.0012755102
    %v3559 = vmul.f32 %v3489, 0.0012755102
    %v3560 = vmul.f32 %v3498, 0.0012755102
    %v3561 = vmul.f32 %v3507, 0.0012755102
    %v3562 = vadd.f32 %v3508, 1e-05
    %v3563 = vadd.f32 %v3509, 1e-05
    %v3564 = vadd.f32 %v3510, 1e-05
    %v3565 = vadd.f32 %v3511, 1e-05
    %v3566 = vadd.f32 %v3512, 1e-05
    %v3567 = vadd.f32 %v3513, 1e-05
    %v3568 = vadd.f32 %v3514, 1e-05
    %v3569 = vadd.f32 %v3515, 1e-05
    %v3570 = vadd.f32 %v3516, 1e-05
    %v3571 = vadd.f32 %v3517, 1e-05
    %v3572 = vadd.f32 %v3518, 1e-05
    %v3573 = vadd.f32 %v3519, 1e-05
    %v3574 = vadd.f32 %v3520, 1e-05
    %v3575 = vadd.f32 %v3521, 1e-05
    %v3576 = vadd.f32 %v3522, 1e-05
    %v3577 = vadd.f32 %v3523, 1e-05
    %v3578 = vadd.f32 %v3524, 1e-05
    %v3579 = vadd.f32 %v3525, 1e-05
    %v3580 = vadd.f32 %v3526, 1e-05
    %v3581 = vadd.f32 %v3527, 1e-05
    %v3582 = vadd.f32 %v3528, 1e-05
    %v3583 = vadd.f32 %v3529, 1e-05
    %v3584 = vadd.f32 %v3530, 1e-05
    %v3585 = vadd.f32 %v3531, 1e-05
    %v3586 = vadd.f32 %v3532, 1e-05
    %v3587 = vadd.f32 %v3533, 1e-05
    %v3588 = vadd.f32 %v3534, 1e-05
    %v3589 = vadd.f32 %v3535, 1e-05
    %v3590 = vadd.f32 %v3536, 1e-05
    %v3591 = vadd.f32 %v3537, 1e-05
    %v3592 = vadd.f32 %v3538, 1e-05
    %v3593 = vadd.f32 %v3539, 1e-05
    %v3594 = vadd.f32 %v3540, 1e-05
    %v3595 = vadd.f32 %v3541, 1e-05
    %v3596 = vadd.f32 %v3542, 1e-05
    %v3597 = vadd.f32 %v3543, 1e-05
    %v3598 = vadd.f32 %v3544, 1e-05
    %v3599 = vadd.f32 %v3545, 1e-05
    %v3600 = vadd.f32 %v3546, 1e-05
    %v3601 = vadd.f32 %v3547, 1e-05
    %v3602 = vadd.f32 %v3548, 1e-05
    %v3603 = vadd.f32 %v3549, 1e-05
    %v3604 = vadd.f32 %v3550, 1e-05
    %v3605 = vadd.f32 %v3551, 1e-05
    %v3606 = vadd.f32 %v3552, 1e-05
    %v3607 = vadd.f32 %v3553, 1e-05
    %v3608 = vadd.f32 %v3554, 1e-05
    %v3609 = vadd.f32 %v3555, 1e-05
    %v3610 = vadd.f32 %v3556, 1e-05
    %v3611 = vadd.f32 %v3557, 1e-05
    %v3612 = vadd.f32 %v3558, 1e-05
    %v3613 = vadd.f32 %v3559, 1e-05
    %v3614 = vadd.f32 %v3560, 1e-05
    %v3615 = vadd.f32 %v3561, 1e-05
    %v3616 = vrsqrt.pop %v3562
    %v3617 = vrsqrt.pop %v3563
    %v3618 = vrsqrt.pop %v3564
    %v3619 = vrsqrt.pop %v3565
    %v3620 = vrsqrt.pop %v3566
    %v3621 = vrsqrt.pop %v3567
    %v3622 = vrsqrt.pop %v3568
    %v3623 = vrsqrt.pop %v3569
    %v3624 = vrsqrt.pop %v3570
    %v3625 = vrsqrt.pop %v3571
    %v3626 = vrsqrt.pop %v3572
    %v3627 = vrsqrt.pop %v3573
    %v3628 = vrsqrt.pop %v3574
    %v3629 = vrsqrt.pop %v3575
    %v3630 = vrsqrt.pop %v3576
    %v3631 = vrsqrt.pop %v3577
    %v3632 = vrsqrt.pop %v3578
    %v3633 = vrsqrt.pop %v3579
    %v3634 = vrsqrt.pop %v3580
    %v3635 = vrsqrt.pop %v3581
    %v3636 = vrsqrt.pop %v3582
    %v3637 = vrsqrt.pop %v3583
    %v3638 = vrsqrt.pop %v3584
    %v3639 = vrsqrt.pop %v3585
    %v3640 = vrsqrt.pop %v3586
    %v3641 = vrsqrt.pop %v3587
    %v3642 = vrsqrt.pop %v3588
    %v3643 = vrsqrt.pop %v3589
    %v3644 = vrsqrt.pop %v3590
    %v3645 = vrsqrt.pop %v3591
    %v3646 = vrsqrt.pop %v3592
    %v3647 = vrsqrt.pop %v3593
    %v3648 = vrsqrt.pop %v3594
    %v3649 = vrsqrt.pop %v3595
    %v3650 = vrsqrt.pop %v3596
    %v3651 = vrsqrt.pop %v3597
    %v3652 = vrsqrt.pop %v3598
    %v3653 = vrsqrt.pop %v3599
    %v3654 = vrsqrt.pop %v3600
    %v3655 = vrsqrt.pop %v3601
    %v3656 = vrsqrt.pop %v3602
    %v3657 = vrsqrt.pop %v3603
    %v3658 = vrsqrt.pop %v3604
    %v3659 = vrsqrt.pop %v3605
    %v3660 = vrsqrt.pop %v3606
    %v3661 = vrsqrt.pop %v3607
    %v3662 = vrsqrt.pop %v3608
    %v3663 = vrsqrt.pop %v3609
    %v3664 = vrsqrt.pop %v3610
    %v3665 = vrsqrt.pop %v3611
    %v3666 = vrsqrt.pop %v3612
    %v3667 = vrsqrt.pop %v3613
    %v3668 = vrsqrt.pop %v3614
    %v3669 = vrsqrt.pop %v3615
    %v3670 = vld [vmem:[%s3] sm:$0xff]
    %v3671 = vld [vmem:[%s3 + $0x8] sm:$0xff]
    %v3672 = vld [vmem:[%s3 + $0x10] sm:$0xff]
    %v3673 = vld [vmem:[%s3 + $0x18] sm:$0xff]
    %v3674 = vld [vmem:[%s3 + $0x20] sm:$0xff]
    %v3675 = vld [vmem:[%s3 + $0x28] sm:$0xff]
    %v3676 = vld [vmem:[%s3 + $0x30] sm:$0xff]
    %v3677 = vld [vmem:[%s3 + $0x38] sm:$0xff]
    %v3678 = vld [vmem:[%s3 + $0x40] sm:$0xff]
    %v3679 = vld [vmem:[%s3 + $0x48] sm:$0xff]
    %v3680 = vld [vmem:[%s3 + $0x50] sm:$0xff]
    %v3681 = vld [vmem:[%s3 + $0x58] sm:$0xff]
    %v3682 = vld [vmem:[%s3 + $0x60] sm:$0xff]
    %v3683 = vld [vmem:[%s3 + $0x68] sm:$0xff]
    %v3684 = vld [vmem:[%s3 + $0x70] sm:$0xff]
    %v3685 = vld [vmem:[%s3 + $0x78] sm:$0xff]
    %v3686 = vld [vmem:[%s3 + $0x80] sm:$0xff]
    %v3687 = vld [vmem:[%s3 + $0x88] sm:$0xff]
    %v3688 = vld [vmem:[%s3 + $0x90] sm:$0xff]
    %v3689 = vld [vmem:[%s3 + $0x98] sm:$0xff]
    %v3690 = vld [vmem:[%s3 + $0xa0] sm:$0xff]
    %v3691 = vld [vmem:[%s3 + $0xa8] sm:$0xff]
    %v3692 = vld [vmem:[%s3 + $0xb0] sm:$0xff]
    %v3693 = vld [vmem:[%s3 + $0xb8] sm:$0xff]
    %v3694 = vld [vmem:[%s3 + $0xc0] sm:$0xff]
    %v3695 = vld [vmem:[%s3 + $0xc8] sm:$0xff]
    %v3696 = vld [vmem:[%s3 + $0xd0] sm:$0xff]
    %v3697 = vld [vmem:[%s3 + $0xd8] sm:$0xff]
    %v3698 = vld [vmem:[%s3 + $0xe0] sm:$0xff]
    %v3699 = vld [vmem:[%s3 + $0xe8] sm:$0xff]
    %v3700 = vld [vmem:[%s3 + $0xf0] sm:$0xff]
    %v3701 = vld [vmem:[%s3 + $0xf8] sm:$0xff]
    %v3702 = vld [vmem:[%s3 + $0x100] sm:$0xff]
    %v3703 = vld [vmem:[%s3 + $0x108] sm:$0xff]
    %v3704 = vld [vmem:[%s3 + $0x110] sm:$0xff]
    %v3705 = vld [vmem:[%s3 + $0x118] sm:$0xff]
    %v3706 = vld [vmem:[%s3 + $0x120] sm:$0xff]
    %v3707 = vld [vmem:[%s3 + $0x128] sm:$0xff]
    %v3708 = vld [vmem:[%s3 + $0x130] sm:$0xff]
    %v3709 = vld [vmem:[%s3 + $0x138] sm:$0xff]
    %v3710 = vld [vmem:[%s3 + $0x140] sm:$0xff]
    %v3711 = vld [vmem:[%s3 + $0x148] sm:$0xff]
    %v3712 = vld [vmem:[%s3 + $0x150] sm:$0xff]
    %v3713 = vld [vmem:[%s3 + $0x158] sm:$0xff]
    %v3714 = vld [vmem:[%s3 + $0x160] sm:$0xff]
    %v3715 = vld [vmem:[%s3 + $0x168] sm:$0xff]
    %v3716 = vld [vmem:[%s3 + $0x170] sm:$0xff]
    %v3717 = vld [vmem:[%s3 + $0x178] sm:$0xff]
    %v3718 = vld [vmem:[%s3 + $0x180] sm:$0xff]
    %v3719 = vld [vmem:[%s3 + $0x188] sm:$0xff]
    %v3720 = vld [vmem:[%s3 + $0x190] sm:$0xff]
    %v3721 = vld [vmem:[%s3 + $0x198] sm:$0xff]
    %v3722 = vld [vmem:[%s3 + $0x1a0] sm:$0xff]
    %v3723 = vld [vmem:[%s3 + $0x1a8] sm:$0xff]
    %v3724 = vmul.f32 %v3670, %v3616
    %v3725 = vmul.f32 %v3671, %v3617
    %v3726 = vmul.f32 %v3672, %v3618
    %v3727 = vmul.f32 %v3673, %v3619
    %v3728 = vmul.f32 %v3674, %v3620
    %v3729 = vmul.f32 %v3675, %v3621
    %v3730 = vmul.f32 %v3676, %v3622
    %v3731 = vmul.f32 %v3677, %v3623
    %v3732 = vmul.f32 %v3678, %v3624
    %v3733 = vmul.f32 %v3679, %v3625
    %v3734 = vmul.f32 %v3680, %v3626
    %v3735 = vmul.f32 %v3681, %v3627
    %v3736 = vmul.f32 %v3682, %v3628
    %v3737 = vmul.f32 %v3683, %v3629
    %v3738 = vmul.f32 %v3684, %v3630
    %v3739 = vmul.f32 %v3685, %v3631
    %v3740 = vmul.f32 %v3686, %v3632
    %v3741 = vmul.f32 %v3687, %v3633
    %v3742 = vmul.f32 %v3688, %v3634
    %v3743 = vmul.f32 %v3689, %v3635
    %v3744 = vmul.f32 %v3690, %v3636
    %v3745 = vmul.f32 %v3691, %v3637
    %v3746 = vmul.f32 %v3692, %v3638
    %v3747 = vmul.f32 %v3693, %v3639
    %v3748 = vmul.f32 %v3694, %v3640
    %v3749 = vmul.f32 %v3695, %v3641
    %v3750 = vmul.f32 %v3696, %v3642
    %v3751 = vmul.f32 %v3697, %v3643
    %v3752 = vmul.f32 %v3698, %v3644
    %v3753 = vmul.f32 %v3699, %v3645
    %v3754 = vmul.f32 %v3700, %v3646
    %v3755 = vmul.f32 %v3701, %v3647
    %v3756 = vmul.f32 %v3702, %v3648
    %v3757 = vmul.f32 %v3703, %v3649
    %v3758 = vmul.f32 %v3704, %v3650
    %v3759 = vmul.f32 %v3705, %v3651
    %v3760 = vmul.f32 %v3706, %v3652
    %v3761 = vmul.f32 %v3707, %v3653
    %v3762 = vmul.f32 %v3708, %v3654
    %v3763 = vmul.f32 %v3709, %v3655
    %v3764 = vmul.f32 %v3710, %v3656
    %v3765 = vmul.f32 %v3711, %v3657
    %v3766 = vmul.f32 %v3712, %v3658
    %v3767 = vmul.f32 %v3713, %v3659
    %v3768 = vmul.f32 %v3714, %v3660
    %v3769 = vmul.f32 %v3715, %v3661
    %v3770 = vmul.f32 %v3716, %v3662
    %v3771 = vmul.f32 %v3717, %v3663
    %v3772 = vmul.f32 %v3718, %v3664
    %v3773 = vmul.f32 %v3719, %v3665
    %v3774 = vmul.f32 %v3720, %v3666
    %v3775 = vmul.f32 %v3721, %v3667
    %v3776 = vmul.f32 %v3722, %v3668
    %v3777 = vmul.f32 %v3723, %v3669
    %3779 = vset.pattern.permute.xlu0 0
    %3780 = vperm.xlu0 %3779, %v3724
    %v3781 = vpop.permute.xlu0 %3780
    %3784 = vset.pattern.permute.xlu0 0
    %3785 = vperm.xlu0 %3784, %v3725
    %v3786 = vpop.permute.xlu0 %3785
    %3789 = vset.pattern.permute.xlu0 0
    %3790 = vperm.xlu0 %3789, %v3726
    %v3791 = vpop.permute.xlu0 %3790
    %3794 = vset.pattern.permute.xlu0 0
    %3795 = vperm.xlu0 %3794, %v3727
    %v3796 = vpop.permute.xlu0 %3795
    %3799 = vset.pattern.permute.xlu0 0
    %3800 = vperm.xlu0 %3799, %v3728
    %v3801 = vpop.permute.xlu0 %3800
    %3804 = vset.pattern.permute.xlu0 0
    %3805 = vperm.xlu0 %3804, %v3729
    %v3806 = vpop.permute.xlu0 %3805
    %3809 = vset.pattern.permute.xlu0 0
    %3810 = vperm.xlu0 %3809, %v3730
    %v3811 = vpop.permute.xlu0 %3810
    %3814 = vset.pattern.permute.xlu0 0
    %3815 = vperm.xlu0 %3814, %v3731
    %v3816 = vpop.permute.xlu0 %3815
    %3819 = vset.pattern.permute.xlu0 0
    %3820 = vperm.xlu0 %3819, %v3732
    %v3821 = vpop.permute.xlu0 %3820
    %3824 = vset.pattern.permute.xlu0 0
    %3825 = vperm.xlu0 %3824, %v3733
    %v3826 = vpop.permute.xlu0 %3825
    %3829 = vset.pattern.permute.xlu0 0
    %3830 = vperm.xlu0 %3829, %v3734
    %v3831 = vpop.permute.xlu0 %3830
    %3834 = vset.pattern.permute.xlu0 0
    %3835 = vperm.xlu0 %3834, %v3735
    %v3836 = vpop.permute.xlu0 %3835
    %3839 = vset.pattern.permute.xlu0 0
    %3840 = vperm.xlu0 %3839, %v3736
    %v3841 = vpop.permute.xlu0 %3840
    %3844 = vset.pattern.permute.xlu0 0
    %3845 = vperm.xlu0 %3844, %v3737
    %v3846 = vpop.permute.xlu0 %3845
    %3849 = vset.pattern.permute.xlu0 0
    %3850 = vperm.xlu0 %3849, %v3738
    %v3851 = vpop.permute.xlu0 %3850
    %3854 = vset.pattern.permute.xlu0 0
    %3855 = vperm.xlu0 %3854, %v3739
    %v3856 = vpop.permute.xlu0 %3855
    %3859 = vset.pattern.permute.xlu0 0
    %3860 = vperm.xlu0 %3859, %v3740
    %v3861 = vpop.permute.xlu0 %3860
    %3864 = vset.pattern.permute.xlu0 0
    %3865 = vperm.xlu0 %3864, %v3741
    %v3866 = vpop.permute.xlu0 %3865
    %3869 = vset.pattern.permute.xlu0 0
    %3870 = vperm.xlu0 %3869, %v3742
    %v3871 = vpop.permute.xlu0 %3870
    %3874 = vset.pattern.permute.xlu0 0
    %3875 = vperm.xlu0 %3874, %v3743
    %v3876 = vpop.permute.xlu0 %3875
    %3879 = vset.pattern.permute.xlu0 0
    %3880 = vperm.xlu0 %3879, %v3744
    %v3881 = vpop.permute.xlu0 %3880
    %3884 = vset.pattern.permute.xlu0 0
    %3885 = vperm.xlu0 %3884, %v3745
    %v3886 = vpop.permute.xlu0 %3885
    %3889 = vset.pattern.permute.xlu0 0
    %3890 = vperm.xlu0 %3889, %v3746
    %v3891 = vpop.permute.xlu0 %3890
    %3894 = vset.pattern.permute.xlu0 0
    %3895 = vperm.xlu0 %3894, %v3747
    %v3896 = vpop.permute.xlu0 %3895
    %3899 = vset.pattern.permute.xlu0 0
    %3900 = vperm.xlu0 %3899, %v3748
    %v3901 = vpop.permute.xlu0 %3900
    %3904 = vset.pattern.permute.xlu0 0
    %3905 = vperm.xlu0 %3904, %v3749
    %v3906 = vpop.permute.xlu0 %3905
    %3909 = vset.pattern.permute.xlu0 0
    %3910 = vperm.xlu0 %3909, %v3750
    %v3911 = vpop.permute.xlu0 %3910
    %3914 = vset.pattern.permute.xlu0 0
    %3915 = vperm.xlu0 %3914, %v3751
    %v3916 = vpop.permute.xlu0 %3915
    %3919 = vset.pattern.permute.xlu0 0
    %3920 = vperm.xlu0 %3919, %v3752
    %v3921 = vpop.permute.xlu0 %3920
    %3924 = vset.pattern.permute.xlu0 0
    %3925 = vperm.xlu0 %3924, %v3753
    %v3926 = vpop.permute.xlu0 %3925
    %3929 = vset.pattern.permute.xlu0 0
    %3930 = vperm.xlu0 %3929, %v3754
    %v3931 = vpop.permute.xlu0 %3930
    %3934 = vset.pattern.permute.xlu0 0
    %3935 = vperm.xlu0 %3934, %v3755
    %v3936 = vpop.permute.xlu0 %3935
    %3939 = vset.pattern.permute.xlu0 0
    %3940 = vperm.xlu0 %3939, %v3756
    %v3941 = vpop.permute.xlu0 %3940
    %3944 = vset.pattern.permute.xlu0 0
    %3945 = vperm.xlu0 %3944, %v3757
    %v3946 = vpop.permute.xlu0 %3945
    %3949 = vset.pattern.permute.xlu0 0
    %3950 = vperm.xlu0 %3949, %v3758
    %v3951 = vpop.permute.xlu0 %3950
    %3954 = vset.pattern.permute.xlu0 0
    %3955 = vperm.xlu0 %3954, %v3759
    %v3956 = vpop.permute.xlu0 %3955
    %3959 = vset.pattern.permute.xlu0 0
    %3960 = vperm.xlu0 %3959, %v3760
    %v3961 = vpop.permute.xlu0 %3960
    %3964 = vset.pattern.permute.xlu0 0
    %3965 = vperm.xlu0 %3964, %v3761
    %v3966 = vpop.permute.xlu0 %3965
    %3969 = vset.pattern.permute.xlu0 0
    %3970 = vperm.xlu0 %3969, %v3762
    %v3971 = vpop.permute.xlu0 %3970
    %3974 = vset.pattern.permute.xlu0 0
    %3975 = vperm.xlu0 %3974, %v3763
    %v3976 = vpop.permute.xlu0 %3975
    %3979 = vset.pattern.permute.xlu0 0
    %3980 = vperm.xlu0 %3979, %v3764
    %v3981 = vpop.permute.xlu0 %3980
    %3984 = vset.pattern.permute.xlu0 0
    %3985 = vperm.xlu0 %3984, %v3765
    %v3986 = vpop.permute.xlu0 %3985
    %3989 = vset.pattern.permute.xlu0 0
    %3990 = vperm.xlu0 %3989, %v3766
    %v3991 = vpop.permute.xlu0 %3990
    %3994 = vset.pattern.permute.xlu0 0
    %3995 = vperm.xlu0 %3994, %v3767
    %v3996 = vpop.permute.xlu0 %3995
    %3999 = vset.pattern.permute.xlu0 0
    %4000 = vperm.xlu0 %3999, %v3768
    %v4001 = vpop.permute.xlu0 %4000
    %4004 = vset.pattern.permute.xlu0 0
    %4005 = vperm.xlu0 %4004, %v3769
    %v4006 = vpop.permute.xlu0 %4005
    %4009 = vset.pattern.permute.xlu0 0
    %4010 = vperm.xlu0 %4009, %v3770
    %v4011 = vpop.permute.xlu0 %4010
    %4014 = vset.pattern.permute.xlu0 0
    %4015 = vperm.xlu0 %4014, %v3771
    %v4016 = vpop.permute.xlu0 %4015
    %4019 = vset.pattern.permute.xlu0 0
    %4020 = vperm.xlu0 %4019, %v3772
    %v4021 = vpop.permute.xlu0 %4020
    %4024 = vset.pattern.permute.xlu0 0
    %4025 = vperm.xlu0 %4024, %v3773
    %v4026 = vpop.permute.xlu0 %4025
    %4029 = vset.pattern.permute.xlu0 0
    %4030 = vperm.xlu0 %4029, %v3774
    %v4031 = vpop.permute.xlu0 %4030
    %4034 = vset.pattern.permute.xlu0 0
    %4035 = vperm.xlu0 %4034, %v3775
    %v4036 = vpop.permute.xlu0 %4035
    %4039 = vset.pattern.permute.xlu0 0
    %4040 = vperm.xlu0 %4039, %v3776
    %v4041 = vpop.permute.xlu0 %4040
    %4044 = vset.pattern.permute.xlu0 0
    %4045 = vperm.xlu0 %4044, %v3777
    %v4046 = vpop.permute.xlu0 %4045
    %v4048 = vmul.f32 %v2266, %v3781
    %v4049 = vmul.f32 %v2267, %v3781
    %v4050 = vmul.f32 %v2268, %v3781
    %v4051 = vmul.f32 %v2269, %v3781
    %v4052 = vmul.f32 %v2270, %v3781
    %v4053 = vmul.f32 %v2271, %v3781
    %v4054 = vmul.f32 %v2272, %v3781
    %v4055 = vmul.f32 %v2273, %v3786
    %v4056 = vmul.f32 %v2274, %v3786
    %v4057 = vmul.f32 %v2275, %v3786
    %v4058 = vmul.f32 %v2276, %v3786
    %v4059 = vmul.f32 %v2277, %v3786
    %v4060 = vmul.f32 %v2278, %v3786
    %v4061 = vmul.f32 %v2279, %v3786
    %v4062 = vmul.f32 %v2280, %v3791
    %v4063 = vmul.f32 %v2281, %v3791
    %v4064 = vmul.f32 %v2282, %v3791
    %v4065 = vmul.f32 %v2283, %v3791
    %v4066 = vmul.f32 %v2284, %v3791
    %v4067 = vmul.f32 %v2285, %v3791
    %v4068 = vmul.f32 %v2286, %v3791
    %v4069 = vmul.f32 %v2287, %v3796
    %v4070 = vmul.f32 %v2288, %v3796
    %v4071 = vmul.f32 %v2289, %v3796
    %v4072 = vmul.f32 %v2290, %v3796
    %v4073 = vmul.f32 %v2291, %v3796
    %v4074 = vmul.f32 %v2292, %v3796
    %v4075 = vmul.f32 %v2293, %v3796
    %v4076 = vmul.f32 %v2294, %v3801
    %v4077 = vmul.f32 %v2295, %v3801
    %v4078 = vmul.f32 %v2296, %v3801
    %v4079 = vmul.f32 %v2297, %v3801
    %v4080 = vmul.f32 %v2298, %v3801
    %v4081 = vmul.f32 %v2299, %v3801
    %v4082 = vmul.f32 %v2300, %v3801
    %v4083 = vmul.f32 %v2301, %v3806
    %v4084 = vmul.f32 %v2302, %v3806
    %v4085 = vmul.f32 %v2303, %v3806
    %v4086 = vmul.f32 %v2304, %v3806
    %v4087 = vmul.f32 %v2305, %v3806
    %v4088 = vmul.f32 %v2306, %v3806
    %v4089 = vmul.f32 %v2307, %v3806
    %v4090 = vmul.f32 %v2308, %v3811
    %v4091 = vmul.f32 %v2309, %v3811
    %v4092 = vmul.f32 %v2310, %v3811
    %v4093 = vmul.f32 %v2311, %v3811
    %v4094 = vmul.f32 %v2312, %v3811
    %v4095 = vmul.f32 %v2313, %v3811
    %v4096 = vmul.f32 %v2314, %v3811
    %v4097 = vmul.f32 %v2315, %v3816
    %v4098 = vmul.f32 %v2316, %v3816
    %v4099 = vmul.f32 %v2317, %v3816
    %v4100 = vmul.f32 %v2318, %v3816
    %v4101 = vmul.f32 %v2319, %v3816
    %v4102 = vmul.f32 %v2320, %v3816
    %v4103 = vmul.f32 %v2321, %v3816
    %v4104 = vmul.f32 %v2322, %v3821
    %v4105 = vmul.f32 %v2323, %v3821
    %v4106 = vmul.f32 %v2324, %v3821
    %v4107 = vmul.f32 %v2325, %v3821
    %v4108 = vmul.f32 %v2326, %v3821
    %v4109 = vmul.f32 %v2327, %v3821
    %v4110 = vmul.f32 %v2328, %v3821
    %v4111 = vmul.f32 %v2329, %v3826
    %v4112 = vmul.f32 %v2330, %v3826
    %v4113 = vmul.f32 %v2331, %v3826
    %v4114 = vmul.f32 %v2332, %v3826
    %v4115 = vmul.f32 %v2333, %v3826
    %v4116 = vmul.f32 %v2334, %v3826
    %v4117 = vmul.f32 %v2335, %v3826
    %v4118 = vmul.f32 %v2336, %v3831
    %v4119 = vmul.f32 %v2337, %v3831
    %v4120 = vmul.f32 %v2338, %v3831
    %v4121 = vmul.f32 %v2339, %v3831
    %v4122 = vmul.f32 %v2340, %v3831
    %v4123 = vmul.f32 %v2341, %v3831
    %v4124 = vmul.f32 %v2342, %v3831
    %v4125 = vmul.f32 %v2343, %v3836
    %v4126 = vmul.f32 %v2344, %v3836
    %v4127 = vmul.f32 %v2345, %v3836
    %v4128 = vmul.f32 %v2346, %v3836
    %v4129 = vmul.f32 %v2347, %v3836
    %v4130 = vmul.f32 %v2348, %v3836
    %v4131 = vmul.f32 %v2349, %v3836
    %v4132 = vmul.f32 %v2350, %v3841
    %v4133 = vmul.f32 %v2351, %v3841
    %v4134 = vmul.f32 %v2352, %v3841
    %v4135 = vmul.f32 %v2353, %v3841
    %v4136 = vmul.f32 %v2354, %v3841
    %v4137 = vmul.f32 %v2355, %v3841
    %v4138 = vmul.f32 %v2356, %v3841
    %v4139 = vmul.f32 %v2357, %v3846
    %v4140 = vmul.f32 %v2358, %v3846
    %v4141 = vmul.f32 %v2359, %v3846
    %v4142 = vmul.f32 %v2360, %v3846
    %v4143 = vmul.f32 %v2361, %v3846
    %v4144 = vmul.f32 %v2362, %v3846
    %v4145 = vmul.f32 %v2363, %v3846
    %v4146 = vmul.f32 %v2364, %v3851
    %v4147 = vmul.f32 %v2365, %v3851
    %v4148 = vmul.f32 %v2366, %v3851
    %v4149 = vmul.f32 %v2367, %v3851
    %v4150 = vmul.f32 %v2368, %v3851
    %v4151 = vmul.f32 %v2369, %v3851
    %v4152 = vmul.f32 %v2370, %v3851
    %v4153 = vmul.f32 %v2371, %v3856
    %v4154 = vmul.f32 %v2372, %v3856
    %v4155 = vmul.f32 %v2373, %v3856
    %v4156 = vmul.f32 %v2374, %v3856
    %v4157 = vmul.f32 %v2375, %v3856
    %v4158 = vmul.f32 %v2376, %v3856
    %v4159 = vmul.f32 %v2377, %v3856
    %v4160 = vmul.f32 %v2378, %v3861
    %v4161 = vmul.f32 %v2379, %v3861
    %v4162 = vmul.f32 %v2380, %v3861
    %v4163 = vmul.f32 %v2381, %v3861
    %v4164 = vmul.f32 %v2382, %v3861
    %v4165 = vmul.f32 %v2383, %v3861
    %v4166 = vmul.f32 %v2384, %v3861
    %v4167 = vmul.f32 %v2385, %v3866
    %v4168 = vmul.f32 %v2386, %v3866
    %v4169 = vmul.f32 %v2387, %v3866
    %v4170 = vmul.f32 %v2388, %v3866
    %v4171 = vmul.f32 %v2389, %v3866
    %v4172 = vmul.f32 %v2390, %v3866
    %v4173 = vmul.f32 %v2391, %v3866
    %v4174 = vmul.f32 %v2392, %v3871
    %v4175 = vmul.f32 %v2393, %v3871
    %v4176 = vmul.f32 %v2394, %v3871
    %v4177 = vmul.f32 %v2395, %v3871
    %v4178 = vmul.f32 %v2396, %v3871
    %v4179 = vmul.f32 %v2397, %v3871
    %v4180 = vmul.f32 %v2398, %v3871
    %v4181 = vmul.f32 %v2399, %v3876
    %v4182 = vmul.f32 %v2400, %v3876
    %v4183 = vmul.f32 %v2401, %v3876
    %v4184 = vmul.f32 %v2402, %v3876
    %v4185 = vmul.f32 %v2403, %v3876
    %v4186 = vmul.f32 %v2404, %v3876
    %v4187 = vmul.f32 %v2405, %v3876
    %v4188 = vmul.f32 %v2406, %v3881
    %v4189 = vmul.f32 %v2407, %v3881
    %v4190 = vmul.f32 %v2408, %v3881
    %v4191 = vmul.f32 %v2409, %v3881
    %v4192 = vmul.f32 %v2410, %v3881
    %v4193 = vmul.f32 %v2411, %v3881
    %v4194 = vmul.f32 %v2412, %v3881
    %v4195 = vmul.f32 %v2413, %v3886
    %v4196 = vmul.f32 %v2414, %v3886
    %v4197 = vmul.f32 %v2415, %v3886
    %v4198 = vmul.f32 %v2416, %v3886
    %v4199 = vmul.f32 %v2417, %v3886
    %v4200 = vmul.f32 %v2418, %v3886
    %v4201 = vmul.f32 %v2419, %v3886
    %v4202 = vmul.f32 %v2420, %v3891
    %v4203 = vmul.f32 %v2421, %v3891
    %v4204 = vmul.f32 %v2422, %v3891
    %v4205 = vmul.f32 %v2423, %v3891
    %v4206 = vmul.f32 %v2424, %v3891
    %v4207 = vmul.f32 %v2425, %v3891
    %v4208 = vmul.f32 %v2426, %v3891
    %v4209 = vmul.f32 %v2427, %v3896
    %v4210 = vmul.f32 %v2428, %v3896
    %v4211 = vmul.f32 %v2429, %v3896
    %v4212 = vmul.f32 %v2430, %v3896
    %v4213 = vmul.f32 %v2431, %v3896
    %v4214 = vmul.f32 %v2432, %v3896
    %v4215 = vmul.f32 %v2433, %v3896
    %v4216 = vmul.f32 %v2434, %v3901
    %v4217 = vmul.f32 %v2435, %v3901
    %v4218 = vmul.f32 %v2436, %v3901
    %v4219 = vmul.f32 %v2437, %v3901
    %v4220 = vmul.f32 %v2438, %v3901
    %v4221 = vmul.f32 %v2439, %v3901
    %v4222 = vmul.f32 %v2440, %v3901
    %v4223 = vmul.f32 %v2441, %v3906
    %v4224 = vmul.f32 %v2442, %v3906
    %v4225 = vmul.f32 %v2443, %v3906
    %v4226 = vmul.f32 %v2444, %v3906
    %v4227 = vmul.f32 %v2445, %v3906
    %v4228 = vmul.f32 %v2446, %v3906
    %v4229 = vmul.f32 %v2447, %v3906
    %v4230 = vmul.f32 %v2448, %v3911
    %v4231 = vmul.f32 %v2449, %v3911
    %v4232 = vmul.f32 %v2450, %v3911
    %v4233 = vmul.f32 %v2451, %v3911
    %v4234 = vmul.f32 %v2452, %v3911
    %v4235 = vmul.f32 %v2453, %v3911
    %v4236 = vmul.f32 %v2454, %v3911
    %v4237 = vmul.f32 %v2455, %v3916
    %v4238 = vmul.f32 %v2456, %v3916
    %v4239 = vmul.f32 %v2457, %v3916
    %v4240 = vmul.f32 %v2458, %v3916
    %v4241 = vmul.f32 %v2459, %v3916
    %v4242 = vmul.f32 %v2460, %v3916
    %v4243 = vmul.f32 %v2461, %v3916
    %v4244 = vmul.f32 %v2462, %v3921
    %v4245 = vmul.f32 %v2463, %v3921
    %v4246 = vmul.f32 %v2464, %v3921
    %v4247 = vmul.f32 %v2465, %v3921
    %v4248 = vmul.f32 %v2466, %v3921
    %v4249 = vmul.f32 %v2467, %v3921
    %v4250 = vmul.f32 %v2468, %v3921
    %v4251 = vmul.f32 %v2469, %v3926
    %v4252 = vmul.f32 %v2470, %v3926
    %v4253 = vmul.f32 %v2471, %v3926
    %v4254 = vmul.f32 %v2472, %v3926
    %v4255 = vmul.f32 %v2473, %v3926
    %v4256 = vmul.f32 %v2474, %v3926
    %v4257 = vmul.f32 %v2475, %v3926
    %v4258 = vmul.f32 %v2476, %v3931
    %v4259 = vmul.f32 %v2477, %v3931
    %v4260 = vmul.f32 %v2478, %v3931
    %v4261 = vmul.f32 %v2479, %v3931
    %v4262 = vmul.f32 %v2480, %v3931
    %v4263 = vmul.f32 %v2481, %v3931
    %v4264 = vmul.f32 %v2482, %v3931
    %v4265 = vmul.f32 %v2483, %v3936
    %v4266 = vmul.f32 %v2484, %v3936
    %v4267 = vmul.f32 %v2485, %v3936
    %v4268 = vmul.f32 %v2486, %v3936
    %v4269 = vmul.f32 %v2487, %v3936
    %v4270 = vmul.f32 %v2488, %v3936
    %v4271 = vmul.f32 %v2489, %v3936
    %v4272 = vmul.f32 %v2490, %v3941
    %v4273 = vmul.f32 %v2491, %v3941
    %v4274 = vmul.f32 %v2492, %v3941
    %v4275 = vmul.f32 %v2493, %v3941
    %v4276 = vmul.f32 %v2494, %v3941
    %v4277 = vmul.f32 %v2495, %v3941
    %v4278 = vmul.f32 %v2496, %v3941
    %v4279 = vmul.f32 %v2497, %v3946
    %v4280 = vmul.f32 %v2498, %v3946
    %v4281 = vmul.f32 %v2499, %v3946
    %v4282 = vmul.f32 %v2500, %v3946
    %v4283 = vmul.f32 %v2501, %v3946
    %v4284 = vmul.f32 %v2502, %v3946
    %v4285 = vmul.f32 %v2503, %v3946
    %v4286 = vmul.f32 %v2504, %v3951
    %v4287 = vmul.f32 %v2505, %v3951
    %v4288 = vmul.f32 %v2506, %v3951
    %v4289 = vmul.f32 %v2507, %v3951
    %v4290 = vmul.f32 %v2508, %v3951
    %v4291 = vmul.f32 %v2509, %v3951
    %v4292 = vmul.f32 %v2510, %v3951
    %v4293 = vmul.f32 %v2511, %v3956
    %v4294 = vmul.f32 %v2512, %v3956
    %v4295 = vmul.f32 %v2513, %v3956
    %v4296 = vmul.f32 %v2514, %v3956
    %v4297 = vmul.f32 %v2515, %v3956
    %v4298 = vmul.f32 %v2516, %v3956
    %v4299 = vmul.f32 %v2517, %v3956
    %v4300 = vmul.f32 %v2518, %v3961
    %v4301 = vmul.f32 %v2519, %v3961
    %v4302 = vmul.f32 %v2520, %v3961
    %v4303 = vmul.f32 %v2521, %v3961
    %v4304 = vmul.f32 %v2522, %v3961
    %v4305 = vmul.f32 %v2523, %v3961
    %v4306 = vmul.f32 %v2524, %v3961
    %v4307 = vmul.f32 %v2525, %v3966
    %v4308 = vmul.f32 %v2526, %v3966
    %v4309 = vmul.f32 %v2527, %v3966
    %v4310 = vmul.f32 %v2528, %v3966
    %v4311 = vmul.f32 %v2529, %v3966
    %v4312 = vmul.f32 %v2530, %v3966
    %v4313 = vmul.f32 %v2531, %v3966
    %v4314 = vmul.f32 %v2532, %v3971
    %v4315 = vmul.f32 %v2533, %v3971
    %v4316 = vmul.f32 %v2534, %v3971
    %v4317 = vmul.f32 %v2535, %v3971
    %v4318 = vmul.f32 %v2536, %v3971
    %v4319 = vmul.f32 %v2537, %v3971
    %v4320 = vmul.f32 %v2538, %v3971
    %v4321 = vmul.f32 %v2539, %v3976
    %v4322 = vmul.f32 %v2540, %v3976
    %v4323 = vmul.f32 %v2541, %v3976
    %v4324 = vmul.f32 %v2542, %v3976
    %v4325 = vmul.f32 %v2543, %v3976
    %v4326 = vmul.f32 %v2544, %v3976
    %v4327 = vmul.f32 %v2545, %v3976
    %v4328 = vmul.f32 %v2546, %v3981
    %v4329 = vmul.f32 %v2547, %v3981
    %v4330 = vmul.f32 %v2548, %v3981
    %v4331 = vmul.f32 %v2549, %v3981
    %v4332 = vmul.f32 %v2550, %v3981
    %v4333 = vmul.f32 %v2551, %v3981
    %v4334 = vmul.f32 %v2552, %v3981
    %v4335 = vmul.f32 %v2553, %v3986
    %v4336 = vmul.f32 %v2554, %v3986
    %v4337 = vmul.f32 %v2555, %v3986
    %v4338 = vmul.f32 %v2556, %v3986
    %v4339 = vmul.f32 %v2557, %v3986
    %v4340 = vmul.f32 %v2558, %v3986
    %v4341 = vmul.f32 %v2559, %v3986
    %v4342 = vmul.f32 %v2560, %v3991
    %v4343 = vmul.f32 %v2561, %v3991
    %v4344 = vmul.f32 %v2562, %v3991
    %v4345 = vmul.f32 %v2563, %v3991
    %v4346 = vmul.f32 %v2564, %v3991
    %v4347 = vmul.f32 %v2565, %v3991
    %v4348 = vmul.f32 %v2566, %v3991
    %v4349 = vmul.f32 %v2567, %v3996
    %v4350 = vmul.f32 %v2568, %v3996
    %v4351 = vmul.f32 %v2569, %v3996
    %v4352 = vmul.f32 %v2570, %v3996
    %v4353 = vmul.f32 %v2571, %v3996
    %v4354 = vmul.f32 %v2572, %v3996
    %v4355 = vmul.f32 %v2573, %v3996
    %v4356 = vmul.f32 %v2574, %v4001
    %v4357 = vmul.f32 %v2575, %v4001
    %v4358 = vmul.f32 %v2576, %v4001
    %v4359 = vmul.f32 %v2577, %v4001
    %v4360 = vmul.f32 %v2578, %v4001
    %v4361 = vmul.f32 %v2579, %v4001
    %v4362 = vmul.f32 %v2580, %v4001
    %v4363 = vmul.f32 %v2581, %v4006
    %v4364 = vmul.f32 %v2582, %v4006
    %v4365 = vmul.f32 %v2583, %v4006
    %v4366 = vmul.f32 %v2584, %v4006
    %v4367 = vmul.f32 %v2585, %v4006
    %v4368 = vmul.f32 %v2586, %v4006
    %v4369 = vmul.f32 %v2587, %v4006
    %v4370 = vmul.f32 %v2588, %v4011
    %v4371 = vmul.f32 %v2589, %v4011
    %v4372 = vmul.f32 %v2590, %v4011
    %v4373 = vmul.f32 %v2591, %v4011
    %v4374 = vmul.f32 %v2592, %v4011
    %v4375 = vmul.f32 %v2593, %v4011
    %v4376 = vmul.f32 %v2594, %v4011
    %v4377 = vmul.f32 %v2595, %v4016
    %v4378 = vmul.f32 %v2596, %v4016
    %v4379 = vmul.f32 %v2597, %v4016
    %v4380 = vmul.f32 %v2598, %v4016
    %v4381 = vmul.f32 %v2599, %v4016
    %v4382 = vmul.f32 %v2600, %v4016
    %v4383 = vmul.f32 %v2601, %v4016
    %v4384 = vmul.f32 %v2602, %v4021
    %v4385 = vmul.f32 %v2603, %v4021
    %v4386 = vmul.f32 %v2604, %v4021
    %v4387 = vmul.f32 %v2605, %v4021
    %v4388 = vmul.f32 %v2606, %v4021
    %v4389 = vmul.f32 %v2607, %v4021
    %v4390 = vmul.f32 %v2608, %v4021
    %v4391 = vmul.f32 %v2609, %v4026
    %v4392 = vmul.f32 %v2610, %v4026
    %v4393 = vmul.f32 %v2611, %v4026
    %v4394 = vmul.f32 %v2612, %v4026
    %v4395 = vmul.f32 %v2613, %v4026
    %v4396 = vmul.f32 %v2614, %v4026
    %v4397 = vmul.f32 %v2615, %v4026
    %v4398 = vmul.f32 %v2616, %v4031
    %v4399 = vmul.f32 %v2617, %v4031
    %v4400 = vmul.f32 %v2618, %v4031
    %v4401 = vmul.f32 %v2619, %v4031
    %v4402 = vmul.f32 %v2620, %v4031
    %v4403 = vmul.f32 %v2621, %v4031
    %v4404 = vmul.f32 %v2622, %v4031
    %v4405 = vmul.f32 %v2623, %v4036
    %v4406 = vmul.f32 %v2624, %v4036
    %v4407 = vmul.f32 %v2625, %v4036
    %v4408 = vmul.f32 %v2626, %v4036
    %v4409 = vmul.f32 %v2627, %v4036
    %v4410 = vmul.f32 %v2628, %v4036
    %v4411 = vmul.f32 %v2629, %v4036
    %v4412 = vmul.f32 %v2630, %v4041
    %v4413 = vmul.f32 %v2631, %v4041
    %v4414 = vmul.f32 %v2632, %v4041
    %v4415 = vmul.f32 %v2633, %v4041
    %v4416 = vmul.f32 %v2634, %v4041
    %v4417 = vmul.f32 %v2635, %v4041
    %v4418 = vmul.f32 %v2636, %v4041
    %v4419 = vmul.f32 %v2637, %v4046
    %v4420 = vmul.f32 %v2638, %v4046
    %v4421 = vmul.f32 %v2639, %v4046
    %v4422 = vmul.f32 %v2640, %v4046
    %v4423 = vmul.f32 %v2641, %v4046
    %v4424 = vmul.f32 %v2642, %v4046
    %v4425 = vmul.f32 %v2643, %v4046
    %v4426 = vld [vmem:[%s4] sm:$0xff]
    %v4427 = vld [vmem:[%s4 + $0x8] sm:$0xff]
    %v4428 = vld [vmem:[%s4 + $0x10] sm:$0xff]
    %v4429 = vld [vmem:[%s4 + $0x18] sm:$0xff]
    %v4430 = vld [vmem:[%s4 + $0x20] sm:$0xff]
    %v4431 = vld [vmem:[%s4 + $0x28] sm:$0xff]
    %v4432 = vld [vmem:[%s4 + $0x30] sm:$0xff]
    %v4433 = vld [vmem:[%s4 + $0x38] sm:$0xff]
    %v4434 = vld [vmem:[%s4 + $0x40] sm:$0xff]
    %v4435 = vld [vmem:[%s4 + $0x48] sm:$0xff]
    %v4436 = vld [vmem:[%s4 + $0x50] sm:$0xff]
    %v4437 = vld [vmem:[%s4 + $0x58] sm:$0xff]
    %v4438 = vld [vmem:[%s4 + $0x60] sm:$0xff]
    %v4439 = vld [vmem:[%s4 + $0x68] sm:$0xff]
    %v4440 = vld [vmem:[%s4 + $0x70] sm:$0xff]
    %v4441 = vld [vmem:[%s4 + $0x78] sm:$0xff]
    %v4442 = vld [vmem:[%s4 + $0x80] sm:$0xff]
    %v4443 = vld [vmem:[%s4 + $0x88] sm:$0xff]
    %v4444 = vld [vmem:[%s4 + $0x90] sm:$0xff]
    %v4445 = vld [vmem:[%s4 + $0x98] sm:$0xff]
    %v4446 = vld [vmem:[%s4 + $0xa0] sm:$0xff]
    %v4447 = vld [vmem:[%s4 + $0xa8] sm:$0xff]
    %v4448 = vld [vmem:[%s4 + $0xb0] sm:$0xff]
    %v4449 = vld [vmem:[%s4 + $0xb8] sm:$0xff]
    %v4450 = vld [vmem:[%s4 + $0xc0] sm:$0xff]
    %v4451 = vld [vmem:[%s4 + $0xc8] sm:$0xff]
    %v4452 = vld [vmem:[%s4 + $0xd0] sm:$0xff]
    %v4453 = vld [vmem:[%s4 + $0xd8] sm:$0xff]
    %v4454 = vld [vmem:[%s4 + $0xe0] sm:$0xff]
    %v4455 = vld [vmem:[%s4 + $0xe8] sm:$0xff]
    %v4456 = vld [vmem:[%s4 + $0xf0] sm:$0xff]
    %v4457 = vld [vmem:[%s4 + $0xf8] sm:$0xff]
    %v4458 = vld [vmem:[%s4 + $0x100] sm:$0xff]
    %v4459 = vld [vmem:[%s4 + $0x108] sm:$0xff]
    %v4460 = vld [vmem:[%s4 + $0x110] sm:$0xff]
    %v4461 = vld [vmem:[%s4 + $0x118] sm:$0xff]
    %v4462 = vld [vmem:[%s4 + $0x120] sm:$0xff]
    %v4463 = vld [vmem:[%s4 + $0x128] sm:$0xff]
    %v4464 = vld [vmem:[%s4 + $0x130] sm:$0xff]
    %v4465 = vld [vmem:[%s4 + $0x138] sm:$0xff]
    %v4466 = vld [vmem:[%s4 + $0x140] sm:$0xff]
    %v4467 = vld [vmem:[%s4 + $0x148] sm:$0xff]
    %v4468 = vld [vmem:[%s4 + $0x150] sm:$0xff]
    %v4469 = vld [vmem:[%s4 + $0x158] sm:$0xff]
    %v4470 = vld [vmem:[%s4 + $0x160] sm:$0xff]
    %v4471 = vld [vmem:[%s4 + $0x168] sm:$0xff]
    %v4472 = vld [vmem:[%s4 + $0x170] sm:$0xff]
    %v4473 = vld [vmem:[%s4 + $0x178] sm:$0xff]
    %v4474 = vld [vmem:[%s4 + $0x180] sm:$0xff]
    %v4475 = vld [vmem:[%s4 + $0x188] sm:$0xff]
    %v4476 = vld [vmem:[%s4 + $0x190] sm:$0xff]
    %v4477 = vld [vmem:[%s4 + $0x198] sm:$0xff]
    %v4478 = vld [vmem:[%s4 + $0x1a0] sm:$0xff]
    %v4479 = vld [vmem:[%s4 + $0x1a8] sm:$0xff]
    %4481 = vset.pattern.permute.xlu0 0
    %4482 = vperm.xlu0 %4481, %v4426
    %v4483 = vpop.permute.xlu0 %4482
    %4486 = vset.pattern.permute.xlu0 0
    %4487 = vperm.xlu0 %4486, %v4427
    %v4488 = vpop.permute.xlu0 %4487
    %4491 = vset.pattern.permute.xlu0 0
    %4492 = vperm.xlu0 %4491, %v4428
    %v4493 = vpop.permute.xlu0 %4492
    %4496 = vset.pattern.permute.xlu0 0
    %4497 = vperm.xlu0 %4496, %v4429
    %v4498 = vpop.permute.xlu0 %4497
    %4501 = vset.pattern.permute.xlu0 0
    %4502 = vperm.xlu0 %4501, %v4430
    %v4503 = vpop.permute.xlu0 %4502
    %4506 = vset.pattern.permute.xlu0 0
    %4507 = vperm.xlu0 %4506, %v4431
    %v4508 = vpop.permute.xlu0 %4507
    %4511 = vset.pattern.permute.xlu0 0
    %4512 = vperm.xlu0 %4511, %v4432
    %v4513 = vpop.permute.xlu0 %4512
    %4516 = vset.pattern.permute.xlu0 0
    %4517 = vperm.xlu0 %4516, %v4433
    %v4518 = vpop.permute.xlu0 %4517
    %4521 = vset.pattern.permute.xlu0 0
    %4522 = vperm.xlu0 %4521, %v4434
    %v4523 = vpop.permute.xlu0 %4522
    %4526 = vset.pattern.permute.xlu0 0
    %4527 = vperm.xlu0 %4526, %v4435
    %v4528 = vpop.permute.xlu0 %4527
    %4531 = vset.pattern.permute.xlu0 0
    %4532 = vperm.xlu0 %4531, %v4436
    %v4533 = vpop.permute.xlu0 %4532
    %4536 = vset.pattern.permute.xlu0 0
    %4537 = vperm.xlu0 %4536, %v4437
    %v4538 = vpop.permute.xlu0 %4537
    %4541 = vset.pattern.permute.xlu0 0
    %4542 = vperm.xlu0 %4541, %v4438
    %v4543 = vpop.permute.xlu0 %4542
    %4546 = vset.pattern.permute.xlu0 0
    %4547 = vperm.xlu0 %4546, %v4439
    %v4548 = vpop.permute.xlu0 %4547
    %4551 = vset.pattern.permute.xlu0 0
    %4552 = vperm.xlu0 %4551, %v4440
    %v4553 = vpop.permute.xlu0 %4552
    %4556 = vset.pattern.permute.xlu0 0
    %4557 = vperm.xlu0 %4556, %v4441
    %v4558 = vpop.permute.xlu0 %4557
    %4561 = vset.pattern.permute.xlu0 0
    %4562 = vperm.xlu0 %4561, %v4442
    %v4563 = vpop.permute.xlu0 %4562
    %4566 = vset.pattern.permute.xlu0 0
    %4567 = vperm.xlu0 %4566, %v4443
    %v4568 = vpop.permute.xlu0 %4567
    %4571 = vset.pattern.permute.xlu0 0
    %4572 = vperm.xlu0 %4571, %v4444
    %v4573 = vpop.permute.xlu0 %4572
    %4576 = vset.pattern.permute.xlu0 0
    %4577 = vperm.xlu0 %4576, %v4445
    %v4578 = vpop.permute.xlu0 %4577
    %4581 = vset.pattern.permute.xlu0 0
    %4582 = vperm.xlu0 %4581, %v4446
    %v4583 = vpop.permute.xlu0 %4582
    %4586 = vset.pattern.permute.xlu0 0
    %4587 = vperm.xlu0 %4586, %v4447
    %v4588 = vpop.permute.xlu0 %4587
    %4591 = vset.pattern.permute.xlu0 0
    %4592 = vperm.xlu0 %4591, %v4448
    %v4593 = vpop.permute.xlu0 %4592
    %4596 = vset.pattern.permute.xlu0 0
    %4597 = vperm.xlu0 %4596, %v4449
    %v4598 = vpop.permute.xlu0 %4597
    %4601 = vset.pattern.permute.xlu0 0
    %4602 = vperm.xlu0 %4601, %v4450
    %v4603 = vpop.permute.xlu0 %4602
    %4606 = vset.pattern.permute.xlu0 0
    %4607 = vperm.xlu0 %4606, %v4451
    %v4608 = vpop.permute.xlu0 %4607
    %4611 = vset.pattern.permute.xlu0 0
    %4612 = vperm.xlu0 %4611, %v4452
    %v4613 = vpop.permute.xlu0 %4612
    %4616 = vset.pattern.permute.xlu0 0
    %4617 = vperm.xlu0 %4616, %v4453
    %v4618 = vpop.permute.xlu0 %4617
    %4621 = vset.pattern.permute.xlu0 0
    %4622 = vperm.xlu0 %4621, %v4454
    %v4623 = vpop.permute.xlu0 %4622
    %4626 = vset.pattern.permute.xlu0 0
    %4627 = vperm.xlu0 %4626, %v4455
    %v4628 = vpop.permute.xlu0 %4627
    %4631 = vset.pattern.permute.xlu0 0
    %4632 = vperm.xlu0 %4631, %v4456
    %v4633 = vpop.permute.xlu0 %4632
    %4636 = vset.pattern.permute.xlu0 0
    %4637 = vperm.xlu0 %4636, %v4457
    %v4638 = vpop.permute.xlu0 %4637
    %4641 = vset.pattern.permute.xlu0 0
    %4642 = vperm.xlu0 %4641, %v4458
    %v4643 = vpop.permute.xlu0 %4642
    %4646 = vset.pattern.permute.xlu0 0
    %4647 = vperm.xlu0 %4646, %v4459
    %v4648 = vpop.permute.xlu0 %4647
    %4651 = vset.pattern.permute.xlu0 0
    %4652 = vperm.xlu0 %4651, %v4460
    %v4653 = vpop.permute.xlu0 %4652
    %4656 = vset.pattern.permute.xlu0 0
    %4657 = vperm.xlu0 %4656, %v4461
    %v4658 = vpop.permute.xlu0 %4657
    %4661 = vset.pattern.permute.xlu0 0
    %4662 = vperm.xlu0 %4661, %v4462
    %v4663 = vpop.permute.xlu0 %4662
    %4666 = vset.pattern.permute.xlu0 0
    %4667 = vperm.xlu0 %4666, %v4463
    %v4668 = vpop.permute.xlu0 %4667
    %4671 = vset.pattern.permute.xlu0 0
    %4672 = vperm.xlu0 %4671, %v4464
    %v4673 = vpop.permute.xlu0 %4672
    %4676 = vset.pattern.permute.xlu0 0
    %4677 = vperm.xlu0 %4676, %v4465
    %v4678 = vpop.permute.xlu0 %4677
    %4681 = vset.pattern.permute.xlu0 0
    %4682 = vperm.xlu0 %4681, %v4466
    %v4683 = vpop.permute.xlu0 %4682
    %4686 = vset.pattern.permute.xlu0 0
    %4687 = vperm.xlu0 %4686, %v4467
    %v4688 = vpop.permute.xlu0 %4687
    %4691 = vset.pattern.permute.xlu0 0
    %4692 = vperm.xlu0 %4691, %v4468
    %v4693 = vpop.permute.xlu0 %4692
    %4696 = vset.pattern.permute.xlu0 0
    %4697 = vperm.xlu0 %4696, %v4469
    %v4698 = vpop.permute.xlu0 %4697
    %4701 = vset.pattern.permute.xlu0 0
    %4702 = vperm.xlu0 %4701, %v4470
    %v4703 = vpop.permute.xlu0 %4702
    %4706 = vset.pattern.permute.xlu0 0
    %4707 = vperm.xlu0 %4706, %v4471
    %v4708 = vpop.permute.xlu0 %4707
    %4711 = vset.pattern.permute.xlu0 0
    %4712 = vperm.xlu0 %4711, %v4472
    %v4713 = vpop.permute.xlu0 %4712
    %4716 = vset.pattern.permute.xlu0 0
    %4717 = vperm.xlu0 %4716, %v4473
    %v4718 = vpop.permute.xlu0 %4717
    %4721 = vset.pattern.permute.xlu0 0
    %4722 = vperm.xlu0 %4721, %v4474
    %v4723 = vpop.permute.xlu0 %4722
    %4726 = vset.pattern.permute.xlu0 0
    %4727 = vperm.xlu0 %4726, %v4475
    %v4728 = vpop.permute.xlu0 %4727
    %4731 = vset.pattern.permute.xlu0 0
    %4732 = vperm.xlu0 %4731, %v4476
    %v4733 = vpop.permute.xlu0 %4732
    %4736 = vset.pattern.permute.xlu0 0
    %4737 = vperm.xlu0 %4736, %v4477
    %v4738 = vpop.permute.xlu0 %4737
    %4741 = vset.pattern.permute.xlu0 0
    %4742 = vperm.xlu0 %4741, %v4478
    %v4743 = vpop.permute.xlu0 %4742
    %4746 = vset.pattern.permute.xlu0 0
    %4747 = vperm.xlu0 %4746, %v4479
    %v4748 = vpop.permute.xlu0 %4747
    %v4750 = vadd.f32 %v4048, %v4483
    %v4751 = vadd.f32 %v4049, %v4483
    %v4752 = vadd.f32 %v4050, %v4483
    %v4753 = vadd.f32 %v4051, %v4483
    %v4754 = vadd.f32 %v4052, %v4483
    %v4755 = vadd.f32 %v4053, %v4483
    %v4756 = vadd.f32 %v4054, %v4483
    %v4757 = vadd.f32 %v4055, %v4488
    %v4758 = vadd.f32 %v4056, %v4488
    %v4759 = vadd.f32 %v4057, %v4488
    %v4760 = vadd.f32 %v4058, %v4488
    %v4761 = vadd.f32 %v4059, %v4488
    %v4762 = vadd.f32 %v4060, %v4488
    %v4763 = vadd.f32 %v4061, %v4488
    %v4764 = vadd.f32 %v4062, %v4493
    %v4765 = vadd.f32 %v4063, %v4493
    %v4766 = vadd.f32 %v4064, %v4493
    %v4767 = vadd.f32 %v4065, %v4493
    %v4768 = vadd.f32 %v4066, %v4493
    %v4769 = vadd.f32 %v4067, %v4493
    %v4770 = vadd.f32 %v4068, %v4493
    %v4771 = vadd.f32 %v4069, %v4498
    %v4772 = vadd.f32 %v4070, %v4498
    %v4773 = vadd.f32 %v4071, %v4498
    %v4774 = vadd.f32 %v4072, %v4498
    %v4775 = vadd.f32 %v4073, %v4498
    %v4776 = vadd.f32 %v4074, %v4498
    %v4777 = vadd.f32 %v4075, %v4498
    %v4778 = vadd.f32 %v4076, %v4503
    %v4779 = vadd.f32 %v4077, %v4503
    %v4780 = vadd.f32 %v4078, %v4503
    %v4781 = vadd.f32 %v4079, %v4503
    %v4782 = vadd.f32 %v4080, %v4503
    %v4783 = vadd.f32 %v4081, %v4503
    %v4784 = vadd.f32 %v4082, %v4503
    %v4785 = vadd.f32 %v4083, %v4508
    %v4786 = vadd.f32 %v4084, %v4508
    %v4787 = vadd.f32 %v4085, %v4508
    %v4788 = vadd.f32 %v4086, %v4508
    %v4789 = vadd.f32 %v4087, %v4508
    %v4790 = vadd.f32 %v4088, %v4508
    %v4791 = vadd.f32 %v4089, %v4508
    %v4792 = vadd.f32 %v4090, %v4513
    %v4793 = vadd.f32 %v4091, %v4513
    %v4794 = vadd.f32 %v4092, %v4513
    %v4795 = vadd.f32 %v4093, %v4513
    %v4796 = vadd.f32 %v4094, %v4513
    %v4797 = vadd.f32 %v4095, %v4513
    %v4798 = vadd.f32 %v4096, %v4513
    %v4799 = vadd.f32 %v4097, %v4518
    %v4800 = vadd.f32 %v4098, %v4518
    %v4801 = vadd.f32 %v4099, %v4518
    %v4802 = vadd.f32 %v4100, %v4518
    %v4803 = vadd.f32 %v4101, %v4518
    %v4804 = vadd.f32 %v4102, %v4518
    %v4805 = vadd.f32 %v4103, %v4518
    %v4806 = vadd.f32 %v4104, %v4523
    %v4807 = vadd.f32 %v4105, %v4523
    %v4808 = vadd.f32 %v4106, %v4523
    %v4809 = vadd.f32 %v4107, %v4523
    %v4810 = vadd.f32 %v4108, %v4523
    %v4811 = vadd.f32 %v4109, %v4523
    %v4812 = vadd.f32 %v4110, %v4523
    %v4813 = vadd.f32 %v4111, %v4528
    %v4814 = vadd.f32 %v4112, %v4528
    %v4815 = vadd.f32 %v4113, %v4528
    %v4816 = vadd.f32 %v4114, %v4528
    %v4817 = vadd.f32 %v4115, %v4528
    %v4818 = vadd.f32 %v4116, %v4528
    %v4819 = vadd.f32 %v4117, %v4528
    %v4820 = vadd.f32 %v4118, %v4533
    %v4821 = vadd.f32 %v4119, %v4533
    %v4822 = vadd.f32 %v4120, %v4533
    %v4823 = vadd.f32 %v4121, %v4533
    %v4824 = vadd.f32 %v4122, %v4533
    %v4825 = vadd.f32 %v4123, %v4533
    %v4826 = vadd.f32 %v4124, %v4533
    %v4827 = vadd.f32 %v4125, %v4538
    %v4828 = vadd.f32 %v4126, %v4538
    %v4829 = vadd.f32 %v4127, %v4538
    %v4830 = vadd.f32 %v4128, %v4538
    %v4831 = vadd.f32 %v4129, %v4538
    %v4832 = vadd.f32 %v4130, %v4538
    %v4833 = vadd.f32 %v4131, %v4538
    %v4834 = vadd.f32 %v4132, %v4543
    %v4835 = vadd.f32 %v4133, %v4543
    %v4836 = vadd.f32 %v4134, %v4543
    %v4837 = vadd.f32 %v4135, %v4543
    %v4838 = vadd.f32 %v4136, %v4543
    %v4839 = vadd.f32 %v4137, %v4543
    %v4840 = vadd.f32 %v4138, %v4543
    %v4841 = vadd.f32 %v4139, %v4548
    %v4842 = vadd.f32 %v4140, %v4548
    %v4843 = vadd.f32 %v4141, %v4548
    %v4844 = vadd.f32 %v4142, %v4548
    %v4845 = vadd.f32 %v4143, %v4548
    %v4846 = vadd.f32 %v4144, %v4548
    %v4847 = vadd.f32 %v4145, %v4548
    %v4848 = vadd.f32 %v4146, %v4553
    %v4849 = vadd.f32 %v4147, %v4553
    %v4850 = vadd.f32 %v4148, %v4553
    %v4851 = vadd.f32 %v4149, %v4553
    %v4852 = vadd.f32 %v4150, %v4553
    %v4853 = vadd.f32 %v4151, %v4553
    %v4854 = vadd.f32 %v4152, %v4553
    %v4855 = vadd.f32 %v4153, %v4558
    %v4856 = vadd.f32 %v4154, %v4558
    %v4857 = vadd.f32 %v4155, %v4558
    %v4858 = vadd.f32 %v4156, %v4558
    %v4859 = vadd.f32 %v4157, %v4558
    %v4860 = vadd.f32 %v4158, %v4558
    %v4861 = vadd.f32 %v4159, %v4558
    %v4862 = vadd.f32 %v4160, %v4563
    %v4863 = vadd.f32 %v4161, %v4563
    %v4864 = vadd.f32 %v4162, %v4563
    %v4865 = vadd.f32 %v4163, %v4563
    %v4866 = vadd.f32 %v4164, %v4563
    %v4867 = vadd.f32 %v4165, %v4563
    %v4868 = vadd.f32 %v4166, %v4563
    %v4869 = vadd.f32 %v4167, %v4568
    %v4870 = vadd.f32 %v4168, %v4568
    %v4871 = vadd.f32 %v4169, %v4568
    %v4872 = vadd.f32 %v4170, %v4568
    %v4873 = vadd.f32 %v4171, %v4568
    %v4874 = vadd.f32 %v4172, %v4568
    %v4875 = vadd.f32 %v4173, %v4568
    %v4876 = vadd.f32 %v4174, %v4573
    %v4877 = vadd.f32 %v4175, %v4573
    %v4878 = vadd.f32 %v4176, %v4573
    %v4879 = vadd.f32 %v4177, %v4573
    %v4880 = vadd.f32 %v4178, %v4573
    %v4881 = vadd.f32 %v4179, %v4573
    %v4882 = vadd.f32 %v4180, %v4573
    %v4883 = vadd.f32 %v4181, %v4578
    %v4884 = vadd.f32 %v4182, %v4578
    %v4885 = vadd.f32 %v4183, %v4578
    %v4886 = vadd.f32 %v4184, %v4578
    %v4887 = vadd.f32 %v4185, %v4578
    %v4888 = vadd.f32 %v4186, %v4578
    %v4889 = vadd.f32 %v4187, %v4578
    %v4890 = vadd.f32 %v4188, %v4583
    %v4891 = vadd.f32 %v4189, %v4583
    %v4892 = vadd.f32 %v4190, %v4583
    %v4893 = vadd.f32 %v4191, %v4583
    %v4894 = vadd.f32 %v4192, %v4583
    %v4895 = vadd.f32 %v4193, %v4583
    %v4896 = vadd.f32 %v4194, %v4583
    %v4897 = vadd.f32 %v4195, %v4588
    %v4898 = vadd.f32 %v4196, %v4588
    %v4899 = vadd.f32 %v4197, %v4588
    %v4900 = vadd.f32 %v4198, %v4588
    %v4901 = vadd.f32 %v4199, %v4588
    %v4902 = vadd.f32 %v4200, %v4588
    %v4903 = vadd.f32 %v4201, %v4588
    %v4904 = vadd.f32 %v4202, %v4593
    %v4905 = vadd.f32 %v4203, %v4593
    %v4906 = vadd.f32 %v4204, %v4593
    %v4907 = vadd.f32 %v4205, %v4593
    %v4908 = vadd.f32 %v4206, %v4593
    %v4909 = vadd.f32 %v4207, %v4593
    %v4910 = vadd.f32 %v4208, %v4593
    %v4911 = vadd.f32 %v4209, %v4598
    %v4912 = vadd.f32 %v4210, %v4598
    %v4913 = vadd.f32 %v4211, %v4598
    %v4914 = vadd.f32 %v4212, %v4598
    %v4915 = vadd.f32 %v4213, %v4598
    %v4916 = vadd.f32 %v4214, %v4598
    %v4917 = vadd.f32 %v4215, %v4598
    %v4918 = vadd.f32 %v4216, %v4603
    %v4919 = vadd.f32 %v4217, %v4603
    %v4920 = vadd.f32 %v4218, %v4603
    %v4921 = vadd.f32 %v4219, %v4603
    %v4922 = vadd.f32 %v4220, %v4603
    %v4923 = vadd.f32 %v4221, %v4603
    %v4924 = vadd.f32 %v4222, %v4603
    %v4925 = vadd.f32 %v4223, %v4608
    %v4926 = vadd.f32 %v4224, %v4608
    %v4927 = vadd.f32 %v4225, %v4608
    %v4928 = vadd.f32 %v4226, %v4608
    %v4929 = vadd.f32 %v4227, %v4608
    %v4930 = vadd.f32 %v4228, %v4608
    %v4931 = vadd.f32 %v4229, %v4608
    %v4932 = vadd.f32 %v4230, %v4613
    %v4933 = vadd.f32 %v4231, %v4613
    %v4934 = vadd.f32 %v4232, %v4613
    %v4935 = vadd.f32 %v4233, %v4613
    %v4936 = vadd.f32 %v4234, %v4613
    %v4937 = vadd.f32 %v4235, %v4613
    %v4938 = vadd.f32 %v4236, %v4613
    %v4939 = vadd.f32 %v4237, %v4618
    %v4940 = vadd.f32 %v4238, %v4618
    %v4941 = vadd.f32 %v4239, %v4618
    %v4942 = vadd.f32 %v4240, %v4618
    %v4943 = vadd.f32 %v4241, %v4618
    %v4944 = vadd.f32 %v4242, %v4618
    %v4945 = vadd.f32 %v4243, %v4618
    %v4946 = vadd.f32 %v4244, %v4623
    %v4947 = vadd.f32 %v4245, %v4623
    %v4948 = vadd.f32 %v4246, %v4623
    %v4949 = vadd.f32 %v4247, %v4623
    %v4950 = vadd.f32 %v4248, %v4623
    %v4951 = vadd.f32 %v4249, %v4623
    %v4952 = vadd.f32 %v4250, %v4623
    %v4953 = vadd.f32 %v4251, %v4628
    %v4954 = vadd.f32 %v4252, %v4628
    %v4955 = vadd.f32 %v4253, %v4628
    %v4956 = vadd.f32 %v4254, %v4628
    %v4957 = vadd.f32 %v4255, %v4628
    %v4958 = vadd.f32 %v4256, %v4628
    %v4959 = vadd.f32 %v4257, %v4628
    %v4960 = vadd.f32 %v4258, %v4633
    %v4961 = vadd.f32 %v4259, %v4633
    %v4962 = vadd.f32 %v4260, %v4633
    %v4963 = vadd.f32 %v4261, %v4633
    %v4964 = vadd.f32 %v4262, %v4633
    %v4965 = vadd.f32 %v4263, %v4633
    %v4966 = vadd.f32 %v4264, %v4633
    %v4967 = vadd.f32 %v4265, %v4638
    %v4968 = vadd.f32 %v4266, %v4638
    %v4969 = vadd.f32 %v4267, %v4638
    %v4970 = vadd.f32 %v4268, %v4638
    %v4971 = vadd.f32 %v4269, %v4638
    %v4972 = vadd.f32 %v4270, %v4638
    %v4973 = vadd.f32 %v4271, %v4638
    %v4974 = vadd.f32 %v4272, %v4643
    %v4975 = vadd.f32 %v4273, %v4643
    %v4976 = vadd.f32 %v4274, %v4643
    %v4977 = vadd.f32 %v4275, %v4643
    %v4978 = vadd.f32 %v4276, %v4643
    %v4979 = vadd.f32 %v4277, %v4643
    %v4980 = vadd.f32 %v4278, %v4643
    %v4981 = vadd.f32 %v4279, %v4648
    %v4982 = vadd.f32 %v4280, %v4648
    %v4983 = vadd.f32 %v4281, %v4648
    %v4984 = vadd.f32 %v4282, %v4648
    %v4985 = vadd.f32 %v4283, %v4648
    %v4986 = vadd.f32 %v4284, %v4648
    %v4987 = vadd.f32 %v4285, %v4648
    %v4988 = vadd.f32 %v4286, %v4653
    %v4989 = vadd.f32 %v4287, %v4653
    %v4990 = vadd.f32 %v4288, %v4653
    %v4991 = vadd.f32 %v4289, %v4653
    %v4992 = vadd.f32 %v4290, %v4653
    %v4993 = vadd.f32 %v4291, %v4653
    %v4994 = vadd.f32 %v4292, %v4653
    %v4995 = vadd.f32 %v4293, %v4658
    %v4996 = vadd.f32 %v4294, %v4658
    %v4997 = vadd.f32 %v4295, %v4658
    %v4998 = vadd.f32 %v4296, %v4658
    %v4999 = vadd.f32 %v4297, %v4658
    %v5000 = vadd.f32 %v4298, %v4658
    %v5001 = vadd.f32 %v4299, %v4658
    %v5002 = vadd.f32 %v4300, %v4663
    %v5003 = vadd.f32 %v4301, %v4663
    %v5004 = vadd.f32 %v4302, %v4663
    %v5005 = vadd.f32 %v4303, %v4663
    %v5006 = vadd.f32 %v4304, %v4663
    %v5007 = vadd.f32 %v4305, %v4663
    %v5008 = vadd.f32 %v4306, %v4663
    %v5009 = vadd.f32 %v4307, %v4668
    %v5010 = vadd.f32 %v4308, %v4668
    %v5011 = vadd.f32 %v4309, %v4668
    %v5012 = vadd.f32 %v4310, %v4668
    %v5013 = vadd.f32 %v4311, %v4668
    %v5014 = vadd.f32 %v4312, %v4668
    %v5015 = vadd.f32 %v4313, %v4668
    %v5016 = vadd.f32 %v4314, %v4673
    %v5017 = vadd.f32 %v4315, %v4673
    %v5018 = vadd.f32 %v4316, %v4673
    %v5019 = vadd.f32 %v4317, %v4673
    %v5020 = vadd.f32 %v4318, %v4673
    %v5021 = vadd.f32 %v4319, %v4673
    %v5022 = vadd.f32 %v4320, %v4673
    %v5023 = vadd.f32 %v4321, %v4678
    %v5024 = vadd.f32 %v4322, %v4678
    %v5025 = vadd.f32 %v4323, %v4678
    %v5026 = vadd.f32 %v4324, %v4678
    %v5027 = vadd.f32 %v4325, %v4678
    %v5028 = vadd.f32 %v4326, %v4678
    %v5029 = vadd.f32 %v4327, %v4678
    %v5030 = vadd.f32 %v4328, %v4683
    %v5031 = vadd.f32 %v4329, %v4683
    %v5032 = vadd.f32 %v4330, %v4683
    %v5033 = vadd.f32 %v4331, %v4683
    %v5034 = vadd.f32 %v4332, %v4683
    %v5035 = vadd.f32 %v4333, %v4683
    %v5036 = vadd.f32 %v4334, %v4683
    %v5037 = vadd.f32 %v4335, %v4688
    %v5038 = vadd.f32 %v4336, %v4688
    %v5039 = vadd.f32 %v4337, %v4688
    %v5040 = vadd.f32 %v4338, %v4688
    %v5041 = vadd.f32 %v4339, %v4688
    %v5042 = vadd.f32 %v4340, %v4688
    %v5043 = vadd.f32 %v4341, %v4688
    %v5044 = vadd.f32 %v4342, %v4693
    %v5045 = vadd.f32 %v4343, %v4693
    %v5046 = vadd.f32 %v4344, %v4693
    %v5047 = vadd.f32 %v4345, %v4693
    %v5048 = vadd.f32 %v4346, %v4693
    %v5049 = vadd.f32 %v4347, %v4693
    %v5050 = vadd.f32 %v4348, %v4693
    %v5051 = vadd.f32 %v4349, %v4698
    %v5052 = vadd.f32 %v4350, %v4698
    %v5053 = vadd.f32 %v4351, %v4698
    %v5054 = vadd.f32 %v4352, %v4698
    %v5055 = vadd.f32 %v4353, %v4698
    %v5056 = vadd.f32 %v4354, %v4698
    %v5057 = vadd.f32 %v4355, %v4698
    %v5058 = vadd.f32 %v4356, %v4703
    %v5059 = vadd.f32 %v4357, %v4703
    %v5060 = vadd.f32 %v4358, %v4703
    %v5061 = vadd.f32 %v4359, %v4703
    %v5062 = vadd.f32 %v4360, %v4703
    %v5063 = vadd.f32 %v4361, %v4703
    %v5064 = vadd.f32 %v4362, %v4703
    %v5065 = vadd.f32 %v4363, %v4708
    %v5066 = vadd.f32 %v4364, %v4708
    %v5067 = vadd.f32 %v4365, %v4708
    %v5068 = vadd.f32 %v4366, %v4708
    %v5069 = vadd.f32 %v4367, %v4708
    %v5070 = vadd.f32 %v4368, %v4708
    %v5071 = vadd.f32 %v4369, %v4708
    %v5072 = vadd.f32 %v4370, %v4713
    %v5073 = vadd.f32 %v4371, %v4713
    %v5074 = vadd.f32 %v4372, %v4713
    %v5075 = vadd.f32 %v4373, %v4713
    %v5076 = vadd.f32 %v4374, %v4713
    %v5077 = vadd.f32 %v4375, %v4713
    %v5078 = vadd.f32 %v4376, %v4713
    %v5079 = vadd.f32 %v4377, %v4718
    %v5080 = vadd.f32 %v4378, %v4718
    %v5081 = vadd.f32 %v4379, %v4718
    %v5082 = vadd.f32 %v4380, %v4718
    %v5083 = vadd.f32 %v4381, %v4718
    %v5084 = vadd.f32 %v4382, %v4718
    %v5085 = vadd.f32 %v4383, %v4718
    %v5086 = vadd.f32 %v4384, %v4723
    %v5087 = vadd.f32 %v4385, %v4723
    %v5088 = vadd.f32 %v4386, %v4723
    %v5089 = vadd.f32 %v4387, %v4723
    %v5090 = vadd.f32 %v4388, %v4723
    %v5091 = vadd.f32 %v4389, %v4723
    %v5092 = vadd.f32 %v4390, %v4723
    %v5093 = vadd.f32 %v4391, %v4728
    %v5094 = vadd.f32 %v4392, %v4728
    %v5095 = vadd.f32 %v4393, %v4728
    %v5096 = vadd.f32 %v4394, %v4728
    %v5097 = vadd.f32 %v4395, %v4728
    %v5098 = vadd.f32 %v4396, %v4728
    %v5099 = vadd.f32 %v4397, %v4728
    %v5100 = vadd.f32 %v4398, %v4733
    %v5101 = vadd.f32 %v4399, %v4733
    %v5102 = vadd.f32 %v4400, %v4733
    %v5103 = vadd.f32 %v4401, %v4733
    %v5104 = vadd.f32 %v4402, %v4733
    %v5105 = vadd.f32 %v4403, %v4733
    %v5106 = vadd.f32 %v4404, %v4733
    %v5107 = vadd.f32 %v4405, %v4738
    %v5108 = vadd.f32 %v4406, %v4738
    %v5109 = vadd.f32 %v4407, %v4738
    %v5110 = vadd.f32 %v4408, %v4738
    %v5111 = vadd.f32 %v4409, %v4738
    %v5112 = vadd.f32 %v4410, %v4738
    %v5113 = vadd.f32 %v4411, %v4738
    %v5114 = vadd.f32 %v4412, %v4743
    %v5115 = vadd.f32 %v4413, %v4743
    %v5116 = vadd.f32 %v4414, %v4743
    %v5117 = vadd.f32 %v4415, %v4743
    %v5118 = vadd.f32 %v4416, %v4743
    %v5119 = vadd.f32 %v4417, %v4743
    %v5120 = vadd.f32 %v4418, %v4743
    %v5121 = vadd.f32 %v4419, %v4748
    %v5122 = vadd.f32 %v4420, %v4748
    %v5123 = vadd.f32 %v4421, %v4748
    %v5124 = vadd.f32 %v4422, %v4748
    %v5125 = vadd.f32 %v4423, %v4748
    %v5126 = vadd.f32 %v4424, %v4748
    %v5127 = vadd.f32 %v4425, %v4748
    %5128 = vst [vmem:[#allocation7] sm:$0xff] %v4750
    %5129 = vst [vmem:[#allocation7 + $0x8] sm:$0xff] %v4751
    %5130 = vst [vmem:[#allocation7 + $0x10] sm:$0xff] %v4752
    %5131 = vst [vmem:[#allocation7 + $0x18] sm:$0xff] %v4753
    %5132 = vst [vmem:[#allocation7 + $0x20] sm:$0xff] %v4754
    %5133 = vst [vmem:[#allocation7 + $0x28] sm:$0xff] %v4755
    %5134 = vst.msk [vmem:[#allocation7 + $0x30] sm:$0xff] %vm1730, %v4756
    %5135 = vst [vmem:[#allocation7 + $0x38] sm:$0xff] %v4757
    %5136 = vst [vmem:[#allocation7 + $0x40] sm:$0xff] %v4758
    %5137 = vst [vmem:[#allocation7 + $0x48] sm:$0xff] %v4759
    %5138 = vst [vmem:[#allocation7 + $0x50] sm:$0xff] %v4760
    %5139 = vst [vmem:[#allocation7 + $0x58] sm:$0xff] %v4761
    %5140 = vst [vmem:[#allocation7 + $0x60] sm:$0xff] %v4762
    %5141 = vst.msk [vmem:[#allocation7 + $0x68] sm:$0xff] %vm1730, %v4763
    %5142 = vst [vmem:[#allocation7 + $0x70] sm:$0xff] %v4764
    %5143 = vst [vmem:[#allocation7 + $0x78] sm:$0xff] %v4765
    %5144 = vst [vmem:[#allocation7 + $0x80] sm:$0xff] %v4766
    %5145 = vst [vmem:[#allocation7 + $0x88] sm:$0xff] %v4767
    %5146 = vst [vmem:[#allocation7 + $0x90] sm:$0xff] %v4768
    %5147 = vst [vmem:[#allocation7 + $0x98] sm:$0xff] %v4769
    %5148 = vst.msk [vmem:[#allocation7 + $0xa0] sm:$0xff] %vm1730, %v4770
    %5149 = vst [vmem:[#allocation7 + $0xa8] sm:$0xff] %v4771
    %5150 = vst [vmem:[#allocation7 + $0xb0] sm:$0xff] %v4772
    %5151 = vst [vmem:[#allocation7 + $0xb8] sm:$0xff] %v4773
    %5152 = vst [vmem:[#allocation7 + $0xc0] sm:$0xff] %v4774
    %5153 = vst [vmem:[#allocation7 + $0xc8] sm:$0xff] %v4775
    %5154 = vst [vmem:[#allocation7 + $0xd0] sm:$0xff] %v4776
    %5155 = vst.msk [vmem:[#allocation7 + $0xd8] sm:$0xff] %vm1730, %v4777
    %5156 = vst [vmem:[#allocation7 + $0xe0] sm:$0xff] %v4778
    %5157 = vst [vmem:[#allocation7 + $0xe8] sm:$0xff] %v4779
    %5158 = vst [vmem:[#allocation7 + $0xf0] sm:$0xff] %v4780
    %5159 = vst [vmem:[#allocation7 + $0xf8] sm:$0xff] %v4781
    %5160 = vst [vmem:[#allocation7 + $0x100] sm:$0xff] %v4782
    %5161 = vst [vmem:[#allocation7 + $0x108] sm:$0xff] %v4783
    %5162 = vst.msk [vmem:[#allocation7 + $0x110] sm:$0xff] %vm1730, %v4784
    %5163 = vst [vmem:[#allocation7 + $0x118] sm:$0xff] %v4785
    %5164 = vst [vmem:[#allocation7 + $0x120] sm:$0xff] %v4786
    %5165 = vst [vmem:[#allocation7 + $0x128] sm:$0xff] %v4787
    %5166 = vst [vmem:[#allocation7 + $0x130] sm:$0xff] %v4788
    %5167 = vst [vmem:[#allocation7 + $0x138] sm:$0xff] %v4789
    %5168 = vst [vmem:[#allocation7 + $0x140] sm:$0xff] %v4790
    %5169 = vst.msk [vmem:[#allocation7 + $0x148] sm:$0xff] %vm1730, %v4791
    %5170 = vst [vmem:[#allocation7 + $0x150] sm:$0xff] %v4792
    %5171 = vst [vmem:[#allocation7 + $0x158] sm:$0xff] %v4793
    %5172 = vst [vmem:[#allocation7 + $0x160] sm:$0xff] %v4794
    %5173 = vst [vmem:[#allocation7 + $0x168] sm:$0xff] %v4795
    %5174 = vst [vmem:[#allocation7 + $0x170] sm:$0xff] %v4796
    %5175 = vst [vmem:[#allocation7 + $0x178] sm:$0xff] %v4797
    %5176 = vst.msk [vmem:[#allocation7 + $0x180] sm:$0xff] %vm1730, %v4798
    %5177 = vst [vmem:[#allocation7 + $0x188] sm:$0xff] %v4799
    %5178 = vst [vmem:[#allocation7 + $0x190] sm:$0xff] %v4800
    %5179 = vst [vmem:[#allocation7 + $0x198] sm:$0xff] %v4801
    %5180 = vst [vmem:[#allocation7 + $0x1a0] sm:$0xff] %v4802
    %5181 = vst [vmem:[#allocation7 + $0x1a8] sm:$0xff] %v4803
    %5182 = vst [vmem:[#allocation7 + $0x1b0] sm:$0xff] %v4804
    %5183 = vst.msk [vmem:[#allocation7 + $0x1b8] sm:$0xff] %vm1730, %v4805
    %5184 = vst [vmem:[#allocation7 + $0x1c0] sm:$0xff] %v4806
    %5185 = vst [vmem:[#allocation7 + $0x1c8] sm:$0xff] %v4807
    %5186 = vst [vmem:[#allocation7 + $0x1d0] sm:$0xff] %v4808
    %5187 = vst [vmem:[#allocation7 + $0x1d8] sm:$0xff] %v4809
    %5188 = vst [vmem:[#allocation7 + $0x1e0] sm:$0xff] %v4810
    %5189 = vst [vmem:[#allocation7 + $0x1e8] sm:$0xff] %v4811
    %5190 = vst.msk [vmem:[#allocation7 + $0x1f0] sm:$0xff] %vm1730, %v4812
    %5191 = vst [vmem:[#allocation7 + $0x1f8] sm:$0xff] %v4813
    %5192 = vst [vmem:[#allocation7 + $0x200] sm:$0xff] %v4814
    %5193 = vst [vmem:[#allocation7 + $0x208] sm:$0xff] %v4815
    %5194 = vst [vmem:[#allocation7 + $0x210] sm:$0xff] %v4816
    %5195 = vst [vmem:[#allocation7 + $0x218] sm:$0xff] %v4817
    %5196 = vst [vmem:[#allocation7 + $0x220] sm:$0xff] %v4818
    %5197 = vst.msk [vmem:[#allocation7 + $0x228] sm:$0xff] %vm1730, %v4819
    %5198 = vst [vmem:[#allocation7 + $0x230] sm:$0xff] %v4820
    %5199 = vst [vmem:[#allocation7 + $0x238] sm:$0xff] %v4821
    %5200 = vst [vmem:[#allocation7 + $0x240] sm:$0xff] %v4822
    %5201 = vst [vmem:[#allocation7 + $0x248] sm:$0xff] %v4823
    %5202 = vst [vmem:[#allocation7 + $0x250] sm:$0xff] %v4824
    %5203 = vst [vmem:[#allocation7 + $0x258] sm:$0xff] %v4825
    %5204 = vst.msk [vmem:[#allocation7 + $0x260] sm:$0xff] %vm1730, %v4826
    %5205 = vst [vmem:[#allocation7 + $0x268] sm:$0xff] %v4827
    %5206 = vst [vmem:[#allocation7 + $0x270] sm:$0xff] %v4828
    %5207 = vst [vmem:[#allocation7 + $0x278] sm:$0xff] %v4829
    %5208 = vst [vmem:[#allocation7 + $0x280] sm:$0xff] %v4830
    %5209 = vst [vmem:[#allocation7 + $0x288] sm:$0xff] %v4831
    %5210 = vst [vmem:[#allocation7 + $0x290] sm:$0xff] %v4832
    %5211 = vst.msk [vmem:[#allocation7 + $0x298] sm:$0xff] %vm1730, %v4833
    %5212 = vst [vmem:[#allocation7 + $0x2a0] sm:$0xff] %v4834
    %5213 = vst [vmem:[#allocation7 + $0x2a8] sm:$0xff] %v4835
    %5214 = vst [vmem:[#allocation7 + $0x2b0] sm:$0xff] %v4836
    %5215 = vst [vmem:[#allocation7 + $0x2b8] sm:$0xff] %v4837
    %5216 = vst [vmem:[#allocation7 + $0x2c0] sm:$0xff] %v4838
    %5217 = vst [vmem:[#allocation7 + $0x2c8] sm:$0xff] %v4839
    %5218 = vst.msk [vmem:[#allocation7 + $0x2d0] sm:$0xff] %vm1730, %v4840
    %5219 = vst [vmem:[#allocation7 + $0x2d8] sm:$0xff] %v4841
    %5220 = vst [vmem:[#allocation7 + $0x2e0] sm:$0xff] %v4842
    %5221 = vst [vmem:[#allocation7 + $0x2e8] sm:$0xff] %v4843
    %5222 = vst [vmem:[#allocation7 + $0x2f0] sm:$0xff] %v4844
    %5223 = vst [vmem:[#allocation7 + $0x2f8] sm:$0xff] %v4845
    %5224 = vst [vmem:[#allocation7 + $0x300] sm:$0xff] %v4846
    %5225 = vst.msk [vmem:[#allocation7 + $0x308] sm:$0xff] %vm1730, %v4847
    %5226 = vst [vmem:[#allocation7 + $0x310] sm:$0xff] %v4848
    %5227 = vst [vmem:[#allocation7 + $0x318] sm:$0xff] %v4849
    %5228 = vst [vmem:[#allocation7 + $0x320] sm:$0xff] %v4850
    %5229 = vst [vmem:[#allocation7 + $0x328] sm:$0xff] %v4851
    %5230 = vst [vmem:[#allocation7 + $0x330] sm:$0xff] %v4852
    %5231 = vst [vmem:[#allocation7 + $0x338] sm:$0xff] %v4853
    %5232 = vst.msk [vmem:[#allocation7 + $0x340] sm:$0xff] %vm1730, %v4854
    %5233 = vst [vmem:[#allocation7 + $0x348] sm:$0xff] %v4855
    %5234 = vst [vmem:[#allocation7 + $0x350] sm:$0xff] %v4856
    %5235 = vst [vmem:[#allocation7 + $0x358] sm:$0xff] %v4857
    %5236 = vst [vmem:[#allocation7 + $0x360] sm:$0xff] %v4858
    %5237 = vst [vmem:[#allocation7 + $0x368] sm:$0xff] %v4859
    %5238 = vst [vmem:[#allocation7 + $0x370] sm:$0xff] %v4860
    %5239 = vst.msk [vmem:[#allocation7 + $0x378] sm:$0xff] %vm1730, %v4861
    %5240 = vst [vmem:[#allocation7 + $0x380] sm:$0xff] %v4862
    %5241 = vst [vmem:[#allocation7 + $0x388] sm:$0xff] %v4863
    %5242 = vst [vmem:[#allocation7 + $0x390] sm:$0xff] %v4864
    %5243 = vst [vmem:[#allocation7 + $0x398] sm:$0xff] %v4865
    %5244 = vst [vmem:[#allocation7 + $0x3a0] sm:$0xff] %v4866
    %5245 = vst [vmem:[#allocation7 + $0x3a8] sm:$0xff] %v4867
    %5246 = vst.msk [vmem:[#allocation7 + $0x3b0] sm:$0xff] %vm1730, %v4868
    %5247 = vst [vmem:[#allocation7 + $0x3b8] sm:$0xff] %v4869
    %5248 = vst [vmem:[#allocation7 + $0x3c0] sm:$0xff] %v4870
    %5249 = vst [vmem:[#allocation7 + $0x3c8] sm:$0xff] %v4871
    %5250 = vst [vmem:[#allocation7 + $0x3d0] sm:$0xff] %v4872
    %5251 = vst [vmem:[#allocation7 + $0x3d8] sm:$0xff] %v4873
    %5252 = vst [vmem:[#allocation7 + $0x3e0] sm:$0xff] %v4874
    %5253 = vst.msk [vmem:[#allocation7 + $0x3e8] sm:$0xff] %vm1730, %v4875
    %5254 = vst [vmem:[#allocation7 + $0x3f0] sm:$0xff] %v4876
    %5255 = vst [vmem:[#allocation7 + $0x3f8] sm:$0xff] %v4877
    %5256 = vst [vmem:[#allocation7 + $0x400] sm:$0xff] %v4878
    %5257 = vst [vmem:[#allocation7 + $0x408] sm:$0xff] %v4879
    %5258 = vst [vmem:[#allocation7 + $0x410] sm:$0xff] %v4880
    %5259 = vst [vmem:[#allocation7 + $0x418] sm:$0xff] %v4881
    %5260 = vst.msk [vmem:[#allocation7 + $0x420] sm:$0xff] %vm1730, %v4882
    %5261 = vst [vmem:[#allocation7 + $0x428] sm:$0xff] %v4883
    %5262 = vst [vmem:[#allocation7 + $0x430] sm:$0xff] %v4884
    %5263 = vst [vmem:[#allocation7 + $0x438] sm:$0xff] %v4885
    %5264 = vst [vmem:[#allocation7 + $0x440] sm:$0xff] %v4886
    %5265 = vst [vmem:[#allocation7 + $0x448] sm:$0xff] %v4887
    %5266 = vst [vmem:[#allocation7 + $0x450] sm:$0xff] %v4888
    %5267 = vst.msk [vmem:[#allocation7 + $0x458] sm:$0xff] %vm1730, %v4889
    %5268 = vst [vmem:[#allocation7 + $0x460] sm:$0xff] %v4890
    %5269 = vst [vmem:[#allocation7 + $0x468] sm:$0xff] %v4891
    %5270 = vst [vmem:[#allocation7 + $0x470] sm:$0xff] %v4892
    %5271 = vst [vmem:[#allocation7 + $0x478] sm:$0xff] %v4893
    %5272 = vst [vmem:[#allocation7 + $0x480] sm:$0xff] %v4894
    %5273 = vst [vmem:[#allocation7 + $0x488] sm:$0xff] %v4895
    %5274 = vst.msk [vmem:[#allocation7 + $0x490] sm:$0xff] %vm1730, %v4896
    %5275 = vst [vmem:[#allocation7 + $0x498] sm:$0xff] %v4897
    %5276 = vst [vmem:[#allocation7 + $0x4a0] sm:$0xff] %v4898
    %5277 = vst [vmem:[#allocation7 + $0x4a8] sm:$0xff] %v4899
    %5278 = vst [vmem:[#allocation7 + $0x4b0] sm:$0xff] %v4900
    %5279 = vst [vmem:[#allocation7 + $0x4b8] sm:$0xff] %v4901
    %5280 = vst [vmem:[#allocation7 + $0x4c0] sm:$0xff] %v4902
    %5281 = vst.msk [vmem:[#allocation7 + $0x4c8] sm:$0xff] %vm1730, %v4903
    %5282 = vst [vmem:[#allocation7 + $0x4d0] sm:$0xff] %v4904
    %5283 = vst [vmem:[#allocation7 + $0x4d8] sm:$0xff] %v4905
    %5284 = vst [vmem:[#allocation7 + $0x4e0] sm:$0xff] %v4906
    %5285 = vst [vmem:[#allocation7 + $0x4e8] sm:$0xff] %v4907
    %5286 = vst [vmem:[#allocation7 + $0x4f0] sm:$0xff] %v4908
    %5287 = vst [vmem:[#allocation7 + $0x4f8] sm:$0xff] %v4909
    %5288 = vst.msk [vmem:[#allocation7 + $0x500] sm:$0xff] %vm1730, %v4910
    %5289 = vst [vmem:[#allocation7 + $0x508] sm:$0xff] %v4911
    %5290 = vst [vmem:[#allocation7 + $0x510] sm:$0xff] %v4912
    %5291 = vst [vmem:[#allocation7 + $0x518] sm:$0xff] %v4913
    %5292 = vst [vmem:[#allocation7 + $0x520] sm:$0xff] %v4914
    %5293 = vst [vmem:[#allocation7 + $0x528] sm:$0xff] %v4915
    %5294 = vst [vmem:[#allocation7 + $0x530] sm:$0xff] %v4916
    %5295 = vst.msk [vmem:[#allocation7 + $0x538] sm:$0xff] %vm1730, %v4917
    %5296 = vst [vmem:[#allocation7 + $0x540] sm:$0xff] %v4918
    %5297 = vst [vmem:[#allocation7 + $0x548] sm:$0xff] %v4919
    %5298 = vst [vmem:[#allocation7 + $0x550] sm:$0xff] %v4920
    %5299 = vst [vmem:[#allocation7 + $0x558] sm:$0xff] %v4921
    %5300 = vst [vmem:[#allocation7 + $0x560] sm:$0xff] %v4922
    %5301 = vst [vmem:[#allocation7 + $0x568] sm:$0xff] %v4923
    %5302 = vst.msk [vmem:[#allocation7 + $0x570] sm:$0xff] %vm1730, %v4924
    %5303 = vst [vmem:[#allocation7 + $0x578] sm:$0xff] %v4925
    %5304 = vst [vmem:[#allocation7 + $0x580] sm:$0xff] %v4926
    %5305 = vst [vmem:[#allocation7 + $0x588] sm:$0xff] %v4927
    %5306 = vst [vmem:[#allocation7 + $0x590] sm:$0xff] %v4928
    %5307 = vst [vmem:[#allocation7 + $0x598] sm:$0xff] %v4929
    %5308 = vst [vmem:[#allocation7 + $0x5a0] sm:$0xff] %v4930
    %5309 = vst.msk [vmem:[#allocation7 + $0x5a8] sm:$0xff] %vm1730, %v4931
    %5310 = vst [vmem:[#allocation7 + $0x5b0] sm:$0xff] %v4932
    %5311 = vst [vmem:[#allocation7 + $0x5b8] sm:$0xff] %v4933
    %5312 = vst [vmem:[#allocation7 + $0x5c0] sm:$0xff] %v4934
    %5313 = vst [vmem:[#allocation7 + $0x5c8] sm:$0xff] %v4935
    %5314 = vst [vmem:[#allocation7 + $0x5d0] sm:$0xff] %v4936
    %5315 = vst [vmem:[#allocation7 + $0x5d8] sm:$0xff] %v4937
    %5316 = vst.msk [vmem:[#allocation7 + $0x5e0] sm:$0xff] %vm1730, %v4938
    %5317 = vst [vmem:[#allocation7 + $0x5e8] sm:$0xff] %v4939
    %5318 = vst [vmem:[#allocation7 + $0x5f0] sm:$0xff] %v4940
    %5319 = vst [vmem:[#allocation7 + $0x5f8] sm:$0xff] %v4941
    %5320 = vst [vmem:[#allocation7 + $0x600] sm:$0xff] %v4942
    %5321 = vst [vmem:[#allocation7 + $0x608] sm:$0xff] %v4943
    %5322 = vst [vmem:[#allocation7 + $0x610] sm:$0xff] %v4944
    %5323 = vst.msk [vmem:[#allocation7 + $0x618] sm:$0xff] %vm1730, %v4945
    %5324 = vst [vmem:[#allocation7 + $0x620] sm:$0xff] %v4946
    %5325 = vst [vmem:[#allocation7 + $0x628] sm:$0xff] %v4947
    %5326 = vst [vmem:[#allocation7 + $0x630] sm:$0xff] %v4948
    %5327 = vst [vmem:[#allocation7 + $0x638] sm:$0xff] %v4949
    %5328 = vst [vmem:[#allocation7 + $0x640] sm:$0xff] %v4950
    %5329 = vst [vmem:[#allocation7 + $0x648] sm:$0xff] %v4951
    %5330 = vst.msk [vmem:[#allocation7 + $0x650] sm:$0xff] %vm1730, %v4952
    %5331 = vst [vmem:[#allocation7 + $0x658] sm:$0xff] %v4953
    %5332 = vst [vmem:[#allocation7 + $0x660] sm:$0xff] %v4954
    %5333 = vst [vmem:[#allocation7 + $0x668] sm:$0xff] %v4955
    %5334 = vst [vmem:[#allocation7 + $0x670] sm:$0xff] %v4956
    %5335 = vst [vmem:[#allocation7 + $0x678] sm:$0xff] %v4957
    %5336 = vst [vmem:[#allocation7 + $0x680] sm:$0xff] %v4958
    %5337 = vst.msk [vmem:[#allocation7 + $0x688] sm:$0xff] %vm1730, %v4959
    %5338 = vst [vmem:[#allocation7 + $0x690] sm:$0xff] %v4960
    %5339 = vst [vmem:[#allocation7 + $0x698] sm:$0xff] %v4961
    %5340 = vst [vmem:[#allocation7 + $0x6a0] sm:$0xff] %v4962
    %5341 = vst [vmem:[#allocation7 + $0x6a8] sm:$0xff] %v4963
    %5342 = vst [vmem:[#allocation7 + $0x6b0] sm:$0xff] %v4964
    %5343 = vst [vmem:[#allocation7 + $0x6b8] sm:$0xff] %v4965
    %5344 = vst.msk [vmem:[#allocation7 + $0x6c0] sm:$0xff] %vm1730, %v4966
    %5345 = vst [vmem:[#allocation7 + $0x6c8] sm:$0xff] %v4967
    %5346 = vst [vmem:[#allocation7 + $0x6d0] sm:$0xff] %v4968
    %5347 = vst [vmem:[#allocation7 + $0x6d8] sm:$0xff] %v4969
    %5348 = vst [vmem:[#allocation7 + $0x6e0] sm:$0xff] %v4970
    %5349 = vst [vmem:[#allocation7 + $0x6e8] sm:$0xff] %v4971
    %5350 = vst [vmem:[#allocation7 + $0x6f0] sm:$0xff] %v4972
    %5351 = vst.msk [vmem:[#allocation7 + $0x6f8] sm:$0xff] %vm1730, %v4973
    %5352 = vst [vmem:[#allocation7 + $0x700] sm:$0xff] %v4974
    %5353 = vst [vmem:[#allocation7 + $0x708] sm:$0xff] %v4975
    %5354 = vst [vmem:[#allocation7 + $0x710] sm:$0xff] %v4976
    %5355 = vst [vmem:[#allocation7 + $0x718] sm:$0xff] %v4977
    %5356 = vst [vmem:[#allocation7 + $0x720] sm:$0xff] %v4978
    %5357 = vst [vmem:[#allocation7 + $0x728] sm:$0xff] %v4979
    %5358 = vst.msk [vmem:[#allocation7 + $0x730] sm:$0xff] %vm1730, %v4980
    %5359 = vst [vmem:[#allocation7 + $0x738] sm:$0xff] %v4981
    %5360 = vst [vmem:[#allocation7 + $0x740] sm:$0xff] %v4982
    %5361 = vst [vmem:[#allocation7 + $0x748] sm:$0xff] %v4983
    %5362 = vst [vmem:[#allocation7 + $0x750] sm:$0xff] %v4984
    %5363 = vst [vmem:[#allocation7 + $0x758] sm:$0xff] %v4985
    %5364 = vst [vmem:[#allocation7 + $0x760] sm:$0xff] %v4986
    %5365 = vst.msk [vmem:[#allocation7 + $0x768] sm:$0xff] %vm1730, %v4987
    %5366 = vst [vmem:[#allocation7 + $0x770] sm:$0xff] %v4988
    %5367 = vst [vmem:[#allocation7 + $0x778] sm:$0xff] %v4989
    %5368 = vst [vmem:[#allocation7 + $0x780] sm:$0xff] %v4990
    %5369 = vst [vmem:[#allocation7 + $0x788] sm:$0xff] %v4991
    %5370 = vst [vmem:[#allocation7 + $0x790] sm:$0xff] %v4992
    %5371 = vst [vmem:[#allocation7 + $0x798] sm:$0xff] %v4993
    %5372 = vst.msk [vmem:[#allocation7 + $0x7a0] sm:$0xff] %vm1730, %v4994
    %5373 = vst [vmem:[#allocation7 + $0x7a8] sm:$0xff] %v4995
    %5374 = vst [vmem:[#allocation7 + $0x7b0] sm:$0xff] %v4996
    %5375 = vst [vmem:[#allocation7 + $0x7b8] sm:$0xff] %v4997
    %5376 = vst [vmem:[#allocation7 + $0x7c0] sm:$0xff] %v4998
    %5377 = vst [vmem:[#allocation7 + $0x7c8] sm:$0xff] %v4999
    %5378 = vst [vmem:[#allocation7 + $0x7d0] sm:$0xff] %v5000
    %5379 = vst.msk [vmem:[#allocation7 + $0x7d8] sm:$0xff] %vm1730, %v5001
    %5380 = vst [vmem:[#allocation7 + $0x7e0] sm:$0xff] %v5002
    %5381 = vst [vmem:[#allocation7 + $0x7e8] sm:$0xff] %v5003
    %5382 = vst [vmem:[#allocation7 + $0x7f0] sm:$0xff] %v5004
    %5383 = vst [vmem:[#allocation7 + $0x7f8] sm:$0xff] %v5005
    %5384 = vst [vmem:[#allocation7 + $0x800] sm:$0xff] %v5006
    %5385 = vst [vmem:[#allocation7 + $0x808] sm:$0xff] %v5007
    %5386 = vst.msk [vmem:[#allocation7 + $0x810] sm:$0xff] %vm1730, %v5008
    %5387 = vst [vmem:[#allocation7 + $0x818] sm:$0xff] %v5009
    %5388 = vst [vmem:[#allocation7 + $0x820] sm:$0xff] %v5010
    %5389 = vst [vmem:[#allocation7 + $0x828] sm:$0xff] %v5011
    %5390 = vst [vmem:[#allocation7 + $0x830] sm:$0xff] %v5012
    %5391 = vst [vmem:[#allocation7 + $0x838] sm:$0xff] %v5013
    %5392 = vst [vmem:[#allocation7 + $0x840] sm:$0xff] %v5014
    %5393 = vst.msk [vmem:[#allocation7 + $0x848] sm:$0xff] %vm1730, %v5015
    %5394 = vst [vmem:[#allocation7 + $0x850] sm:$0xff] %v5016
    %5395 = vst [vmem:[#allocation7 + $0x858] sm:$0xff] %v5017
    %5396 = vst [vmem:[#allocation7 + $0x860] sm:$0xff] %v5018
    %5397 = vst [vmem:[#allocation7 + $0x868] sm:$0xff] %v5019
    %5398 = vst [vmem:[#allocation7 + $0x870] sm:$0xff] %v5020
    %5399 = vst [vmem:[#allocation7 + $0x878] sm:$0xff] %v5021
    %5400 = vst.msk [vmem:[#allocation7 + $0x880] sm:$0xff] %vm1730, %v5022
    %5401 = vst [vmem:[#allocation7 + $0x888] sm:$0xff] %v5023
    %5402 = vst [vmem:[#allocation7 + $0x890] sm:$0xff] %v5024
    %5403 = vst [vmem:[#allocation7 + $0x898] sm:$0xff] %v5025
    %5404 = vst [vmem:[#allocation7 + $0x8a0] sm:$0xff] %v5026
    %5405 = vst [vmem:[#allocation7 + $0x8a8] sm:$0xff] %v5027
    %5406 = vst [vmem:[#allocation7 + $0x8b0] sm:$0xff] %v5028
    %5407 = vst.msk [vmem:[#allocation7 + $0x8b8] sm:$0xff] %vm1730, %v5029
    %5408 = vst [vmem:[#allocation7 + $0x8c0] sm:$0xff] %v5030
    %5409 = vst [vmem:[#allocation7 + $0x8c8] sm:$0xff] %v5031
    %5410 = vst [vmem:[#allocation7 + $0x8d0] sm:$0xff] %v5032
    %5411 = vst [vmem:[#allocation7 + $0x8d8] sm:$0xff] %v5033
    %5412 = vst [vmem:[#allocation7 + $0x8e0] sm:$0xff] %v5034
    %5413 = vst [vmem:[#allocation7 + $0x8e8] sm:$0xff] %v5035
    %5414 = vst.msk [vmem:[#allocation7 + $0x8f0] sm:$0xff] %vm1730, %v5036
    %5415 = vst [vmem:[#allocation7 + $0x8f8] sm:$0xff] %v5037
    %5416 = vst [vmem:[#allocation7 + $0x900] sm:$0xff] %v5038
    %5417 = vst [vmem:[#allocation7 + $0x908] sm:$0xff] %v5039
    %5418 = vst [vmem:[#allocation7 + $0x910] sm:$0xff] %v5040
    %5419 = vst [vmem:[#allocation7 + $0x918] sm:$0xff] %v5041
    %5420 = vst [vmem:[#allocation7 + $0x920] sm:$0xff] %v5042
    %5421 = vst.msk [vmem:[#allocation7 + $0x928] sm:$0xff] %vm1730, %v5043
    %5422 = vst [vmem:[#allocation7 + $0x930] sm:$0xff] %v5044
    %5423 = vst [vmem:[#allocation7 + $0x938] sm:$0xff] %v5045
    %5424 = vst [vmem:[#allocation7 + $0x940] sm:$0xff] %v5046
    %5425 = vst [vmem:[#allocation7 + $0x948] sm:$0xff] %v5047
    %5426 = vst [vmem:[#allocation7 + $0x950] sm:$0xff] %v5048
    %5427 = vst [vmem:[#allocation7 + $0x958] sm:$0xff] %v5049
    %5428 = vst.msk [vmem:[#allocation7 + $0x960] sm:$0xff] %vm1730, %v5050
    %5429 = vst [vmem:[#allocation7 + $0x968] sm:$0xff] %v5051
    %5430 = vst [vmem:[#allocation7 + $0x970] sm:$0xff] %v5052
    %5431 = vst [vmem:[#allocation7 + $0x978] sm:$0xff] %v5053
    %5432 = vst [vmem:[#allocation7 + $0x980] sm:$0xff] %v5054
    %5433 = vst [vmem:[#allocation7 + $0x988] sm:$0xff] %v5055
    %5434 = vst [vmem:[#allocation7 + $0x990] sm:$0xff] %v5056
    %5435 = vst.msk [vmem:[#allocation7 + $0x998] sm:$0xff] %vm1730, %v5057
    %5436 = vst [vmem:[#allocation7 + $0x9a0] sm:$0xff] %v5058
    %5437 = vst [vmem:[#allocation7 + $0x9a8] sm:$0xff] %v5059
    %5438 = vst [vmem:[#allocation7 + $0x9b0] sm:$0xff] %v5060
    %5439 = vst [vmem:[#allocation7 + $0x9b8] sm:$0xff] %v5061
    %5440 = vst [vmem:[#allocation7 + $0x9c0] sm:$0xff] %v5062
    %5441 = vst [vmem:[#allocation7 + $0x9c8] sm:$0xff] %v5063
    %5442 = vst.msk [vmem:[#allocation7 + $0x9d0] sm:$0xff] %vm1730, %v5064
    %5443 = vst [vmem:[#allocation7 + $0x9d8] sm:$0xff] %v5065
    %5444 = vst [vmem:[#allocation7 + $0x9e0] sm:$0xff] %v5066
    %5445 = vst [vmem:[#allocation7 + $0x9e8] sm:$0xff] %v5067
    %5446 = vst [vmem:[#allocation7 + $0x9f0] sm:$0xff] %v5068
    %5447 = vst [vmem:[#allocation7 + $0x9f8] sm:$0xff] %v5069
    %5448 = vst [vmem:[#allocation7 + $0xa00] sm:$0xff] %v5070
    %5449 = vst.msk [vmem:[#allocation7 + $0xa08] sm:$0xff] %vm1730, %v5071
    %5450 = vst [vmem:[#allocation7 + $0xa10] sm:$0xff] %v5072
    %5451 = vst [vmem:[#allocation7 + $0xa18] sm:$0xff] %v5073
    %5452 = vst [vmem:[#allocation7 + $0xa20] sm:$0xff] %v5074
    %5453 = vst [vmem:[#allocation7 + $0xa28] sm:$0xff] %v5075
    %5454 = vst [vmem:[#allocation7 + $0xa30] sm:$0xff] %v5076
    %5455 = vst [vmem:[#allocation7 + $0xa38] sm:$0xff] %v5077
    %5456 = vst.msk [vmem:[#allocation7 + $0xa40] sm:$0xff] %vm1730, %v5078
    %5457 = vst [vmem:[#allocation7 + $0xa48] sm:$0xff] %v5079
    %5458 = vst [vmem:[#allocation7 + $0xa50] sm:$0xff] %v5080
    %5459 = vst [vmem:[#allocation7 + $0xa58] sm:$0xff] %v5081
    %5460 = vst [vmem:[#allocation7 + $0xa60] sm:$0xff] %v5082
    %5461 = vst [vmem:[#allocation7 + $0xa68] sm:$0xff] %v5083
    %5462 = vst [vmem:[#allocation7 + $0xa70] sm:$0xff] %v5084
    %5463 = vst.msk [vmem:[#allocation7 + $0xa78] sm:$0xff] %vm1730, %v5085
    %5464 = vst [vmem:[#allocation7 + $0xa80] sm:$0xff] %v5086
    %5465 = vst [vmem:[#allocation7 + $0xa88] sm:$0xff] %v5087
    %5466 = vst [vmem:[#allocation7 + $0xa90] sm:$0xff] %v5088
    %5467 = vst [vmem:[#allocation7 + $0xa98] sm:$0xff] %v5089
    %5468 = vst [vmem:[#allocation7 + $0xaa0] sm:$0xff] %v5090
    %5469 = vst [vmem:[#allocation7 + $0xaa8] sm:$0xff] %v5091
    %5470 = vst.msk [vmem:[#allocation7 + $0xab0] sm:$0xff] %vm1730, %v5092
    %5471 = vst [vmem:[#allocation7 + $0xab8] sm:$0xff] %v5093
    %5472 = vst [vmem:[#allocation7 + $0xac0] sm:$0xff] %v5094
    %5473 = vst [vmem:[#allocation7 + $0xac8] sm:$0xff] %v5095
    %5474 = vst [vmem:[#allocation7 + $0xad0] sm:$0xff] %v5096
    %5475 = vst [vmem:[#allocation7 + $0xad8] sm:$0xff] %v5097
    %5476 = vst [vmem:[#allocation7 + $0xae0] sm:$0xff] %v5098
    %5477 = vst.msk [vmem:[#allocation7 + $0xae8] sm:$0xff] %vm1730, %v5099
    %5478 = vst [vmem:[#allocation7 + $0xaf0] sm:$0xff] %v5100
    %5479 = vst [vmem:[#allocation7 + $0xaf8] sm:$0xff] %v5101
    %5480 = vst [vmem:[#allocation7 + $0xb00] sm:$0xff] %v5102
    %5481 = vst [vmem:[#allocation7 + $0xb08] sm:$0xff] %v5103
    %5482 = vst [vmem:[#allocation7 + $0xb10] sm:$0xff] %v5104
    %5483 = vst [vmem:[#allocation7 + $0xb18] sm:$0xff] %v5105
    %5484 = vst.msk [vmem:[#allocation7 + $0xb20] sm:$0xff] %vm1730, %v5106
    %5485 = vst [vmem:[#allocation7 + $0xb28] sm:$0xff] %v5107
    %5486 = vst [vmem:[#allocation7 + $0xb30] sm:$0xff] %v5108
    %5487 = vst [vmem:[#allocation7 + $0xb38] sm:$0xff] %v5109
    %5488 = vst [vmem:[#allocation7 + $0xb40] sm:$0xff] %v5110
    %5489 = vst [vmem:[#allocation7 + $0xb48] sm:$0xff] %v5111
    %5490 = vst [vmem:[#allocation7 + $0xb50] sm:$0xff] %v5112
    %5491 = vst.msk [vmem:[#allocation7 + $0xb58] sm:$0xff] %vm1730, %v5113
    %5492 = vst [vmem:[#allocation7 + $0xb60] sm:$0xff] %v5114
    %5493 = vst [vmem:[#allocation7 + $0xb68] sm:$0xff] %v5115
    %5494 = vst [vmem:[#allocation7 + $0xb70] sm:$0xff] %v5116
    %5495 = vst [vmem:[#allocation7 + $0xb78] sm:$0xff] %v5117
    %5496 = vst [vmem:[#allocation7 + $0xb80] sm:$0xff] %v5118
    %5497 = vst [vmem:[#allocation7 + $0xb88] sm:$0xff] %v5119
    %5498 = vst.msk [vmem:[#allocation7 + $0xb90] sm:$0xff] %vm1730, %v5120
    %5499 = vst [vmem:[#allocation7 + $0xb98] sm:$0xff] %v5121
    %5500 = vst [vmem:[#allocation7 + $0xba0] sm:$0xff] %v5122
    %5501 = vst [vmem:[#allocation7 + $0xba8] sm:$0xff] %v5123
    %5502 = vst [vmem:[#allocation7 + $0xbb0] sm:$0xff] %v5124
    %5503 = vst [vmem:[#allocation7 + $0xbb8] sm:$0xff] %v5125
    %5504 = vst [vmem:[#allocation7 + $0xbc0] sm:$0xff] %v5126
    %5505 = vst.msk [vmem:[#allocation7 + $0xbc8] sm:$0xff] %vm1730, %v5127
    // Predicated region
    $region30: #{tpu_custom_call.1} parent=1 // pred_check
      _
    $region31: #{tpu_custom_call.1} parent=1 // pred_check_branch
      %5507 = sbr.rel (0) target = $region33
    $region32: #{tpu_custom_call.1} parent=1 // pred_region
      %s5509 = ssub.s32 48384, 48384
      %5510 = vsyncadd [#allocation4], %s5509
      %s5511 = sshll.u32 [#allocation7], 4
      %s5512 = int_to_ptr.vmem [resolvable:$true] %s5511
      %5517 = dma.vmem_to_hbm [thread:$0]  %s5512, 48384, %s5, [#allocation4], 896, 896, 56
    $region33: #{tpu_custom_call.1} parent=1 // pred_fallthru
      _
    // Predicated region
    $region34: #{tpu_custom_call.1} parent=1 // pred_check
      _
    $region35: #{tpu_custom_call.1} parent=1 // pred_check_branch
      %5519 = sbr.rel (0) target = $region37
    $region36: #{tpu_custom_call.1} parent=1 // pred_region
      %5520 = dma.done [#allocation4], 48384
    $region37: #{tpu_custom_call.1} parent=1 // pred_fallthru
      _
    %5521 = vsyncpa [#allocation3], 1
    %5522 = vsyncpa [#allocation6], 1
    %5523 = vsyncpa [#allocation4], 1

</llo_original>
